<compile_context>
chip_gen: v7x
topology: tpu7x:2x2x1
jax: 0.10.0
libtpu: 0.0.40
codegen_flags: <defaults>
</compile_context>

<pallas_src>
import functools

import jax
import jax.numpy as jnp
from jax.experimental import pallas as pl
from jax.experimental.pallas import tpu as pltpu

TAG_PAD = 128      # tag ('prev') dimension padded to a full 128-lane vreg
NEG = -1e9         # score for padded / impossible tags inside the CRF


def _full_spec(shape):
    nd = len(shape)
    return pl.BlockSpec(shape, lambda i, _nd=nd: (0,) * _nd)


# ---------------------------------------------------------------------------
# Fused Pallas kernel: BiLSTM recurrence + tag projection + CRF log-partition
# ---------------------------------------------------------------------------
def _bilstm_crf_kernel(x_ref, wx_ref, bg_ref, whh_ref, wl_ref, bl_ref,
                       at_ref, astart_ref, aend_ref, mask_ref,
                       p_ref, logz_ref, hbuf, *, T, Bp, H):
    # x_ref:    (T*Bp, E)   bf16, time-major flattened (row = t*Bp + b)
    # wx_ref:   (E, 8H)     bf16, dense x-side weights (fwd/bwd disjoint cols)
    # bg_ref:   (1, 8H)     f32,  combined gate bias (interleaved layout)
    # whh_ref:  (2H, 8H)    bf16, block-diagonal recurrent weight
    # wl_ref:   (2H, 128)   bf16, merged tag projection (padded lane-dense)
    # bl_ref:   (1, 128)    f32
    # at_ref:   (8, 128)    f32,  A^T: [cur(sublanes), prev(lanes)], NEG-padded
    # astart:   (1, 128)    f32,  A[START, :] NEG-padded
    # aend:     (1, 128)    f32,  A[:, END]   NEG-padded
    # mask_ref: (T*Bp, 128) f32,  lane-dense non-pad mask
    # p_ref:    (T*Bp, 128) f32 output (tag scores, lane-dense)
    # logz_ref: (Bp, 128)   f32 output (logZ broadcast across lanes)
    # hbuf:     (T*Bp, 2H)  f32 scratch (fwd cols 0:H at row t, bwd H:2H at r)
    f32 = jnp.float32
    bf16 = jnp.bfloat16
    H2 = 2 * H

    # ---- Stage 1: one dense input-side gate matmul for ALL timesteps -------
    gx = jnp.dot(x_ref[...], wx_ref[...], preferred_element_type=f32) + bg_ref[...]
    whh = whh_ref[...]                                           # (2H, 8H)
    # Hoisted lane mask: gate layout [i|f|o|g], each block = [fwd H | bwd H].
    col = jax.lax.broadcasted_iota(jnp.int32, (1, 8 * H), 1)
    fwd_cols = (col % H2) < H                                    # (1, 8H) bool

    # ---- Stage 2: fused fwd+bwd recurrence, one matmul per unrolled step ---
    h = jnp.zeros((Bp, H2), f32)          # [h_fwd | h_bwd]
    c = jnp.zeros((Bp, H2), f32)          # [c_fwd | c_bwd]
    for t in range(T):
        r = T - 1 - t                     # backward-direction time index
        g = (jnp.where(fwd_cols, gx[t * Bp:(t + 1) * Bp, :],
                       gx[r * Bp:(r + 1) * Bp, :])
             + jnp.dot(h.astype(bf16), whh, preferred_element_type=f32))
        s = jax.nn.sigmoid(g[:, 0:3 * H2])            # i, f, o in one shot
        i_g = s[:, 0:H2]
        f_g = s[:, H2:2 * H2]
        o_g = s[:, 2 * H2:3 * H2]
        c_g = jnp.tanh(g[:, 3 * H2:4 * H2])
        c = f_g * c + i_g * c_g
        h = o_g * jnp.tanh(c)
        hbuf[t * Bp:(t + 1) * Bp, 0:H] = h[:, 0:H]    # fwd hidden at time t
        hbuf[r * Bp:(r + 1) * Bp, H:H2] = h[:, H:H2]  # bwd hidden at time r

    # ---- Stage 3: tag projection, one lane-dense matmul ---------------------
    p = (jnp.dot(hbuf[...].astype(bf16), wl_ref[...], preferred_element_type=f32)
         + bl_ref[...])                                           # (T*Bp, 128)
    p_ref[...] = p

    # ---- Stage 4: CRF log-partition (cur on 8 sublanes, prev on 128 lanes) --
    TP = p_ref.shape[1]
    CUR = at_ref.shape[0]
    at_b = at_ref[...][None, :, :]                    # hoisted (1, CUR, 128)
    neg_tail = jnp.full((Bp, TP - CUR), NEG, f32)     # hoisted constant
    alpha = astart_ref[...] + p_ref[0:Bp, :]          # (Bp, 128)
    for t in range(1, T):
        scores = alpha[:, None, :] + at_b             # (Bp, CUR, 128)
        m = jnp.max(scores, axis=-1)                  # (Bp, CUR)
        lse = m + jnp.log(jnp.sum(jnp.exp(scores - m[:, :, None]), axis=-1))
        new = (jnp.concatenate([lse, neg_tail], axis=-1)
               + p_ref[t * Bp:(t + 1) * Bp, :])       # (Bp, 128)
        nm = mask_ref[t * Bp:(t + 1) * Bp, :]         # (Bp, 128) lane-dense
        alpha = jnp.where(nm > 0.0, new, alpha)
    final = alpha + aend_ref[...]                     # (Bp, 128)
    mx = jnp.max(final, axis=-1, keepdims=True)
    logz = mx + jnp.log(jnp.sum(jnp.exp(final - mx), axis=-1, keepdims=True))
    logz_ref[...] = jnp.broadcast_to(logz, logz_ref.shape)


def bilstm_crf_pallas(x_emb, mask, kp, hidden_size, tag_num, tp=TAG_PAD):
    """Runs the fused BiLSTM + linear + CRF-logZ kernel.

    Returns (P, logz): P is (B, T, tag_num) f32, logz is (B,) f32.
    """
    B, T, E = x_emb.shape
    H = hidden_size
    Bp = ((B + 7) // 8) * 8                           # sublane-aligned batch
    pad = Bp - B
    x_p = jnp.pad(x_emb, ((0, pad), (0, 0), (0, 0)))
    m_p = jnp.pad(mask.astype(jnp.float32), ((0, pad), (0, 0)))

    x_tm = jnp.transpose(x_p, (1, 0, 2)).reshape(T * Bp, E).astype(jnp.bfloat16)
    mask_tm = jnp.broadcast_to(
        jnp.transpose(m_p, (1, 0)).reshape(T * Bp, 1), (T * Bp, tp))
    mask_tm = mask_tm.astype(jnp.float32)

    args = (x_tm, kp["wx"], kp["b_comb"], kp["w_big"], kp["wl"], kp["bl"],
            kp["at8"], kp["astart"], kp["aend"], mask_tm)

    kernel = functools.partial(_bilstm_crf_kernel, T=T, Bp=Bp, H=H)
    p_flat, logz = pl.pallas_call(
        kernel,
        out_shape=(jax.ShapeDtypeStruct((T * Bp, tp), jnp.float32),
                   jax.ShapeDtypeStruct((Bp, tp), jnp.float32)),
        grid=(1,),
        in_specs=[_full_spec(a.shape) for a in args],
        out_specs=(_full_spec((T * Bp, tp)), _full_spec((Bp, tp))),
        scratch_shapes=[pltpu.VMEM((T * Bp, 2 * H), jnp.float32)],
        compiler_params=pltpu.CompilerParams(
            dimension_semantics=("arbitrary",)),
    )(*args)

    P = p_flat.reshape(T, Bp, tp).transpose(1, 0, 2)[:B, :, :tag_num]
    return P, logz[:B, 0]


# ---------------------------------------------------------------------------
# CRF glue (gather-heavy pieces) in plain JAX
# ---------------------------------------------------------------------------
def crf_true_score(P, y, mask, A, start_idx, end_idx):
    B, T, _Tn = P.shape
    b_idx = jnp.arange(B)
    score = A[start_idx, y[:, 0]] + P[b_idx, 0, y[:, 0]]
    for i in range(1, T):
        non_pad = mask[:, i]
        step = A[y[:, i - 1], y[:, i]] + P[b_idx, i, y[:, i]]
        score = score + step * non_pad
    last_idx = mask.sum(axis=1).astype(jnp.int32) - 1
    last_tag = y[b_idx, last_idx]
    score = score + A[last_tag, end_idx]
    return score


def crf_viterbi(P, mask, A, start_idx, end_idx, pad_idx):
    # TODO(synk): Viterbi path book-keeping uses data-dependent gathers every
    # step; kept in plain JAX (exact port of the reference) rather than Pallas.
    B, T, Tn = P.shape
    b_idx = jnp.arange(B)
    prob = A[start_idx][None, :] + P[:, 0]                      # (B, Tn)
    base_tag = jnp.broadcast_to(
        jnp.arange(Tn, dtype=jnp.float32)[None, :, None], (B, Tn, 1))
    tag = base_tag
    A_t = A.T
    for i in range(1, T):
        temp = prob[:, None, :] + A_t[None, :, :] + P[:, i, :, None]  # (B,cur,prev)
        new_prob = jnp.max(temp, axis=-1)
        new_tag = jnp.argmax(temp, axis=-1)                     # (B, Tn)
        non_pad = mask[:, i][:, None]                           # (B, 1)
        prob = new_prob * non_pad + prob * (1.0 - non_pad)
        non_pad3 = non_pad[:, :, None]
        append_tag = (base_tag * non_pad3
                      + jnp.full((B, Tn, 1), float(pad_idx), jnp.float32)
                      * (1.0 - non_pad3))
        pre_tag = tag[b_idx[:, None], new_tag, :]               # (B, Tn, i)
        tag = jnp.concatenate([pre_tag, append_tag], axis=-1)
    prob = prob + A[:, end_idx][None, :]
    max_tag = jnp.argmax(prob, axis=-1)
    return tag[b_idx, max_tag]


# ---------------------------------------------------------------------------
# Parameter setup (deterministic, synthetic) + kernel-layout packing
# ---------------------------------------------------------------------------
def make_transition_matrix(tag_dict):
    Tn = len(tag_dict)
    PAD, START, END = tag_dict['<pad>'], tag_dict['<start>'], tag_dict['<end>']
    A = jnp.zeros((Tn, Tn), jnp.float32)
    A = A.at[:, START].set(-10000.0)
    A = A.at[END, :].set(-10000.0)
    A = A.at[:, PAD].set(-10000.0)
    A = A.at[PAD, :].set(-10000.0)
    A = A.at[PAD, PAD].set(0.0)
    A = A.at[PAD, END].set(0.0)
    return A


def init_params(key, vocab_size, word_emb_size, input_size, hidden_size, tag_num):
    ks = jax.random.split(key, 12)
    H = hidden_size
    bound = 1.0 / jnp.sqrt(jnp.float32(H))

    def u(k, shape):
        return jax.random.uniform(k, shape, jnp.float32, -bound, bound)

    emb = jax.random.normal(ks[0], (vocab_size, word_emb_size), jnp.float32) * 0.1
    return dict(
        emb=emb,
        w_ih_f=u(ks[1], (4 * H, input_size)), w_hh_f=u(ks[2], (4 * H, H)),
        b_ih_f=u(ks[3], (4 * H,)), b_hh_f=u(ks[4], (4 * H,)),
        w_ih_b=u(ks[5], (4 * H, input_size)), w_hh_b=u(ks[6], (4 * H, H)),
        b_ih_b=u(ks[7], (4 * H,)), b_hh_b=u(ks[8], (4 * H,)),
        w_lin=u(ks[9], (tag_num, 2 * H)), b_lin=u(ks[10], (tag_num,)),
    )


def pack_kernel_params(raw, A, start_idx, end_idx, tag_num, tp=TAG_PAD):
    """Re-lays out the PyTorch-shaped params for the fused kernel.

    Gate-column layout on the 8H axis: [i_f,i_b | f_f,f_b | o_f,o_b | g_f,g_b]
    (sigmoid gates contiguous, tanh gate last).  PyTorch per-direction gate
    order is i, f, g, o.
    """
    H = raw["w_hh_f"].shape[1]
    GATES = (0, 1, 3, 2)                       # i, f, o, g

    def interleave(wf, wb):                    # (rows,4H) x2 -> (rows,8H)
        cols = []
        for k in GATES:
            cols.append(wf[:, k * H:(k + 1) * H])
            cols.append(wb[:, k * H:(k + 1) * H])
        return jnp.concatenate(cols, axis=1)

    wif, wib = raw["w_ih_f"].T, raw["w_ih_b"].T          # (E, 4H)
    whf, whb = raw["w_hh_f"].T, raw["w_hh_b"].T          # (H, 4H)
    zH = jnp.zeros((H, 4 * H), jnp.float32)

    wx = interleave(wif, wib)                            # (E, 8H), dense
    w_big = jnp.concatenate([interleave(whf, zH),
                             interleave(zH, whb)], axis=0)   # (2H, 8H)
    bf_ = (raw["b_ih_f"] + raw["b_hh_f"])[None, :]
    bb_ = (raw["b_ih_b"] + raw["b_hh_b"])[None, :]
    b_comb = interleave(bf_, bb_)                        # (1, 8H)

    w_lin, b_lin = raw["w_lin"], raw["b_lin"]            # (Tn, 2H), (Tn,)
    wl = jnp.zeros((2 * H, tp), jnp.float32).at[:, :tag_num].set(w_lin.T)
    bl = jnp.zeros((1, tp), jnp.float32).at[0, :tag_num].set(b_lin)

    cur_pad = max(8, ((tag_num + 7) // 8) * 8)           # 'cur' axis sublanes
    at8 = jnp.full((cur_pad, tp), NEG, jnp.float32).at[:tag_num, :tag_num].set(A.T)
    astart = jnp.full((1, tp), NEG, jnp.float32).at[0, :tag_num].set(A[start_idx])
    aend = jnp.full((1, tp), NEG, jnp.float32).at[0, :tag_num].set(A[:, end_idx])

    bf16 = jnp.bfloat16
    return dict(wx=wx.astype(bf16), b_comb=b_comb, w_big=w_big.astype(bf16),
                wl=wl.astype(bf16), bl=bl, at8=at8, astart=astart, aend=aend)


# ---------------------------------------------------------------------------
# Full forward (mirrors LSTM_CRF.forward)
# ---------------------------------------------------------------------------
def lstm_crf_forward(params, kparams, A, tag_dict, hidden_size, x, y, mask):
    pad_idx = tag_dict['<pad>']
    start_idx = tag_dict['<start>']
    end_idx = tag_dict['<end>']
    tag_num = len(tag_dict)

    x_emb = params["emb"][x]            # embedding lookup (glue)
    # dropout: eval-mode identity (deterministic forward)
    P, logz = bilstm_crf_pallas(x_emb, mask, kparams, hidden_size, tag_num)

    true_score = crf_true_score(P, y, mask, A, start_idx, end_idx)
    loss = -jnp.sum(true_score - logz)

    pred = crf_viterbi(P, mask, A, start_idx, end_idx, pad_idx).astype(jnp.int32)
    return loss, pred


if __name__ == "__main__":
    vocab_size = 50
    word_emb_size = 32
    input_size = 32
    hidden_size = 32
    tag_dict = {'<pad>': 0, '<start>': 1, '<end>': 2, 'B': 3, 'I': 4, 'O': 5, 'E': 6}
    B, T = 2, 8

    key = jax.random.PRNGKey(0)
    k_param, k_x, k_y = jax.random.split(key, 3)

    params = init_params(k_param, vocab_size, word_emb_size, input_size,
                         hidden_size, len(tag_dict))
    A = make_transition_matrix(tag_dict)
    kparams = pack_kernel_params(params, A, tag_dict['<start>'],
                                 tag_dict['<end>'], len(tag_dict))

    x = jax.random.randint(k_x, (B, T), 0, vocab_size, dtype=jnp.int32)
    lengths = jnp.array([8, 5], dtype=jnp.int32)
    mask = (jnp.arange(T)[None, :] < lengths[:, None]).astype(jnp.float32)
    y_raw = jax.random.randint(k_y, (B, T), 3, len(tag_dict), dtype=jnp.int32)
    y = jnp.where(mask > 0, y_raw, tag_dict['<pad>']).astype(jnp.int32)

    loss, pred = lstm_crf_forward(params, kparams, A, tag_dict, hidden_size,
                                  x, y, mask)
    jax.block_until_ready((loss, pred))
    print("KERNEL_OK")
</pallas_src>

<mosaic_0001>
module attributes {stable_mosaic.version = 11 : i64} {
  func.func @_bilstm_crf_kernel(%arg0: i32, %arg1: memref<64x32xbf16, #tpu.memory_space<vmem>>, %arg2: memref<32x256xbf16, #tpu.memory_space<vmem>>, %arg3: memref<1x256xf32, #tpu.memory_space<vmem>>, %arg4: memref<64x256xbf16, #tpu.memory_space<vmem>>, %arg5: memref<64x128xbf16, #tpu.memory_space<vmem>>, %arg6: memref<1x128xf32, #tpu.memory_space<vmem>>, %arg7: memref<8x128xf32, #tpu.memory_space<vmem>>, %arg8: memref<1x128xf32, #tpu.memory_space<vmem>>, %arg9: memref<1x128xf32, #tpu.memory_space<vmem>>, %arg10: memref<64x128xf32, #tpu.memory_space<vmem>>, %arg11: memref<64x128xf32, #tpu.memory_space<vmem>>, %arg12: memref<8x128xf32, #tpu.memory_space<vmem>>, %arg13: memref<64x64xf32, #tpu.memory_space<vmem>>) attributes {dimension_semantics = [#tpu.dimension_semantics<arbitrary>], iteration_bounds = array<i64: 1>, scalar_prefetch = 0 : i64, scratch_operands = 1 : i64, tpu.core_type = #tpu.core_type<tc>, window_params = [{pipeline_mode = #tpu.pipeline_mode<synchronous>, transform_indices = @transform_0, window_bounds = array<i64: 64, 32>}, {pipeline_mode = #tpu.pipeline_mode<synchronous>, transform_indices = @transform_1, window_bounds = array<i64: 32, 256>}, {pipeline_mode = #tpu.pipeline_mode<synchronous>, transform_indices = @transform_2, window_bounds = array<i64: 1, 256>}, {pipeline_mode = #tpu.pipeline_mode<synchronous>, transform_indices = @transform_3, window_bounds = array<i64: 64, 256>}, {pipeline_mode = #tpu.pipeline_mode<synchronous>, transform_indices = @transform_4, window_bounds = array<i64: 64, 128>}, {pipeline_mode = #tpu.pipeline_mode<synchronous>, transform_indices = @transform_5, window_bounds = array<i64: 1, 128>}, {pipeline_mode = #tpu.pipeline_mode<synchronous>, transform_indices = @transform_6, window_bounds = array<i64: 8, 128>}, {pipeline_mode = #tpu.pipeline_mode<synchronous>, transform_indices = @transform_7, window_bounds = array<i64: 1, 128>}, {pipeline_mode = #tpu.pipeline_mode<synchronous>, transform_indices = @transform_8, window_bounds = array<i64: 1, 128>}, {pipeline_mode = #tpu.pipeline_mode<synchronous>, transform_indices = @transform_9, window_bounds = array<i64: 64, 128>}, {pipeline_mode = #tpu.pipeline_mode<synchronous>, transform_indices = @transform_10, window_bounds = array<i64: 64, 128>}, {pipeline_mode = #tpu.pipeline_mode<synchronous>, transform_indices = @transform_11, window_bounds = array<i64: 8, 128>}]} {
    %c0 = arith.constant 0 : index
    %c0_0 = arith.constant 0 : index
    %0 = vector.load %arg1[%c0, %c0_0] : memref<64x32xbf16, #tpu.memory_space<vmem>>, vector<64x32xbf16>
    %c0_1 = arith.constant 0 : index
    %c0_2 = arith.constant 0 : index
    %1 = vector.load %arg2[%c0_1, %c0_2] : memref<32x256xbf16, #tpu.memory_space<vmem>>, vector<32x256xbf16>
    %cst = arith.constant dense<0.000000e+00> : vector<64x256xf32>
    %2 = tpu.matmul %0, %1, %cst {dimension_numbers = #tpu.dot_dimension_numbers<[1], [0], [0], [1], [0, 0, 1, 1], [], []>} : vector<64x32xbf16>, vector<32x256xbf16>, vector<64x256xf32> -> vector<64x256xf32>
    %c0_3 = arith.constant 0 : index
    %c0_4 = arith.constant 0 : index
    %3 = vector.load %arg3[%c0_3, %c0_4] : memref<1x256xf32, #tpu.memory_space<vmem>>, vector<1x256xf32>
    %4 = vector.broadcast %3 : vector<1x256xf32> to vector<64x256xf32>
    %5 = arith.addf %2, %4 : vector<64x256xf32>
    %c0_5 = arith.constant 0 : index
    %c0_6 = arith.constant 0 : index
    %6 = vector.load %arg4[%c0_5, %c0_6] : memref<64x256xbf16, #tpu.memory_space<vmem>>, vector<64x256xbf16>
    %7 = tpu.iota {dimensions = array<i32: 1>} : vector<1x256xi32>
    %c64_i32 = arith.constant 64 : i32
    %c0_i32 = arith.constant 0 : i32
    %8 = arith.cmpi eq, %c64_i32, %c0_i32 : i32
    %c1_i32 = arith.constant 1 : i32
    %9 = arith.select %8, %c1_i32, %c64_i32 : i32
    %10 = vector.broadcast %9 : i32 to vector<1x256xi32>
    %11 = arith.remsi %7, %10 : vector<1x256xi32>
    %c0_i32_7 = arith.constant 0 : i32
    %12 = vector.broadcast %c0_i32_7 : i32 to vector<1x256xi32>
    %13 = arith.cmpi ne, %11, %12 : vector<1x256xi32>
    %c0_i32_8 = arith.constant 0 : i32
    %14 = vector.broadcast %c0_i32_8 : i32 to vector<1x256xi32>
    %15 = arith.cmpi slt, %11, %14 : vector<1x256xi32>
    %c0_i32_9 = arith.constant 0 : i32
    %16 = arith.cmpi slt, %9, %c0_i32_9 : i32
    %17 = vector.broadcast %16 : i1 to vector<1x256xi1>
    %18 = vector.broadcast %17 : vector<1x256xi1> to vector<1x256xi1>
    %19 = arith.xori %15, %18 : vector<1x256xi1>
    %20 = arith.andi %19, %13 : vector<1x256xi1>
    %21 = vector.broadcast %9 : i32 to vector<1x256xi32>
    %22 = arith.addi %11, %21 : vector<1x256xi32>
    %23 = arith.select %20, %22, %11 : vector<1x256xi1>, vector<1x256xi32>
    %c32_i32 = arith.constant 32 : i32
    %24 = vector.broadcast %c32_i32 : i32 to vector<1x256xi32>
    %25 = arith.cmpi slt, %23, %24 : vector<1x256xi32>
    %cst_10 = arith.constant 0.000000e+00 : f32
    %26 = vector.broadcast %cst_10 : f32 to vector<8x64xf32>
    %cst_11 = arith.constant 0.000000e+00 : f32
    %27 = vector.broadcast %cst_11 : f32 to vector<8x64xf32>
    %28 = vector.extract_strided_slice %5 {offsets = [0, 0], sizes = [8, 256], strides = [1, 1]} : vector<64x256xf32> to vector<8x256xf32>
    %29 = vector.extract_strided_slice %5 {offsets = [56, 0], sizes = [8, 256], strides = [1, 1]} : vector<64x256xf32> to vector<8x256xf32>
    %30 = vector.shape_cast %25 : vector<1x256xi1> to vector<1x256xi1>
    %31 = vector.broadcast %30 : vector<1x256xi1> to vector<8x256xi1>
    %32 = arith.select %31, %28, %29 : vector<8x256xi1>, vector<8x256xf32>
    %33 = arith.truncf %26 : vector<8x64xf32> to vector<8x64xbf16>
    %cst_12 = arith.constant dense<0.000000e+00> : vector<8x256xf32>
    %34 = tpu.matmul %33, %6, %cst_12 {dimension_numbers = #tpu.dot_dimension_numbers<[1], [0], [0], [1], [0, 0, 1, 1], [], []>} : vector<8x64xbf16>, vector<64x256xbf16>, vector<8x256xf32> -> vector<8x256xf32>
    %35 = arith.addf %32, %34 : vector<8x256xf32>
    %36 = vector.extract_strided_slice %35 {offsets = [0, 0], sizes = [8, 192], strides = [1, 1]} : vector<8x256xf32> to vector<8x192xf32>
    %37 = arith.negf %36 : vector<8x192xf32>
    %38 = math.exp %37 : vector<8x192xf32>
    %cst_13 = arith.constant 1.000000e+00 : f32
    %39 = vector.broadcast %cst_13 : f32 to vector<8x192xf32>
    %40 = arith.addf %39, %38 : vector<8x192xf32>
    %41 = arith.divf %39, %40 : vector<8x192xf32>
    %42 = vector.extract_strided_slice %41 {offsets = [0, 0], sizes = [8, 64], strides = [1, 1]} : vector<8x192xf32> to vector<8x64xf32>
    %43 = vector.extract_strided_slice %41 {offsets = [0, 64], sizes = [8, 64], strides = [1, 1]} : vector<8x192xf32> to vector<8x64xf32>
    %44 = vector.extract_strided_slice %41 {offsets = [0, 128], sizes = [8, 64], strides = [1, 1]} : vector<8x192xf32> to vector<8x64xf32>
    %45 = vector.extract_strided_slice %35 {offsets = [0, 192], sizes = [8, 64], strides = [1, 1]} : vector<8x256xf32> to vector<8x64xf32>
    %46 = math.tanh %45 : vector<8x64xf32>
    %47 = arith.mulf %43, %27 : vector<8x64xf32>
    %48 = arith.mulf %42, %46 : vector<8x64xf32>
    %49 = arith.addf %47, %48 : vector<8x64xf32>
    %50 = math.tanh %49 : vector<8x64xf32>
    %51 = arith.mulf %44, %50 : vector<8x64xf32>
    %52 = vector.extract_strided_slice %51 {offsets = [0, 0], sizes = [8, 32], strides = [1, 1]} : vector<8x64xf32> to vector<8x32xf32>
    %c0_14 = arith.constant 0 : index
    %c0_15 = arith.constant 0 : index
    %53 = vector.load %arg13[%c0_14, %c0_15] : memref<64x64xf32, #tpu.memory_space<vmem>>, vector<8x32xf32>
    tpu.vector_store %arg13[%c0_14, %c0_15], %52 {strides = array<i32>} : memref<64x64xf32, #tpu.memory_space<vmem>>, vector<8x32xf32>,
    %54 = vector.extract_strided_slice %51 {offsets = [0, 32], sizes = [8, 32], strides = [1, 1]} : vector<8x64xf32> to vector<8x32xf32>
    %c56 = arith.constant 56 : index
    %c32 = arith.constant 32 : index
    %55 = vector.load %arg13[%c56, %c32] : memref<64x64xf32, #tpu.memory_space<vmem>>, vector<8x32xf32>
    tpu.vector_store %arg13[%c56, %c32], %54 {strides = array<i32>} : memref<64x64xf32, #tpu.memory_space<vmem>>, vector<8x32xf32>,
    %56 = vector.extract_strided_slice %5 {offsets = [8, 0], sizes = [8, 256], strides = [1, 1]} : vector<64x256xf32> to vector<8x256xf32>
    %57 = vector.extract_strided_slice %5 {offsets = [48, 0], sizes = [8, 256], strides = [1, 1]} : vector<64x256xf32> to vector<8x256xf32>
    %58 = vector.shape_cast %25 : vector<1x256xi1> to vector<1x256xi1>
    %59 = vector.broadcast %58 : vector<1x256xi1> to vector<8x256xi1>
    %60 = arith.select %59, %56, %57 : vector<8x256xi1>, vector<8x256xf32>
    %61 = arith.truncf %51 : vector<8x64xf32> to vector<8x64xbf16>
    %cst_16 = arith.constant dense<0.000000e+00> : vector<8x256xf32>
    %62 = tpu.matmul %61, %6, %cst_16 {dimension_numbers = #tpu.dot_dimension_numbers<[1], [0], [0], [1], [0, 0, 1, 1], [], []>} : vector<8x64xbf16>, vector<64x256xbf16>, vector<8x256xf32> -> vector<8x256xf32>
    %63 = arith.addf %60, %62 : vector<8x256xf32>
    %64 = vector.extract_strided_slice %63 {offsets = [0, 0], sizes = [8, 192], strides = [1, 1]} : vector<8x256xf32> to vector<8x192xf32>
    %65 = arith.negf %64 : vector<8x192xf32>
    %66 = math.exp %65 : vector<8x192xf32>
    %cst_17 = arith.constant 1.000000e+00 : f32
    %67 = vector.broadcast %cst_17 : f32 to vector<8x192xf32>
    %68 = arith.addf %67, %66 : vector<8x192xf32>
    %69 = arith.divf %67, %68 : vector<8x192xf32>
    %70 = vector.extract_strided_slice %69 {offsets = [0, 0], sizes = [8, 64], strides = [1, 1]} : vector<8x192xf32> to vector<8x64xf32>
    %71 = vector.extract_strided_slice %69 {offsets = [0, 64], sizes = [8, 64], strides = [1, 1]} : vector<8x192xf32> to vector<8x64xf32>
    %72 = vector.extract_strided_slice %69 {offsets = [0, 128], sizes = [8, 64], strides = [1, 1]} : vector<8x192xf32> to vector<8x64xf32>
    %73 = vector.extract_strided_slice %63 {offsets = [0, 192], sizes = [8, 64], strides = [1, 1]} : vector<8x256xf32> to vector<8x64xf32>
    %74 = math.tanh %73 : vector<8x64xf32>
    %75 = arith.mulf %71, %49 : vector<8x64xf32>
    %76 = arith.mulf %70, %74 : vector<8x64xf32>
    %77 = arith.addf %75, %76 : vector<8x64xf32>
    %78 = math.tanh %77 : vector<8x64xf32>
    %79 = arith.mulf %72, %78 : vector<8x64xf32>
    %80 = vector.extract_strided_slice %79 {offsets = [0, 0], sizes = [8, 32], strides = [1, 1]} : vector<8x64xf32> to vector<8x32xf32>
    %c8 = arith.constant 8 : index
    %c0_18 = arith.constant 0 : index
    %81 = vector.load %arg13[%c8, %c0_18] : memref<64x64xf32, #tpu.memory_space<vmem>>, vector<8x32xf32>
    tpu.vector_store %arg13[%c8, %c0_18], %80 {strides = array<i32>} : memref<64x64xf32, #tpu.memory_space<vmem>>, vector<8x32xf32>,
    %82 = vector.extract_strided_slice %79 {offsets = [0, 32], sizes = [8, 32], strides = [1, 1]} : vector<8x64xf32> to vector<8x32xf32>
    %c48 = arith.constant 48 : index
    %c32_19 = arith.constant 32 : index
    %83 = vector.load %arg13[%c48, %c32_19] : memref<64x64xf32, #tpu.memory_space<vmem>>, vector<8x32xf32>
    tpu.vector_store %arg13[%c48, %c32_19], %82 {strides = array<i32>} : memref<64x64xf32, #tpu.memory_space<vmem>>, vector<8x32xf32>,
    %84 = vector.extract_strided_slice %5 {offsets = [16, 0], sizes = [8, 256], strides = [1, 1]} : vector<64x256xf32> to vector<8x256xf32>
    %85 = vector.extract_strided_slice %5 {offsets = [40, 0], sizes = [8, 256], strides = [1, 1]} : vector<64x256xf32> to vector<8x256xf32>
    %86 = vector.shape_cast %25 : vector<1x256xi1> to vector<1x256xi1>
    %87 = vector.broadcast %86 : vector<1x256xi1> to vector<8x256xi1>
    %88 = arith.select %87, %84, %85 : vector<8x256xi1>, vector<8x256xf32>
    %89 = arith.truncf %79 : vector<8x64xf32> to vector<8x64xbf16>
    %cst_20 = arith.constant dense<0.000000e+00> : vector<8x256xf32>
    %90 = tpu.matmul %89, %6, %cst_20 {dimension_numbers = #tpu.dot_dimension_numbers<[1], [0], [0], [1], [0, 0, 1, 1], [], []>} : vector<8x64xbf16>, vector<64x256xbf16>, vector<8x256xf32> -> vector<8x256xf32>
    %91 = arith.addf %88, %90 : vector<8x256xf32>
    %92 = vector.extract_strided_slice %91 {offsets = [0, 0], sizes = [8, 192], strides = [1, 1]} : vector<8x256xf32> to vector<8x192xf32>
    %93 = arith.negf %92 : vector<8x192xf32>
    %94 = math.exp %93 : vector<8x192xf32>
    %cst_21 = arith.constant 1.000000e+00 : f32
    %95 = vector.broadcast %cst_21 : f32 to vector<8x192xf32>
    %96 = arith.addf %95, %94 : vector<8x192xf32>
    %97 = arith.divf %95, %96 : vector<8x192xf32>
    %98 = vector.extract_strided_slice %97 {offsets = [0, 0], sizes = [8, 64], strides = [1, 1]} : vector<8x192xf32> to vector<8x64xf32>
    %99 = vector.extract_strided_slice %97 {offsets = [0, 64], sizes = [8, 64], strides = [1, 1]} : vector<8x192xf32> to vector<8x64xf32>
    %100 = vector.extract_strided_slice %97 {offsets = [0, 128], sizes = [8, 64], strides = [1, 1]} : vector<8x192xf32> to vector<8x64xf32>
    %101 = vector.extract_strided_slice %91 {offsets = [0, 192], sizes = [8, 64], strides = [1, 1]} : vector<8x256xf32> to vector<8x64xf32>
    %102 = math.tanh %101 : vector<8x64xf32>
    %103 = arith.mulf %99, %77 : vector<8x64xf32>
    %104 = arith.mulf %98, %102 : vector<8x64xf32>
    %105 = arith.addf %103, %104 : vector<8x64xf32>
    %106 = math.tanh %105 : vector<8x64xf32>
    %107 = arith.mulf %100, %106 : vector<8x64xf32>
    %108 = vector.extract_strided_slice %107 {offsets = [0, 0], sizes = [8, 32], strides = [1, 1]} : vector<8x64xf32> to vector<8x32xf32>
    %c16 = arith.constant 16 : index
    %c0_22 = arith.constant 0 : index
    %109 = vector.load %arg13[%c16, %c0_22] : memref<64x64xf32, #tpu.memory_space<vmem>>, vector<8x32xf32>
    tpu.vector_store %arg13[%c16, %c0_22], %108 {strides = array<i32>} : memref<64x64xf32, #tpu.memory_space<vmem>>, vector<8x32xf32>,
    %110 = vector.extract_strided_slice %107 {offsets = [0, 32], sizes = [8, 32], strides = [1, 1]} : vector<8x64xf32> to vector<8x32xf32>
    %c40 = arith.constant 40 : index
    %c32_23 = arith.constant 32 : index
    %111 = vector.load %arg13[%c40, %c32_23] : memref<64x64xf32, #tpu.memory_space<vmem>>, vector<8x32xf32>
    tpu.vector_store %arg13[%c40, %c32_23], %110 {strides = array<i32>} : memref<64x64xf32, #tpu.memory_space<vmem>>, vector<8x32xf32>,
    %112 = vector.extract_strided_slice %5 {offsets = [24, 0], sizes = [8, 256], strides = [1, 1]} : vector<64x256xf32> to vector<8x256xf32>
    %113 = vector.extract_strided_slice %5 {offsets = [32, 0], sizes = [8, 256], strides = [1, 1]} : vector<64x256xf32> to vector<8x256xf32>
    %114 = vector.shape_cast %25 : vector<1x256xi1> to vector<1x256xi1>
    %115 = vector.broadcast %114 : vector<1x256xi1> to vector<8x256xi1>
    %116 = arith.select %115, %112, %113 : vector<8x256xi1>, vector<8x256xf32>
    %117 = arith.truncf %107 : vector<8x64xf32> to vector<8x64xbf16>
    %cst_24 = arith.constant dense<0.000000e+00> : vector<8x256xf32>
    %118 = tpu.matmul %117, %6, %cst_24 {dimension_numbers = #tpu.dot_dimension_numbers<[1], [0], [0], [1], [0, 0, 1, 1], [], []>} : vector<8x64xbf16>, vector<64x256xbf16>, vector<8x256xf32> -> vector<8x256xf32>
    %119 = arith.addf %116, %118 : vector<8x256xf32>
    %120 = vector.extract_strided_slice %119 {offsets = [0, 0], sizes = [8, 192], strides = [1, 1]} : vector<8x256xf32> to vector<8x192xf32>
    %121 = arith.negf %120 : vector<8x192xf32>
    %122 = math.exp %121 : vector<8x192xf32>
    %cst_25 = arith.constant 1.000000e+00 : f32
    %123 = vector.broadcast %cst_25 : f32 to vector<8x192xf32>
    %124 = arith.addf %123, %122 : vector<8x192xf32>
    %125 = arith.divf %123, %124 : vector<8x192xf32>
    %126 = vector.extract_strided_slice %125 {offsets = [0, 0], sizes = [8, 64], strides = [1, 1]} : vector<8x192xf32> to vector<8x64xf32>
    %127 = vector.extract_strided_slice %125 {offsets = [0, 64], sizes = [8, 64], strides = [1, 1]} : vector<8x192xf32> to vector<8x64xf32>
    %128 = vector.extract_strided_slice %125 {offsets = [0, 128], sizes = [8, 64], strides = [1, 1]} : vector<8x192xf32> to vector<8x64xf32>
    %129 = vector.extract_strided_slice %119 {offsets = [0, 192], sizes = [8, 64], strides = [1, 1]} : vector<8x256xf32> to vector<8x64xf32>
    %130 = math.tanh %129 : vector<8x64xf32>
    %131 = arith.mulf %127, %105 : vector<8x64xf32>
    %132 = arith.mulf %126, %130 : vector<8x64xf32>
    %133 = arith.addf %131, %132 : vector<8x64xf32>
    %134 = math.tanh %133 : vector<8x64xf32>
    %135 = arith.mulf %128, %134 : vector<8x64xf32>
    %136 = vector.extract_strided_slice %135 {offsets = [0, 0], sizes = [8, 32], strides = [1, 1]} : vector<8x64xf32> to vector<8x32xf32>
    %c24 = arith.constant 24 : index
    %c0_26 = arith.constant 0 : index
    %137 = vector.load %arg13[%c24, %c0_26] : memref<64x64xf32, #tpu.memory_space<vmem>>, vector<8x32xf32>
    tpu.vector_store %arg13[%c24, %c0_26], %136 {strides = array<i32>} : memref<64x64xf32, #tpu.memory_space<vmem>>, vector<8x32xf32>,
    %138 = vector.extract_strided_slice %135 {offsets = [0, 32], sizes = [8, 32], strides = [1, 1]} : vector<8x64xf32> to vector<8x32xf32>
    %c32_27 = arith.constant 32 : index
    %c32_28 = arith.constant 32 : index
    %139 = vector.load %arg13[%c32_27, %c32_28] : memref<64x64xf32, #tpu.memory_space<vmem>>, vector<8x32xf32>
    tpu.vector_store %arg13[%c32_27, %c32_28], %138 {strides = array<i32>} : memref<64x64xf32, #tpu.memory_space<vmem>>, vector<8x32xf32>,
    %140 = vector.extract_strided_slice %5 {offsets = [32, 0], sizes = [8, 256], strides = [1, 1]} : vector<64x256xf32> to vector<8x256xf32>
    %141 = vector.extract_strided_slice %5 {offsets = [24, 0], sizes = [8, 256], strides = [1, 1]} : vector<64x256xf32> to vector<8x256xf32>
    %142 = vector.shape_cast %25 : vector<1x256xi1> to vector<1x256xi1>
    %143 = vector.broadcast %142 : vector<1x256xi1> to vector<8x256xi1>
    %144 = arith.select %143, %140, %141 : vector<8x256xi1>, vector<8x256xf32>
    %145 = arith.truncf %135 : vector<8x64xf32> to vector<8x64xbf16>
    %cst_29 = arith.constant dense<0.000000e+00> : vector<8x256xf32>
    %146 = tpu.matmul %145, %6, %cst_29 {dimension_numbers = #tpu.dot_dimension_numbers<[1], [0], [0], [1], [0, 0, 1, 1], [], []>} : vector<8x64xbf16>, vector<64x256xbf16>, vector<8x256xf32> -> vector<8x256xf32>
    %147 = arith.addf %144, %146 : vector<8x256xf32>
    %148 = vector.extract_strided_slice %147 {offsets = [0, 0], sizes = [8, 192], strides = [1, 1]} : vector<8x256xf32> to vector<8x192xf32>
    %149 = arith.negf %148 : vector<8x192xf32>
    %150 = math.exp %149 : vector<8x192xf32>
    %cst_30 = arith.constant 1.000000e+00 : f32
    %151 = vector.broadcast %cst_30 : f32 to vector<8x192xf32>
    %152 = arith.addf %151, %150 : vector<8x192xf32>
    %153 = arith.divf %151, %152 : vector<8x192xf32>
    %154 = vector.extract_strided_slice %153 {offsets = [0, 0], sizes = [8, 64], strides = [1, 1]} : vector<8x192xf32> to vector<8x64xf32>
    %155 = vector.extract_strided_slice %153 {offsets = [0, 64], sizes = [8, 64], strides = [1, 1]} : vector<8x192xf32> to vector<8x64xf32>
    %156 = vector.extract_strided_slice %153 {offsets = [0, 128], sizes = [8, 64], strides = [1, 1]} : vector<8x192xf32> to vector<8x64xf32>
    %157 = vector.extract_strided_slice %147 {offsets = [0, 192], sizes = [8, 64], strides = [1, 1]} : vector<8x256xf32> to vector<8x64xf32>
    %158 = math.tanh %157 : vector<8x64xf32>
    %159 = arith.mulf %155, %133 : vector<8x64xf32>
    %160 = arith.mulf %154, %158 : vector<8x64xf32>
    %161 = arith.addf %159, %160 : vector<8x64xf32>
    %162 = math.tanh %161 : vector<8x64xf32>
    %163 = arith.mulf %156, %162 : vector<8x64xf32>
    %164 = vector.extract_strided_slice %163 {offsets = [0, 0], sizes = [8, 32], strides = [1, 1]} : vector<8x64xf32> to vector<8x32xf32>
    %c32_31 = arith.constant 32 : index
    %c0_32 = arith.constant 0 : index
    %165 = vector.load %arg13[%c32_31, %c0_32] : memref<64x64xf32, #tpu.memory_space<vmem>>, vector<8x32xf32>
    tpu.vector_store %arg13[%c32_31, %c0_32], %164 {strides = array<i32>} : memref<64x64xf32, #tpu.memory_space<vmem>>, vector<8x32xf32>,
    %166 = vector.extract_strided_slice %163 {offsets = [0, 32], sizes = [8, 32], strides = [1, 1]} : vector<8x64xf32> to vector<8x32xf32>
    %c24_33 = arith.constant 24 : index
    %c32_34 = arith.constant 32 : index
    %167 = vector.load %arg13[%c24_33, %c32_34] : memref<64x64xf32, #tpu.memory_space<vmem>>, vector<8x32xf32>
    tpu.vector_store %arg13[%c24_33, %c32_34], %166 {strides = array<i32>} : memref<64x64xf32, #tpu.memory_space<vmem>>, vector<8x32xf32>,
    %168 = vector.extract_strided_slice %5 {offsets = [40, 0], sizes = [8, 256], strides = [1, 1]} : vector<64x256xf32> to vector<8x256xf32>
    %169 = vector.extract_strided_slice %5 {offsets = [16, 0], sizes = [8, 256], strides = [1, 1]} : vector<64x256xf32> to vector<8x256xf32>
    %170 = vector.shape_cast %25 : vector<1x256xi1> to vector<1x256xi1>
    %171 = vector.broadcast %170 : vector<1x256xi1> to vector<8x256xi1>
    %172 = arith.select %171, %168, %169 : vector<8x256xi1>, vector<8x256xf32>
    %173 = arith.truncf %163 : vector<8x64xf32> to vector<8x64xbf16>
    %cst_35 = arith.constant dense<0.000000e+00> : vector<8x256xf32>
    %174 = tpu.matmul %173, %6, %cst_35 {dimension_numbers = #tpu.dot_dimension_numbers<[1], [0], [0], [1], [0, 0, 1, 1], [], []>} : vector<8x64xbf16>, vector<64x256xbf16>, vector<8x256xf32> -> vector<8x256xf32>
    %175 = arith.addf %172, %174 : vector<8x256xf32>
    %176 = vector.extract_strided_slice %175 {offsets = [0, 0], sizes = [8, 192], strides = [1, 1]} : vector<8x256xf32> to vector<8x192xf32>
    %177 = arith.negf %176 : vector<8x192xf32>
    %178 = math.exp %177 : vector<8x192xf32>
    %cst_36 = arith.constant 1.000000e+00 : f32
    %179 = vector.broadcast %cst_36 : f32 to vector<8x192xf32>
    %180 = arith.addf %179, %178 : vector<8x192xf32>
    %181 = arith.divf %179, %180 : vector<8x192xf32>
    %182 = vector.extract_strided_slice %181 {offsets = [0, 0], sizes = [8, 64], strides = [1, 1]} : vector<8x192xf32> to vector<8x64xf32>
    %183 = vector.extract_strided_slice %181 {offsets = [0, 64], sizes = [8, 64], strides = [1, 1]} : vector<8x192xf32> to vector<8x64xf32>
    %184 = vector.extract_strided_slice %181 {offsets = [0, 128], sizes = [8, 64], strides = [1, 1]} : vector<8x192xf32> to vector<8x64xf32>
    %185 = vector.extract_strided_slice %175 {offsets = [0, 192], sizes = [8, 64], strides = [1, 1]} : vector<8x256xf32> to vector<8x64xf32>
    %186 = math.tanh %185 : vector<8x64xf32>
    %187 = arith.mulf %183, %161 : vector<8x64xf32>
    %188 = arith.mulf %182, %186 : vector<8x64xf32>
    %189 = arith.addf %187, %188 : vector<8x64xf32>
    %190 = math.tanh %189 : vector<8x64xf32>
    %191 = arith.mulf %184, %190 : vector<8x64xf32>
    %192 = vector.extract_strided_slice %191 {offsets = [0, 0], sizes = [8, 32], strides = [1, 1]} : vector<8x64xf32> to vector<8x32xf32>
    %c40_37 = arith.constant 40 : index
    %c0_38 = arith.constant 0 : index
    %193 = vector.load %arg13[%c40_37, %c0_38] : memref<64x64xf32, #tpu.memory_space<vmem>>, vector<8x32xf32>
    tpu.vector_store %arg13[%c40_37, %c0_38], %192 {strides = array<i32>} : memref<64x64xf32, #tpu.memory_space<vmem>>, vector<8x32xf32>,
    %194 = vector.extract_strided_slice %191 {offsets = [0, 32], sizes = [8, 32], strides = [1, 1]} : vector<8x64xf32> to vector<8x32xf32>
    %c16_39 = arith.constant 16 : index
    %c32_40 = arith.constant 32 : index
    %195 = vector.load %arg13[%c16_39, %c32_40] : memref<64x64xf32, #tpu.memory_space<vmem>>, vector<8x32xf32>
    tpu.vector_store %arg13[%c16_39, %c32_40], %194 {strides = array<i32>} : memref<64x64xf32, #tpu.memory_space<vmem>>, vector<8x32xf32>,
    %196 = vector.extract_strided_slice %5 {offsets = [48, 0], sizes = [8, 256], strides = [1, 1]} : vector<64x256xf32> to vector<8x256xf32>
    %197 = vector.extract_strided_slice %5 {offsets = [8, 0], sizes = [8, 256], strides = [1, 1]} : vector<64x256xf32> to vector<8x256xf32>
    %198 = vector.shape_cast %25 : vector<1x256xi1> to vector<1x256xi1>
    %199 = vector.broadcast %198 : vector<1x256xi1> to vector<8x256xi1>
    %200 = arith.select %199, %196, %197 : vector<8x256xi1>, vector<8x256xf32>
    %201 = arith.truncf %191 : vector<8x64xf32> to vector<8x64xbf16>
    %cst_41 = arith.constant dense<0.000000e+00> : vector<8x256xf32>
    %202 = tpu.matmul %201, %6, %cst_41 {dimension_numbers = #tpu.dot_dimension_numbers<[1], [0], [0], [1], [0, 0, 1, 1], [], []>} : vector<8x64xbf16>, vector<64x256xbf16>, vector<8x256xf32> -> vector<8x256xf32>
    %203 = arith.addf %200, %202 : vector<8x256xf32>
    %204 = vector.extract_strided_slice %203 {offsets = [0, 0], sizes = [8, 192], strides = [1, 1]} : vector<8x256xf32> to vector<8x192xf32>
    %205 = arith.negf %204 : vector<8x192xf32>
    %206 = math.exp %205 : vector<8x192xf32>
    %cst_42 = arith.constant 1.000000e+00 : f32
    %207 = vector.broadcast %cst_42 : f32 to vector<8x192xf32>
    %208 = arith.addf %207, %206 : vector<8x192xf32>
    %209 = arith.divf %207, %208 : vector<8x192xf32>
    %210 = vector.extract_strided_slice %209 {offsets = [0, 0], sizes = [8, 64], strides = [1, 1]} : vector<8x192xf32> to vector<8x64xf32>
    %211 = vector.extract_strided_slice %209 {offsets = [0, 64], sizes = [8, 64], strides = [1, 1]} : vector<8x192xf32> to vector<8x64xf32>
    %212 = vector.extract_strided_slice %209 {offsets = [0, 128], sizes = [8, 64], strides = [1, 1]} : vector<8x192xf32> to vector<8x64xf32>
    %213 = vector.extract_strided_slice %203 {offsets = [0, 192], sizes = [8, 64], strides = [1, 1]} : vector<8x256xf32> to vector<8x64xf32>
    %214 = math.tanh %213 : vector<8x64xf32>
    %215 = arith.mulf %211, %189 : vector<8x64xf32>
    %216 = arith.mulf %210, %214 : vector<8x64xf32>
    %217 = arith.addf %215, %216 : vector<8x64xf32>
    %218 = math.tanh %217 : vector<8x64xf32>
    %219 = arith.mulf %212, %218 : vector<8x64xf32>
    %220 = vector.extract_strided_slice %219 {offsets = [0, 0], sizes = [8, 32], strides = [1, 1]} : vector<8x64xf32> to vector<8x32xf32>
    %c48_43 = arith.constant 48 : index
    %c0_44 = arith.constant 0 : index
    %221 = vector.load %arg13[%c48_43, %c0_44] : memref<64x64xf32, #tpu.memory_space<vmem>>, vector<8x32xf32>
    tpu.vector_store %arg13[%c48_43, %c0_44], %220 {strides = array<i32>} : memref<64x64xf32, #tpu.memory_space<vmem>>, vector<8x32xf32>,
    %222 = vector.extract_strided_slice %219 {offsets = [0, 32], sizes = [8, 32], strides = [1, 1]} : vector<8x64xf32> to vector<8x32xf32>
    %c8_45 = arith.constant 8 : index
    %c32_46 = arith.constant 32 : index
    %223 = vector.load %arg13[%c8_45, %c32_46] : memref<64x64xf32, #tpu.memory_space<vmem>>, vector<8x32xf32>
    tpu.vector_store %arg13[%c8_45, %c32_46], %222 {strides = array<i32>} : memref<64x64xf32, #tpu.memory_space<vmem>>, vector<8x32xf32>,
    %224 = vector.extract_strided_slice %5 {offsets = [56, 0], sizes = [8, 256], strides = [1, 1]} : vector<64x256xf32> to vector<8x256xf32>
    %225 = vector.extract_strided_slice %5 {offsets = [0, 0], sizes = [8, 256], strides = [1, 1]} : vector<64x256xf32> to vector<8x256xf32>
    %226 = vector.shape_cast %25 : vector<1x256xi1> to vector<1x256xi1>
    %227 = vector.broadcast %226 : vector<1x256xi1> to vector<8x256xi1>
    %228 = arith.select %227, %224, %225 : vector<8x256xi1>, vector<8x256xf32>
    %229 = arith.truncf %219 : vector<8x64xf32> to vector<8x64xbf16>
    %cst_47 = arith.constant dense<0.000000e+00> : vector<8x256xf32>
    %230 = tpu.matmul %229, %6, %cst_47 {dimension_numbers = #tpu.dot_dimension_numbers<[1], [0], [0], [1], [0, 0, 1, 1], [], []>} : vector<8x64xbf16>, vector<64x256xbf16>, vector<8x256xf32> -> vector<8x256xf32>
    %231 = arith.addf %228, %230 : vector<8x256xf32>
    %232 = vector.extract_strided_slice %231 {offsets = [0, 0], sizes = [8, 192], strides = [1, 1]} : vector<8x256xf32> to vector<8x192xf32>
    %233 = arith.negf %232 : vector<8x192xf32>
    %234 = math.exp %233 : vector<8x192xf32>
    %cst_48 = arith.constant 1.000000e+00 : f32
    %235 = vector.broadcast %cst_48 : f32 to vector<8x192xf32>
    %236 = arith.addf %235, %234 : vector<8x192xf32>
    %237 = arith.divf %235, %236 : vector<8x192xf32>
    %238 = vector.extract_strided_slice %237 {offsets = [0, 0], sizes = [8, 64], strides = [1, 1]} : vector<8x192xf32> to vector<8x64xf32>
    %239 = vector.extract_strided_slice %237 {offsets = [0, 64], sizes = [8, 64], strides = [1, 1]} : vector<8x192xf32> to vector<8x64xf32>
    %240 = vector.extract_strided_slice %237 {offsets = [0, 128], sizes = [8, 64], strides = [1, 1]} : vector<8x192xf32> to vector<8x64xf32>
    %241 = vector.extract_strided_slice %231 {offsets = [0, 192], sizes = [8, 64], strides = [1, 1]} : vector<8x256xf32> to vector<8x64xf32>
    %242 = math.tanh %241 : vector<8x64xf32>
    %243 = arith.mulf %239, %217 : vector<8x64xf32>
    %244 = arith.mulf %238, %242 : vector<8x64xf32>
    %245 = arith.addf %243, %244 : vector<8x64xf32>
    %246 = math.tanh %245 : vector<8x64xf32>
    %247 = arith.mulf %240, %246 : vector<8x64xf32>
    %248 = vector.extract_strided_slice %247 {offsets = [0, 0], sizes = [8, 32], strides = [1, 1]} : vector<8x64xf32> to vector<8x32xf32>
    %c56_49 = arith.constant 56 : index
    %c0_50 = arith.constant 0 : index
    %249 = vector.load %arg13[%c56_49, %c0_50] : memref<64x64xf32, #tpu.memory_space<vmem>>, vector<8x32xf32>
    tpu.vector_store %arg13[%c56_49, %c0_50], %248 {strides = array<i32>} : memref<64x64xf32, #tpu.memory_space<vmem>>, vector<8x32xf32>,
    %250 = vector.extract_strided_slice %247 {offsets = [0, 32], sizes = [8, 32], strides = [1, 1]} : vector<8x64xf32> to vector<8x32xf32>
    %c0_51 = arith.constant 0 : index
    %c32_52 = arith.constant 32 : index
    %251 = vector.load %arg13[%c0_51, %c32_52] : memref<64x64xf32, #tpu.memory_space<vmem>>, vector<8x32xf32>
    tpu.vector_store %arg13[%c0_51, %c32_52], %250 {strides = array<i32>} : memref<64x64xf32, #tpu.memory_space<vmem>>, vector<8x32xf32>,
    %c0_53 = arith.constant 0 : index
    %c0_54 = arith.constant 0 : index
    %252 = vector.load %arg13[%c0_53, %c0_54] : memref<64x64xf32, #tpu.memory_space<vmem>>, vector<64x64xf32>
    %253 = arith.truncf %252 : vector<64x64xf32> to vector<64x64xbf16>
    %c0_55 = arith.constant 0 : index
    %c0_56 = arith.constant 0 : index
    %254 = vector.load %arg5[%c0_55, %c0_56] : memref<64x128xbf16, #tpu.memory_space<vmem>>, vector<64x128xbf16>
    %cst_57 = arith.constant dense<0.000000e+00> : vector<64x128xf32>
    %255 = tpu.matmul %253, %254, %cst_57 {dimension_numbers = #tpu.dot_dimension_numbers<[1], [0], [0], [1], [0, 0, 1, 1], [], []>} : vector<64x64xbf16>, vector<64x128xbf16>, vector<64x128xf32> -> vector<64x128xf32>
    %c0_58 = arith.constant 0 : index
    %c0_59 = arith.constant 0 : index
    %256 = vector.load %arg6[%c0_58, %c0_59] : memref<1x128xf32, #tpu.memory_space<vmem>>, vector<1x128xf32>
    %257 = vector.broadcast %256 : vector<1x128xf32> to vector<64x128xf32>
    %258 = arith.addf %255, %257 : vector<64x128xf32>
    %c0_60 = arith.constant 0 : index
    %c0_61 = arith.constant 0 : index
    %259 = vector.load %arg11[%c0_60, %c0_61] : memref<64x128xf32, #tpu.memory_space<vmem>>, vector<64x128xf32>
    tpu.vector_store %arg11[%c0_60, %c0_61], %258 {strides = array<i32>} : memref<64x128xf32, #tpu.memory_space<vmem>>, vector<64x128xf32>,
    %c0_62 = arith.constant 0 : index
    %c0_63 = arith.constant 0 : index
    %260 = vector.load %arg7[%c0_62, %c0_63] : memref<8x128xf32, #tpu.memory_space<vmem>>, vector<8x128xf32>
    %261 = vector.shape_cast %260 : vector<8x128xf32> to vector<1x8x128xf32>
    %cst_64 = arith.constant -1.000000e+09 : f32
    %262 = vector.broadcast %cst_64 : f32 to vector<8x120xf32>
    %c0_65 = arith.constant 0 : index
    %c0_66 = arith.constant 0 : index
    %263 = vector.load %arg8[%c0_65, %c0_66] : memref<1x128xf32, #tpu.memory_space<vmem>>, vector<1x128xf32>
    %c0_67 = arith.constant 0 : index
    %c0_68 = arith.constant 0 : index
    %264 = vector.load %arg11[%c0_67, %c0_68] : memref<64x128xf32, #tpu.memory_space<vmem>>, vector<8x128xf32>
    %265 = vector.broadcast %263 : vector<1x128xf32> to vector<8x128xf32>
    %266 = arith.addf %265, %264 : vector<8x128xf32>
    %267 = vector.shape_cast %266 : vector<8x128xf32> to vector<8x1x128xf32>
    %268 = vector.broadcast %267 : vector<8x1x128xf32> to vector<8x8x128xf32>
    %269 = vector.broadcast %261 : vector<1x8x128xf32> to vector<8x8x128xf32>
    %270 = arith.addf %268, %269 : vector<8x8x128xf32>
    %cst_69 = arith.constant dense<0xFF800000> : vector<8x8xf32>
    %271 = vector.multi_reduction <maximumf>, %270, %cst_69 [2] : vector<8x8x128xf32> to vector<8x8xf32>
    %272 = vector.shape_cast %271 : vector<8x8xf32> to vector<8x8x1xf32>
    %273 = vector.broadcast %272 : vector<8x8x1xf32> to vector<8x8x128xf32>
    %274 = arith.subf %270, %273 : vector<8x8x128xf32>
    %275 = math.exp %274 : vector<8x8x128xf32>
    %cst_70 = arith.constant dense<0.000000e+00> : vector<8x8xf32>
    %276 = vector.multi_reduction <add>, %275, %cst_70 [2] : vector<8x8x128xf32> to vector<8x8xf32>
    %277 = math.log %276 : vector<8x8xf32>
    %278 = arith.addf %271, %277 : vector<8x8xf32>
    %279 = tpu.concatenate %278, %262 in 1 : vector<8x8xf32>, vector<8x120xf32> -> vector<8x128xf32>
    %c8_71 = arith.constant 8 : index
    %c0_72 = arith.constant 0 : index
    %280 = vector.load %arg11[%c8_71, %c0_72] : memref<64x128xf32, #tpu.memory_space<vmem>>, vector<8x128xf32>
    %281 = arith.addf %279, %280 : vector<8x128xf32>
    %c8_73 = arith.constant 8 : index
    %c0_74 = arith.constant 0 : index
    %282 = vector.load %arg10[%c8_73, %c0_74] : memref<64x128xf32, #tpu.memory_space<vmem>>, vector<8x128xf32>
    %cst_75 = arith.constant 0.000000e+00 : f32
    %283 = vector.broadcast %cst_75 : f32 to vector<8x128xf32>
    %284 = arith.cmpf ogt, %282, %283 : vector<8x128xf32>
    %285 = arith.select %284, %281, %266 : vector<8x128xi1>, vector<8x128xf32>
    %286 = vector.shape_cast %285 : vector<8x128xf32> to vector<8x1x128xf32>
    %287 = vector.broadcast %286 : vector<8x1x128xf32> to vector<8x8x128xf32>
    %288 = vector.broadcast %261 : vector<1x8x128xf32> to vector<8x8x128xf32>
    %289 = arith.addf %287, %288 : vector<8x8x128xf32>
    %cst_76 = arith.constant dense<0xFF800000> : vector<8x8xf32>
    %290 = vector.multi_reduction <maximumf>, %289, %cst_76 [2] : vector<8x8x128xf32> to vector<8x8xf32>
    %291 = vector.shape_cast %290 : vector<8x8xf32> to vector<8x8x1xf32>
    %292 = vector.broadcast %291 : vector<8x8x1xf32> to vector<8x8x128xf32>
    %293 = arith.subf %289, %292 : vector<8x8x128xf32>
    %294 = math.exp %293 : vector<8x8x128xf32>
    %cst_77 = arith.constant dense<0.000000e+00> : vector<8x8xf32>
    %295 = vector.multi_reduction <add>, %294, %cst_77 [2] : vector<8x8x128xf32> to vector<8x8xf32>
    %296 = math.log %295 : vector<8x8xf32>
    %297 = arith.addf %290, %296 : vector<8x8xf32>
    %298 = tpu.concatenate %297, %262 in 1 : vector<8x8xf32>, vector<8x120xf32> -> vector<8x128xf32>
    %c16_78 = arith.constant 16 : index
    %c0_79 = arith.constant 0 : index
    %299 = vector.load %arg11[%c16_78, %c0_79] : memref<64x128xf32, #tpu.memory_space<vmem>>, vector<8x128xf32>
    %300 = arith.addf %298, %299 : vector<8x128xf32>
    %c16_80 = arith.constant 16 : index
    %c0_81 = arith.constant 0 : index
    %301 = vector.load %arg10[%c16_80, %c0_81] : memref<64x128xf32, #tpu.memory_space<vmem>>, vector<8x128xf32>
    %cst_82 = arith.constant 0.000000e+00 : f32
    %302 = vector.broadcast %cst_82 : f32 to vector<8x128xf32>
    %303 = arith.cmpf ogt, %301, %302 : vector<8x128xf32>
    %304 = arith.select %303, %300, %285 : vector<8x128xi1>, vector<8x128xf32>
    %305 = vector.shape_cast %304 : vector<8x128xf32> to vector<8x1x128xf32>
    %306 = vector.broadcast %305 : vector<8x1x128xf32> to vector<8x8x128xf32>
    %307 = vector.broadcast %261 : vector<1x8x128xf32> to vector<8x8x128xf32>
    %308 = arith.addf %306, %307 : vector<8x8x128xf32>
    %cst_83 = arith.constant dense<0xFF800000> : vector<8x8xf32>
    %309 = vector.multi_reduction <maximumf>, %308, %cst_83 [2] : vector<8x8x128xf32> to vector<8x8xf32>
    %310 = vector.shape_cast %309 : vector<8x8xf32> to vector<8x8x1xf32>
    %311 = vector.broadcast %310 : vector<8x8x1xf32> to vector<8x8x128xf32>
    %312 = arith.subf %308, %311 : vector<8x8x128xf32>
    %313 = math.exp %312 : vector<8x8x128xf32>
    %cst_84 = arith.constant dense<0.000000e+00> : vector<8x8xf32>
    %314 = vector.multi_reduction <add>, %313, %cst_84 [2] : vector<8x8x128xf32> to vector<8x8xf32>
    %315 = math.log %314 : vector<8x8xf32>
    %316 = arith.addf %309, %315 : vector<8x8xf32>
    %317 = tpu.concatenate %316, %262 in 1 : vector<8x8xf32>, vector<8x120xf32> -> vector<8x128xf32>
    %c24_85 = arith.constant 24 : index
    %c0_86 = arith.constant 0 : index
    %318 = vector.load %arg11[%c24_85, %c0_86] : memref<64x128xf32, #tpu.memory_space<vmem>>, vector<8x128xf32>
    %319 = arith.addf %317, %318 : vector<8x128xf32>
    %c24_87 = arith.constant 24 : index
    %c0_88 = arith.constant 0 : index
    %320 = vector.load %arg10[%c24_87, %c0_88] : memref<64x128xf32, #tpu.memory_space<vmem>>, vector<8x128xf32>
    %cst_89 = arith.constant 0.000000e+00 : f32
    %321 = vector.broadcast %cst_89 : f32 to vector<8x128xf32>
    %322 = arith.cmpf ogt, %320, %321 : vector<8x128xf32>
    %323 = arith.select %322, %319, %304 : vector<8x128xi1>, vector<8x128xf32>
    %324 = vector.shape_cast %323 : vector<8x128xf32> to vector<8x1x128xf32>
    %325 = vector.broadcast %324 : vector<8x1x128xf32> to vector<8x8x128xf32>
    %326 = vector.broadcast %261 : vector<1x8x128xf32> to vector<8x8x128xf32>
    %327 = arith.addf %325, %326 : vector<8x8x128xf32>
    %cst_90 = arith.constant dense<0xFF800000> : vector<8x8xf32>
    %328 = vector.multi_reduction <maximumf>, %327, %cst_90 [2] : vector<8x8x128xf32> to vector<8x8xf32>
    %329 = vector.shape_cast %328 : vector<8x8xf32> to vector<8x8x1xf32>
    %330 = vector.broadcast %329 : vector<8x8x1xf32> to vector<8x8x128xf32>
    %331 = arith.subf %327, %330 : vector<8x8x128xf32>
    %332 = math.exp %331 : vector<8x8x128xf32>
    %cst_91 = arith.constant dense<0.000000e+00> : vector<8x8xf32>
    %333 = vector.multi_reduction <add>, %332, %cst_91 [2] : vector<8x8x128xf32> to vector<8x8xf32>
    %334 = math.log %333 : vector<8x8xf32>
    %335 = arith.addf %328, %334 : vector<8x8xf32>
    %336 = tpu.concatenate %335, %262 in 1 : vector<8x8xf32>, vector<8x120xf32> -> vector<8x128xf32>
    %c32_92 = arith.constant 32 : index
    %c0_93 = arith.constant 0 : index
    %337 = vector.load %arg11[%c32_92, %c0_93] : memref<64x128xf32, #tpu.memory_space<vmem>>, vector<8x128xf32>
    %338 = arith.addf %336, %337 : vector<8x128xf32>
    %c32_94 = arith.constant 32 : index
    %c0_95 = arith.constant 0 : index
    %339 = vector.load %arg10[%c32_94, %c0_95] : memref<64x128xf32, #tpu.memory_space<vmem>>, vector<8x128xf32>
    %cst_96 = arith.constant 0.000000e+00 : f32
    %340 = vector.broadcast %cst_96 : f32 to vector<8x128xf32>
    %341 = arith.cmpf ogt, %339, %340 : vector<8x128xf32>
    %342 = arith.select %341, %338, %323 : vector<8x128xi1>, vector<8x128xf32>
    %343 = vector.shape_cast %342 : vector<8x128xf32> to vector<8x1x128xf32>
    %344 = vector.broadcast %343 : vector<8x1x128xf32> to vector<8x8x128xf32>
    %345 = vector.broadcast %261 : vector<1x8x128xf32> to vector<8x8x128xf32>
    %346 = arith.addf %344, %345 : vector<8x8x128xf32>
    %cst_97 = arith.constant dense<0xFF800000> : vector<8x8xf32>
    %347 = vector.multi_reduction <maximumf>, %346, %cst_97 [2] : vector<8x8x128xf32> to vector<8x8xf32>
    %348 = vector.shape_cast %347 : vector<8x8xf32> to vector<8x8x1xf32>
    %349 = vector.broadcast %348 : vector<8x8x1xf32> to vector<8x8x128xf32>
    %350 = arith.subf %346, %349 : vector<8x8x128xf32>
    %351 = math.exp %350 : vector<8x8x128xf32>
    %cst_98 = arith.constant dense<0.000000e+00> : vector<8x8xf32>
    %352 = vector.multi_reduction <add>, %351, %cst_98 [2] : vector<8x8x128xf32> to vector<8x8xf32>
    %353 = math.log %352 : vector<8x8xf32>
    %354 = arith.addf %347, %353 : vector<8x8xf32>
    %355 = tpu.concatenate %354, %262 in 1 : vector<8x8xf32>, vector<8x120xf32> -> vector<8x128xf32>
    %c40_99 = arith.constant 40 : index
    %c0_100 = arith.constant 0 : index
    %356 = vector.load %arg11[%c40_99, %c0_100] : memref<64x128xf32, #tpu.memory_space<vmem>>, vector<8x128xf32>
    %357 = arith.addf %355, %356 : vector<8x128xf32>
    %c40_101 = arith.constant 40 : index
    %c0_102 = arith.constant 0 : index
    %358 = vector.load %arg10[%c40_101, %c0_102] : memref<64x128xf32, #tpu.memory_space<vmem>>, vector<8x128xf32>
    %cst_103 = arith.constant 0.000000e+00 : f32
    %359 = vector.broadcast %cst_103 : f32 to vector<8x128xf32>
    %360 = arith.cmpf ogt, %358, %359 : vector<8x128xf32>
    %361 = arith.select %360, %357, %342 : vector<8x128xi1>, vector<8x128xf32>
    %362 = vector.shape_cast %361 : vector<8x128xf32> to vector<8x1x128xf32>
    %363 = vector.broadcast %362 : vector<8x1x128xf32> to vector<8x8x128xf32>
    %364 = vector.broadcast %261 : vector<1x8x128xf32> to vector<8x8x128xf32>
    %365 = arith.addf %363, %364 : vector<8x8x128xf32>
    %cst_104 = arith.constant dense<0xFF800000> : vector<8x8xf32>
    %366 = vector.multi_reduction <maximumf>, %365, %cst_104 [2] : vector<8x8x128xf32> to vector<8x8xf32>
    %367 = vector.shape_cast %366 : vector<8x8xf32> to vector<8x8x1xf32>
    %368 = vector.broadcast %367 : vector<8x8x1xf32> to vector<8x8x128xf32>
    %369 = arith.subf %365, %368 : vector<8x8x128xf32>
    %370 = math.exp %369 : vector<8x8x128xf32>
    %cst_105 = arith.constant dense<0.000000e+00> : vector<8x8xf32>
    %371 = vector.multi_reduction <add>, %370, %cst_105 [2] : vector<8x8x128xf32> to vector<8x8xf32>
    %372 = math.log %371 : vector<8x8xf32>
    %373 = arith.addf %366, %372 : vector<8x8xf32>
    %374 = tpu.concatenate %373, %262 in 1 : vector<8x8xf32>, vector<8x120xf32> -> vector<8x128xf32>
    %c48_106 = arith.constant 48 : index
    %c0_107 = arith.constant 0 : index
    %375 = vector.load %arg11[%c48_106, %c0_107] : memref<64x128xf32, #tpu.memory_space<vmem>>, vector<8x128xf32>
    %376 = arith.addf %374, %375 : vector<8x128xf32>
    %c48_108 = arith.constant 48 : index
    %c0_109 = arith.constant 0 : index
    %377 = vector.load %arg10[%c48_108, %c0_109] : memref<64x128xf32, #tpu.memory_space<vmem>>, vector<8x128xf32>
    %cst_110 = arith.constant 0.000000e+00 : f32
    %378 = vector.broadcast %cst_110 : f32 to vector<8x128xf32>
    %379 = arith.cmpf ogt, %377, %378 : vector<8x128xf32>
    %380 = arith.select %379, %376, %361 : vector<8x128xi1>, vector<8x128xf32>
    %381 = vector.shape_cast %380 : vector<8x128xf32> to vector<8x1x128xf32>
    %382 = vector.broadcast %381 : vector<8x1x128xf32> to vector<8x8x128xf32>
    %383 = vector.broadcast %261 : vector<1x8x128xf32> to vector<8x8x128xf32>
    %384 = arith.addf %382, %383 : vector<8x8x128xf32>
    %cst_111 = arith.constant dense<0xFF800000> : vector<8x8xf32>
    %385 = vector.multi_reduction <maximumf>, %384, %cst_111 [2] : vector<8x8x128xf32> to vector<8x8xf32>
    %386 = vector.shape_cast %385 : vector<8x8xf32> to vector<8x8x1xf32>
    %387 = vector.broadcast %386 : vector<8x8x1xf32> to vector<8x8x128xf32>
    %388 = arith.subf %384, %387 : vector<8x8x128xf32>
    %389 = math.exp %388 : vector<8x8x128xf32>
    %cst_112 = arith.constant dense<0.000000e+00> : vector<8x8xf32>
    %390 = vector.multi_reduction <add>, %389, %cst_112 [2] : vector<8x8x128xf32> to vector<8x8xf32>
    %391 = math.log %390 : vector<8x8xf32>
    %392 = arith.addf %385, %391 : vector<8x8xf32>
    %393 = tpu.concatenate %392, %262 in 1 : vector<8x8xf32>, vector<8x120xf32> -> vector<8x128xf32>
    %c56_113 = arith.constant 56 : index
    %c0_114 = arith.constant 0 : index
    %394 = vector.load %arg11[%c56_113, %c0_114] : memref<64x128xf32, #tpu.memory_space<vmem>>, vector<8x128xf32>
    %395 = arith.addf %393, %394 : vector<8x128xf32>
    %c56_115 = arith.constant 56 : index
    %c0_116 = arith.constant 0 : index
    %396 = vector.load %arg10[%c56_115, %c0_116] : memref<64x128xf32, #tpu.memory_space<vmem>>, vector<8x128xf32>
    %cst_117 = arith.constant 0.000000e+00 : f32
    %397 = vector.broadcast %cst_117 : f32 to vector<8x128xf32>
    %398 = arith.cmpf ogt, %396, %397 : vector<8x128xf32>
    %399 = arith.select %398, %395, %380 : vector<8x128xi1>, vector<8x128xf32>
    %c0_118 = arith.constant 0 : index
    %c0_119 = arith.constant 0 : index
    %400 = vector.load %arg9[%c0_118, %c0_119] : memref<1x128xf32, #tpu.memory_space<vmem>>, vector<1x128xf32>
    %401 = vector.broadcast %400 : vector<1x128xf32> to vector<8x128xf32>
    %402 = arith.addf %399, %401 : vector<8x128xf32>
    %cst_120 = arith.constant dense<0xFF800000> : vector<8xf32>
    %403 = vector.multi_reduction <maximumf>, %402, %cst_120 [1] : vector<8x128xf32> to vector<8xf32>
    %404 = vector.shape_cast %403 : vector<8xf32> to vector<8x1xf32>
    %405 = vector.broadcast %404 : vector<8x1xf32> to vector<8x128xf32>
    %406 = arith.subf %402, %405 : vector<8x128xf32>
    %407 = math.exp %406 : vector<8x128xf32>
    %cst_121 = arith.constant dense<0.000000e+00> : vector<8xf32>
    %408 = vector.multi_reduction <add>, %407, %cst_121 [1] : vector<8x128xf32> to vector<8xf32>
    %409 = vector.shape_cast %408 : vector<8xf32> to vector<8x1xf32>
    %410 = math.log %409 : vector<8x1xf32>
    %411 = arith.addf %404, %410 : vector<8x1xf32>
    %412 = vector.shape_cast %411 : vector<8x1xf32> to vector<8x1xf32>
    %413 = vector.broadcast %412 : vector<8x1xf32> to vector<8x128xf32>
    %c0_122 = arith.constant 0 : index
    %c0_123 = arith.constant 0 : index
    %414 = vector.load %arg12[%c0_122, %c0_123] : memref<8x128xf32, #tpu.memory_space<vmem>>, vector<8x128xf32>
    tpu.vector_store %arg12[%c0_122, %c0_123], %413 {strides = array<i32>} : memref<8x128xf32, #tpu.memory_space<vmem>>, vector<8x128xf32>,
    return
  }
  func.func @transform_0(%arg0: i32) -> (i32, i32) {
    %c0_i32 = arith.constant 0 : i32
    %c0_i32_0 = arith.constant 0 : i32
    %c0_i32_1 = arith.constant 0 : i32
    return %c0_i32, %c0_i32_0 : i32, i32
  }
  func.func @transform_1(%arg0: i32) -> (i32, i32) {
    %c0_i32 = arith.constant 0 : i32
    %c0_i32_0 = arith.constant 0 : i32
    %c0_i32_1 = arith.constant 0 : i32
    return %c0_i32, %c0_i32_0 : i32, i32
  }
  func.func @transform_2(%arg0: i32) -> (i32, i32) {
    %c0_i32 = arith.constant 0 : i32
    %c0_i32_0 = arith.constant 0 : i32
    %c0_i32_1 = arith.constant 0 : i32
    return %c0_i32, %c0_i32_0 : i32, i32
  }
  func.func @transform_3(%arg0: i32) -> (i32, i32) {
    %c0_i32 = arith.constant 0 : i32
    %c0_i32_0 = arith.constant 0 : i32
    %c0_i32_1 = arith.constant 0 : i32
    return %c0_i32, %c0_i32_0 : i32, i32
  }
  func.func @transform_4(%arg0: i32) -> (i32, i32) {
    %c0_i32 = arith.constant 0 : i32
    %c0_i32_0 = arith.constant 0 : i32
    %c0_i32_1 = arith.constant 0 : i32
    return %c0_i32, %c0_i32_0 : i32, i32
  }
  func.func @transform_5(%arg0: i32) -> (i32, i32) {
    %c0_i32 = arith.constant 0 : i32
    %c0_i32_0 = arith.constant 0 : i32
    %c0_i32_1 = arith.constant 0 : i32
    return %c0_i32, %c0_i32_0 : i32, i32
  }
  func.func @transform_6(%arg0: i32) -> (i32, i32) {
    %c0_i32 = arith.constant 0 : i32
    %c0_i32_0 = arith.constant 0 : i32
    %c0_i32_1 = arith.constant 0 : i32
    return %c0_i32, %c0_i32_0 : i32, i32
  }
  func.func @transform_7(%arg0: i32) -> (i32, i32) {
    %c0_i32 = arith.constant 0 : i32
    %c0_i32_0 = arith.constant 0 : i32
    %c0_i32_1 = arith.constant 0 : i32
    return %c0_i32, %c0_i32_0 : i32, i32
  }
  func.func @transform_8(%arg0: i32) -> (i32, i32) {
    %c0_i32 = arith.constant 0 : i32
    %c0_i32_0 = arith.constant 0 : i32
    %c0_i32_1 = arith.constant 0 : i32
    return %c0_i32, %c0_i32_0 : i32, i32
  }
  func.func @transform_9(%arg0: i32) -> (i32, i32) {
    %c0_i32 = arith.constant 0 : i32
    %c0_i32_0 = arith.constant 0 : i32
    %c0_i32_1 = arith.constant 0 : i32
    return %c0_i32, %c0_i32_0 : i32, i32
  }
  func.func @transform_10(%arg0: i32) -> (i32, i32) {
    %c0_i32 = arith.constant 0 : i32
    %c0_i32_0 = arith.constant 0 : i32
    %c0_i32_1 = arith.constant 0 : i32
    return %c0_i32, %c0_i32_0 : i32, i32
  }
  func.func @transform_11(%arg0: i32) -> (i32, i32) {
    %c0_i32 = arith.constant 0 : i32
    %c0_i32_0 = arith.constant 0 : i32
    %c0_i32_1 = arith.constant 0 : i32
    return %c0_i32, %c0_i32_0 : i32, i32
  }
}

</mosaic_0001>

<llo_original>
// kernel: tpu_custom_call.1
$region0: #{tpu_custom_call.1}
  #allocation0 [shape = 'u32[]', space=smem, size = 0x4, offset = 0x4, fixed_abs, tag = 'smem constant byte address 0x4 - core index']
  #allocation1 [shape = 'u32[144,128]{1,0:T(1,128)}', space=vmem, size = 0x12000, scoped, tag = 'internal scratch']
  #allocation2 [shape = 'f32[64,64]{1,0:T(8,128)}', space=vmem, size = 0x8000, scoped, tag = 'scratch operand']
  %s0 = inlined_call_operand.vmem [shape: bf16[64,32], index: 0, kind: input, shape index: {}]
  %s1 = inlined_call_operand.hbm [shape: bf16[32,256], index: 1, kind: input, shape index: {}]
  %s2 = inlined_call_operand.vmem [shape: f32[1,256], index: 2, kind: input, shape index: {}]
  %s3 = inlined_call_operand.hbm [shape: bf16[64,256], index: 3, kind: input, shape index: {}]
  %s4 = inlined_call_operand.hbm [shape: bf16[64,128], index: 4, kind: input, shape index: {}]
  %s5 = inlined_call_operand.vmem [shape: f32[1,128], index: 5, kind: input, shape index: {}]
  %s6 = inlined_call_operand.vmem [shape: f32[8,128], index: 6, kind: input, shape index: {}]
  %s7 = inlined_call_operand.vmem [shape: f32[1,128], index: 7, kind: input, shape index: {}]
  %s8 = inlined_call_operand.vmem [shape: f32[1,128], index: 8, kind: input, shape index: {}]
  %s9 = inlined_call_operand.vmem [shape: f32[64,128], index: 9, kind: input, shape index: {}]
  %s10 = inlined_call_operand.hbm [shape: f32[64,128], index: 10, kind: output, shape index: {0}]
  %s11 = inlined_call_operand.hbm [shape: f32[8,128], index: 11, kind: output, shape index: {1}]
  %12 = xla_tuple %s10, %s11
  %s13 = sld [smem:[#allocation0]]
  $region70: #{tpu_custom_call.1} parent=0
    _
  %s15 = ssub.s32 1, %s13
  %s16 = scalar_select 0, %s15, %s13
  $region1: #{tpu_custom_call.1} parent=0
    #allocation3 [shape = 'u8[16384]{0}', space=vmem, size = 0x4000, scoped, tag = 'input window, operand 1, single buffered']
    #allocation4 [shape = 's32[1]{0}', space=sflag, size = 0x4, scoped, tag = 'scoped memory for tpu_custom_call.1']
    #allocation5 [shape = 's32[1]{0}', space=sflag, size = 0x4, scoped, tag = 'scoped memory for tpu_custom_call.1']
    #allocation6 [shape = 'u8[32768]{0}', space=vmem, size = 0x8000, scoped, tag = 'input window, operand 3, single buffered']
    #allocation7 [shape = 's32[1]{0}', space=sflag, size = 0x4, scoped, tag = 'scoped memory for tpu_custom_call.1']
    #allocation8 [shape = 'u8[16384]{0}', space=vmem, size = 0x4000, scoped, tag = 'input window, operand 4, single buffered']
    #allocation9 [shape = 'u8[32768]{0}', space=vmem, size = 0x8000, scoped, tag = 'output window, operand 0, single buffered']
    #allocation10 [shape = 'u8[4096]{0}', space=vmem, size = 0x1000, scoped, tag = 'output window, operand 1, single buffered']
    #allocation11 [shape = 's32[1]{0}', space=sflag, size = 0x4, scoped, tag = 'scoped memory for tpu_custom_call.1']
    %17 = vsyncpa [#allocation4], 0
    %18 = vsyncpa [#allocation7], 0
    %19 = vsyncpa [#allocation5], 0
    %20 = vsyncpa [#allocation11], 0
    // Predicated region
    $region2: #{tpu_custom_call.1} parent=1 // pred_check
      _
    $region3: #{tpu_custom_call.1} parent=1 // pred_check_branch
      %22 = sbr.rel (0) target = $region5
    $region4: #{tpu_custom_call.1} parent=1 // pred_region
      _
    $region5: #{tpu_custom_call.1} parent=1 // pred_fallthru
      _
    // Predicated region
    $region6: #{tpu_custom_call.1} parent=1 // pred_check
      _
    $region7: #{tpu_custom_call.1} parent=1 // pred_check_branch
      %24 = sbr.rel (0) target = $region9
    $region8: #{tpu_custom_call.1} parent=1 // pred_region
      %s26 = ssub.s32 512, 512
      %27 = vsyncadd [#allocation4], %s26
      %s28 = sshll.u32 [#allocation3], 4
      %s29 = int_to_ptr.vmem [resolvable:$true] %s28
      %34 = dma.hbm_to_vmem [thread:$0]  %s1, 512, %s29, [#allocation4], 128, 128, 8
    $region9: #{tpu_custom_call.1} parent=1 // pred_fallthru
      _
    // Predicated region
    $region10: #{tpu_custom_call.1} parent=1 // pred_check
      _
    $region11: #{tpu_custom_call.1} parent=1 // pred_check_branch
      %36 = sbr.rel (0) target = $region13
    $region12: #{tpu_custom_call.1} parent=1 // pred_region
      _
    $region13: #{tpu_custom_call.1} parent=1 // pred_fallthru
      _
    // Predicated region
    $region14: #{tpu_custom_call.1} parent=1 // pred_check
      _
    $region15: #{tpu_custom_call.1} parent=1 // pred_check_branch
      %38 = sbr.rel (0) target = $region17
    $region16: #{tpu_custom_call.1} parent=1 // pred_region
      %s40 = ssub.s32 1024, 1024
      %41 = vsyncadd [#allocation7], %s40
      %s42 = sshll.u32 [#allocation6], 4
      %s43 = int_to_ptr.vmem [resolvable:$true] %s42
      %48 = dma.hbm_to_vmem [thread:$0]  %s3, 1024, %s43, [#allocation7], 128, 128, 8
    $region17: #{tpu_custom_call.1} parent=1 // pred_fallthru
      _
    // Predicated region
    $region18: #{tpu_custom_call.1} parent=1 // pred_check
      _
    $region19: #{tpu_custom_call.1} parent=1 // pred_check_branch
      %50 = sbr.rel (0) target = $region21
    $region20: #{tpu_custom_call.1} parent=1 // pred_region
      %s52 = ssub.s32 512, 512
      %53 = vsyncadd [#allocation7], %s52
      %s54 = sshll.u32 [#allocation8], 4
      %s55 = int_to_ptr.vmem [resolvable:$true] %s54
      %60 = dma.hbm_to_vmem [thread:$0]  %s4, 512, %s55, [#allocation7], 64, 64, 4
    $region21: #{tpu_custom_call.1} parent=1 // pred_fallthru
      _
    // Predicated region
    $region22: #{tpu_custom_call.1} parent=1 // pred_check
      _
    $region23: #{tpu_custom_call.1} parent=1 // pred_check_branch
      %62 = sbr.rel (0) target = $region25
    $region24: #{tpu_custom_call.1} parent=1 // pred_region
      _
    $region25: #{tpu_custom_call.1} parent=1 // pred_fallthru
      _
    // Predicated region
    $region26: #{tpu_custom_call.1} parent=1 // pred_check
      _
    $region27: #{tpu_custom_call.1} parent=1 // pred_check_branch
      %64 = sbr.rel (0) target = $region29
    $region28: #{tpu_custom_call.1} parent=1 // pred_region
      _
    $region29: #{tpu_custom_call.1} parent=1 // pred_fallthru
      _
    // Predicated region
    $region30: #{tpu_custom_call.1} parent=1 // pred_check
      _
    $region31: #{tpu_custom_call.1} parent=1 // pred_check_branch
      %66 = sbr.rel (0) target = $region33
    $region32: #{tpu_custom_call.1} parent=1 // pred_region
      _
    $region33: #{tpu_custom_call.1} parent=1 // pred_fallthru
      _
    // Predicated region
    $region34: #{tpu_custom_call.1} parent=1 // pred_check
      _
    $region35: #{tpu_custom_call.1} parent=1 // pred_check_branch
      %68 = sbr.rel (0) target = $region37
    $region36: #{tpu_custom_call.1} parent=1 // pred_region
      _
    $region37: #{tpu_custom_call.1} parent=1 // pred_fallthru
      _
    // Predicated region
    $region38: #{tpu_custom_call.1} parent=1 // pred_check
      _
    $region39: #{tpu_custom_call.1} parent=1 // pred_check_branch
      %70 = sbr.rel (0) target = $region41
    $region40: #{tpu_custom_call.1} parent=1 // pred_region
      _
    $region41: #{tpu_custom_call.1} parent=1 // pred_fallthru
      _
    // Predicated region
    $region42: #{tpu_custom_call.1} parent=1 // pred_check
      _
    $region43: #{tpu_custom_call.1} parent=1 // pred_check_branch
      %72 = sbr.rel (0) target = $region45
    $region44: #{tpu_custom_call.1} parent=1 // pred_region
      %73 = dma.done [#allocation4], 512
    $region45: #{tpu_custom_call.1} parent=1 // pred_fallthru
      _
    // Predicated region
    $region46: #{tpu_custom_call.1} parent=1 // pred_check
      _
    $region47: #{tpu_custom_call.1} parent=1 // pred_check_branch
      %75 = sbr.rel (0) target = $region49
    $region48: #{tpu_custom_call.1} parent=1 // pred_region
      %76 = dma.done [#allocation7], 1024
    $region49: #{tpu_custom_call.1} parent=1 // pred_fallthru
      _
    // Predicated region
    $region50: #{tpu_custom_call.1} parent=1 // pred_check
      _
    $region51: #{tpu_custom_call.1} parent=1 // pred_check_branch
      %78 = sbr.rel (0) target = $region53
    $region52: #{tpu_custom_call.1} parent=1 // pred_region
      %79 = dma.done [#allocation7], 512
    $region53: #{tpu_custom_call.1} parent=1 // pred_fallthru
      _
    %v81 = vld [vmem:[%s0] sm:$0xf]
    %v82 = vld [vmem:[%s0 + $0x4] sm:$0xf]
    %v83 = vld [vmem:[%s0 + $0x8] sm:$0xf]
    %v84 = vld [vmem:[%s0 + $0xc] sm:$0xf]
    %v85 = vld [vmem:[%s0 + $0x10] sm:$0xf]
    %v86 = vld [vmem:[%s0 + $0x14] sm:$0xf]
    %v87 = vld [vmem:[%s0 + $0x18] sm:$0xf]
    %v88 = vld [vmem:[%s0 + $0x1c] sm:$0xf]
    %v89 = vld [vmem:[#allocation3] sm:$0xff]
    %v90 = vld [vmem:[#allocation3 + $0x8] sm:$0xff]
    %v91 = vld [vmem:[#allocation3 + $0x10] sm:$0xff]
    %v92 = vld [vmem:[#allocation3 + $0x18] sm:$0xff]
    %v93 = vld [vmem:[%s2] sm:$0x3]
    %v95 = vlaneseq
    %v96 = vshrl.u32 %v95, 7
    %v97 = vsub.s32 0, %v96
    %v98 = vrot.slane %v93, %v97
    %v99 = vlaneseq
    %v100 = vshrl.u32 %v99, 7
    %v101 = vsub.s32 1, %v100
    %v102 = vrot.slane %v93, %v101
    %v113 = vunpack.c.l.b16 %v81
    %v114 = vunpack.c.l.b16 %v82
    %v115 = vunpack.c.l.b16 %v83
    %v116 = vunpack.c.l.b16 %v84
    %v117 = vunpack.c.l.b16 %v85
    %v118 = vunpack.c.l.b16 %v86
    %v119 = vunpack.c.l.b16 %v87
    %v120 = vunpack.c.l.b16 %v88
    %v121 = vpack.c.b16 %v114, %v113
    %v122 = vpack.c.b16 %v116, %v115
    %v123 = vpack.c.b16 %v118, %v117
    %v124 = vpack.c.b16 %v120, %v119
    %v129 = vunpack.c.l.b16 %v89
    %v130 = vunpack.c.h.b16 %v89
    %v131 = vunpack.c.l.b16 %v90
    %v132 = vunpack.c.h.b16 %v90
    %v133 = vunpack.c.l.b16 %v91
    %v134 = vunpack.c.h.b16 %v91
    %v135 = vunpack.c.l.b16 %v92
    %v136 = vunpack.c.h.b16 %v92
    %v137 = vpack.c.b16 %v131, %v129
    %v138 = vpack.c.b16 %v132, %v130
    %v139 = vpack.c.b16 %v135, %v133
    %v140 = vpack.c.b16 %v136, %v134
    %vm145 = vcmask 261120
    %v147 = vsel %vm145, %v121, 0
    %v150 = vsel %vm145, %v122, 0
    %v153 = vsel %vm145, %v123, 0
    %v156 = vsel %vm145, %v124, 0
    %158 = vmatprep.subr.bf16.mxu0 %v138
    %159 = vmatpush1.bf16.msra.mxu0 %v137
    %160 = vmatprep.subr.bf16.mxu0 %v140
    %161 = vmatpush1.bf16.msra.mxu0 %v139
    %162 = vmatprep.subr.bf16.mxu0 0
    %163 = vmatpush1.bf16.msra.mxu0 0
    %164 = vmatprep.subr.bf16.mxu0 0
    %165 = vmatpush1.bf16.msra.mxu0 0
    %166 = vmatprep.subr.bf16.mxu0 0
    %167 = vmatpush1.bf16.msra.mxu0 0
    %168 = vmatprep.subr.bf16.mxu0 0
    %169 = vmatpush1.bf16.msra.mxu0 0
    %170 = vmatprep.subr.bf16.mxu0 0
    %171 = vmatpush1.bf16.msra.mxu0 0
    %172 = vmatprep.subr.bf16.mxu0 0
    %173 = vmatpush1.bf16.msra.mxu0 0
    %174 = vmatprep.subr.bf16.mxu0 0
    %175 = vmatpush1.bf16.msra.mxu0 0
    %176 = vmatprep.subr.bf16.mxu0 0
    %177 = vmatpush1.bf16.msra.mxu0 0
    %178 = vmatprep.subr.bf16.mxu0 0
    %179 = vmatpush1.bf16.msra.mxu0 0
    %180 = vmatprep.subr.bf16.mxu0 0
    %181 = vmatpush1.bf16.msra.mxu0 0
    %182 = vmatprep.subr.bf16.mxu0 0
    %183 = vmatpush1.bf16.msra.mxu0 0
    %184 = vmatprep.subr.bf16.mxu0 0
    %185 = vmatpush1.bf16.msra.mxu0 0
    %186 = vmatprep.subr.bf16.mxu0 0
    %187 = vmatpush1.bf16.msra.mxu0 0
    %188 = vmatprep.subr.bf16.mxu0 0
    %189 = vmatpush1.bf16.msra.mxu0 0
    %190 = vmatprep.mubr.bf16.mxu0 0
    %191 = vmatmul.mubr.bf16.gmra.mrb[0].mxu0 %v147
    %v192 = vpop.f32.mrb[0].mxu0
    %v193 = vadd.f32 %v98, %v192
    %v194 = vpop.f32.mrb[0].mxu0
    %v195 = vadd.f32 %v102, %v194
    %v196 = vpop.f32.mrb[0].mxu0
    %v197 = vadd.f32 %v98, %v196
    %v198 = vpop.f32.mrb[0].mxu0
    %v199 = vadd.f32 %v102, %v198
    %200 = vmatprep.mubr.bf16.mxu0 0
    %201 = vmatmul.mubr.bf16.gmra.mrb[0].mxu0 %v150
    %v202 = vpop.f32.mrb[0].mxu0
    %v203 = vadd.f32 %v98, %v202
    %v204 = vpop.f32.mrb[0].mxu0
    %v205 = vadd.f32 %v102, %v204
    %v206 = vpop.f32.mrb[0].mxu0
    %v207 = vadd.f32 %v98, %v206
    %v208 = vpop.f32.mrb[0].mxu0
    %v209 = vadd.f32 %v102, %v208
    %210 = vmatprep.mubr.bf16.mxu0 0
    %211 = vmatmul.mubr.bf16.gmra.mrb[0].mxu0 %v153
    %v212 = vpop.f32.mrb[0].mxu0
    %v213 = vadd.f32 %v98, %v212
    %v214 = vpop.f32.mrb[0].mxu0
    %v215 = vadd.f32 %v102, %v214
    %v216 = vpop.f32.mrb[0].mxu0
    %v217 = vadd.f32 %v98, %v216
    %v218 = vpop.f32.mrb[0].mxu0
    %v219 = vadd.f32 %v102, %v218
    %220 = vmatprep.mubr.bf16.mxu0 0
    %221 = vmatmul.mubr.bf16.gmra.mrb[0].mxu0 %v156
    %v222 = vpop.f32.mrb[0].mxu0
    %v223 = vadd.f32 %v98, %v222
    %v224 = vpop.f32.mrb[0].mxu0
    %v225 = vadd.f32 %v102, %v224
    %v226 = vpop.f32.mrb[0].mxu0
    %v227 = vadd.f32 %v98, %v226
    %v228 = vpop.f32.mrb[0].mxu0
    %v229 = vadd.f32 %v102, %v228
    %230 = vdwg.mxu0
    %v231 = vld [vmem:[#allocation6] sm:$0xff]
    %v232 = vld [vmem:[#allocation6 + $0x8] sm:$0xff]
    %v233 = vld [vmem:[#allocation6 + $0x10] sm:$0xff]
    %v234 = vld [vmem:[#allocation6 + $0x18] sm:$0xff]
    %v235 = vld [vmem:[#allocation6 + $0x20] sm:$0xff]
    %v236 = vld [vmem:[#allocation6 + $0x28] sm:$0xff]
    %v237 = vld [vmem:[#allocation6 + $0x30] sm:$0xff]
    %v238 = vld [vmem:[#allocation6 + $0x38] sm:$0xff]
    %v239 = vlaneseq
    %v240 = vand.u32 %v239, 127
    %v241 = vadd.s32 %v240, 128
    %vm242 = vcmp.lt.s32.totalorder %v240, 0
    %v243 = vsub.s32 0, %v240
    %v244 = vsel %vm242, %v243, %v240
    %v245 = vshrl.u32 %v244, 6
    %v246 = vand.u32 %v244, 63
    %v247 = vsub.s32 0, %v246
    %v248 = vsel %vm242, %v247, %v246
    %vm249 = vcmp.lt.s32.totalorder %v241, 0
    %v250 = vsub.s32 0, %v241
    %v251 = vsel %vm249, %v250, %v241
    %v252 = vshrl.u32 %v251, 6
    %v253 = vand.u32 %v251, 63
    %v254 = vsub.s32 0, %v253
    %v255 = vsel %vm249, %v254, %v253
    %vm256 = vcmp.ne.s32.totalorder %v248, 0
    %vm257 = vcmp.ne.s32.totalorder %v255, 0
    %vm258 = vcmp.lt.s32.totalorder %v248, 0
    %vm259 = vcmp.lt.s32.totalorder %v255, 0
    %vm260 = vmand %vm258, %vm256
    %vm261 = vmand %vm259, %vm257
    %v262 = vadd.s32 %v248, 64
    %v263 = vadd.s32 %v255, 64
    %v264 = vsel %vm260, %v262, %v248
    %v265 = vsel %vm261, %v263, %v255
    %vm266 = vcmp.lt.s32.totalorder %v264, 32
    %vm267 = vcmp.lt.s32.totalorder %v265, 32
    %v268 = vsel %vm266, 1, 0
    %v269 = vsel %vm267, 1, 0
    %vm270 = vcmp.eq.s32.totalorder %v268, 1
    %vm271 = vcmp.eq.s32.totalorder %v269, 1
    %v272 = vsel %vm270, %v193, %v227
    %v273 = vsel %vm271, %v195, %v229
    %v282 = vunpack.c.l.b16 %v231
    %v283 = vunpack.c.h.b16 %v231
    %v284 = vunpack.c.l.b16 %v232
    %v285 = vunpack.c.h.b16 %v232
    %v286 = vunpack.c.l.b16 %v233
    %v287 = vunpack.c.h.b16 %v233
    %v288 = vunpack.c.l.b16 %v234
    %v289 = vunpack.c.h.b16 %v234
    %v290 = vunpack.c.l.b16 %v235
    %v291 = vunpack.c.h.b16 %v235
    %v292 = vunpack.c.l.b16 %v236
    %v293 = vunpack.c.h.b16 %v236
    %v294 = vunpack.c.l.b16 %v237
    %v295 = vunpack.c.h.b16 %v237
    %v296 = vunpack.c.l.b16 %v238
    %v297 = vunpack.c.h.b16 %v238
    %v298 = vpack.c.b16 %v284, %v282
    %v299 = vpack.c.b16 %v285, %v283
    %v300 = vpack.c.b16 %v288, %v286
    %v301 = vpack.c.b16 %v289, %v287
    %v302 = vpack.c.b16 %v292, %v290
    %v303 = vpack.c.b16 %v293, %v291
    %v304 = vpack.c.b16 %v296, %v294
    %v305 = vpack.c.b16 %v297, %v295
    %vm314 = vcmask 523264
    %v316 = vsel %vm314, 0, 0
    %318 = vmatprep.subr.bf16.mxu0 %v299
    %319 = vmatpush1.bf16.msra.mxu0 %v298
    %320 = vmatprep.subr.bf16.mxu0 %v301
    %321 = vmatpush1.bf16.msra.mxu0 %v300
    %322 = vmatprep.subr.bf16.mxu0 %v303
    %323 = vmatpush1.bf16.msra.mxu0 %v302
    %324 = vmatprep.subr.bf16.mxu0 %v305
    %325 = vmatpush1.bf16.msra.mxu0 %v304
    %326 = vmatprep.subr.bf16.mxu0 0
    %327 = vmatpush1.bf16.msra.mxu0 0
    %328 = vmatprep.subr.bf16.mxu0 0
    %329 = vmatpush1.bf16.msra.mxu0 0
    %330 = vmatprep.subr.bf16.mxu0 0
    %331 = vmatpush1.bf16.msra.mxu0 0
    %332 = vmatprep.subr.bf16.mxu0 0
    %333 = vmatpush1.bf16.msra.mxu0 0
    %334 = vmatprep.subr.bf16.mxu0 0
    %335 = vmatpush1.bf16.msra.mxu0 0
    %336 = vmatprep.subr.bf16.mxu0 0
    %337 = vmatpush1.bf16.msra.mxu0 0
    %338 = vmatprep.subr.bf16.mxu0 0
    %339 = vmatpush1.bf16.msra.mxu0 0
    %340 = vmatprep.subr.bf16.mxu0 0
    %341 = vmatpush1.bf16.msra.mxu0 0
    %342 = vmatprep.subr.bf16.mxu0 0
    %343 = vmatpush1.bf16.msra.mxu0 0
    %344 = vmatprep.subr.bf16.mxu0 0
    %345 = vmatpush1.bf16.msra.mxu0 0
    %346 = vmatprep.subr.bf16.mxu0 0
    %347 = vmatpush1.bf16.msra.mxu0 0
    %348 = vmatprep.subr.bf16.mxu0 0
    %349 = vmatpush1.bf16.msra.mxu0 0
    %350 = vmatprep.mubr.bf16.mxu0 0
    %351 = vmatmul.mubr.bf16.gmra.mrb[0].mxu0 %v316
    %v352 = vpop.f32.mrb[0].mxu0
    %v353 = vadd.f32 0.0, %v352
    %v354 = vpop.f32.mrb[0].mxu0
    %v355 = vadd.f32 0.0, %v354
    %v356 = vpop.f32.mrb[0].mxu0
    %v357 = vpop.f32.mrb[0].mxu0
    %358 = vdwg.mxu0
    %v359 = vadd.f32 %v272, %v353
    %v360 = vadd.f32 %v273, %v355
    %v361 = vxor.u32 %v359, 2147483648
    %v362 = vxor.u32 %v360, 2147483648
    %v363 = vmul.f32 %v361, 1.442695
    %v364 = vpow.pop %v363
    %v365 = vmul.f32 %v362, 1.442695
    %v366 = vpow.pop %v365
    %v367 = vadd.f32 %v364, 1.0
    %v368 = vadd.f32 %v366, 1.0
    %v369 = vrcp.pop %v367
    %v370 = vmul.f32 1.0, %v369
    %v371 = vrcp.pop %v368
    %v372 = vmul.f32 1.0, %v371
    %v373 = vtanh.pop %v360
    %v374 = vmul.f32 %v370, 0.0
    %376 = vrot.lane.b32.xlu0 %v373, 64
    %v377 = vpop.permute.xlu0 %376
    %v379 = vmul.f32 %v370, %v377
    %381 = vrot.lane.b32.xlu0 %v379, 64
    %v382 = vpop.permute.xlu0 %381
    %v384 = vadd.f32 %v374, %v382
    %v385 = vtanh.pop %v384
    %387 = vrot.lane.b32.xlu0 %v385, 64
    %v388 = vpop.permute.xlu0 %387
    %v390 = vmul.f32 %v372, %v388
    %391 = vst.msk [vmem:[#allocation2] sm:$0xff] %vm145, %v390
    %vm392 = vcmask 523520
    %393 = vst.msk [vmem:[#allocation2 + $0x38] sm:$0xff] %vm392, %v390
    %v394 = vsel %vm270, %v197, %v223
    %v395 = vsel %vm271, %v199, %v225
    %v396 = vpack.c.bf16 %v390, %v390
    %v398 = vsel %vm314, %v396, 0
    %400 = vmatprep.subr.bf16.mxu0 %v299
    %401 = vmatpush1.bf16.msra.mxu0 %v298
    %402 = vmatprep.subr.bf16.mxu0 %v301
    %403 = vmatpush1.bf16.msra.mxu0 %v300
    %404 = vmatprep.subr.bf16.mxu0 %v303
    %405 = vmatpush1.bf16.msra.mxu0 %v302
    %406 = vmatprep.subr.bf16.mxu0 %v305
    %407 = vmatpush1.bf16.msra.mxu0 %v304
    %408 = vmatprep.subr.bf16.mxu0 0
    %409 = vmatpush1.bf16.msra.mxu0 0
    %410 = vmatprep.subr.bf16.mxu0 0
    %411 = vmatpush1.bf16.msra.mxu0 0
    %412 = vmatprep.subr.bf16.mxu0 0
    %413 = vmatpush1.bf16.msra.mxu0 0
    %414 = vmatprep.subr.bf16.mxu0 0
    %415 = vmatpush1.bf16.msra.mxu0 0
    %416 = vmatprep.subr.bf16.mxu0 0
    %417 = vmatpush1.bf16.msra.mxu0 0
    %418 = vmatprep.subr.bf16.mxu0 0
    %419 = vmatpush1.bf16.msra.mxu0 0
    %420 = vmatprep.subr.bf16.mxu0 0
    %421 = vmatpush1.bf16.msra.mxu0 0
    %422 = vmatprep.subr.bf16.mxu0 0
    %423 = vmatpush1.bf16.msra.mxu0 0
    %424 = vmatprep.subr.bf16.mxu0 0
    %425 = vmatpush1.bf16.msra.mxu0 0
    %426 = vmatprep.subr.bf16.mxu0 0
    %427 = vmatpush1.bf16.msra.mxu0 0
    %428 = vmatprep.subr.bf16.mxu0 0
    %429 = vmatpush1.bf16.msra.mxu0 0
    %430 = vmatprep.subr.bf16.mxu0 0
    %431 = vmatpush1.bf16.msra.mxu0 0
    %432 = vmatprep.mubr.bf16.mxu0 0
    %433 = vmatmul.mubr.bf16.gmra.mrb[0].mxu0 %v398
    %v434 = vpop.f32.mrb[0].mxu0
    %v435 = vadd.f32 0.0, %v434
    %v436 = vpop.f32.mrb[0].mxu0
    %v437 = vadd.f32 0.0, %v436
    %v438 = vpop.f32.mrb[0].mxu0
    %v439 = vpop.f32.mrb[0].mxu0
    %440 = vdwg.mxu0
    %v441 = vadd.f32 %v394, %v435
    %v442 = vadd.f32 %v395, %v437
    %v443 = vxor.u32 %v441, 2147483648
    %v444 = vxor.u32 %v442, 2147483648
    %v445 = vmul.f32 %v443, 1.442695
    %v446 = vpow.pop %v445
    %v447 = vmul.f32 %v444, 1.442695
    %v448 = vpow.pop %v447
    %v449 = vadd.f32 %v446, 1.0
    %v450 = vadd.f32 %v448, 1.0
    %v451 = vrcp.pop %v449
    %v452 = vmul.f32 1.0, %v451
    %v453 = vrcp.pop %v450
    %v454 = vmul.f32 1.0, %v453
    %v455 = vtanh.pop %v442
    %v456 = vmul.f32 %v452, %v384
    %458 = vrot.lane.b32.xlu0 %v455, 64
    %v459 = vpop.permute.xlu0 %458
    %v461 = vmul.f32 %v452, %v459
    %463 = vrot.lane.b32.xlu0 %v461, 64
    %v464 = vpop.permute.xlu0 %463
    %v466 = vadd.f32 %v456, %v464
    %v467 = vtanh.pop %v466
    %469 = vrot.lane.b32.xlu0 %v467, 64
    %v470 = vpop.permute.xlu0 %469
    %v472 = vmul.f32 %v454, %v470
    %473 = vst.msk [vmem:[#allocation2 + $0x8] sm:$0xff] %vm145, %v472
    %474 = vst.msk [vmem:[#allocation2 + $0x30] sm:$0xff] %vm392, %v472
    %v475 = vsel %vm270, %v203, %v217
    %v476 = vsel %vm271, %v205, %v219
    %v477 = vpack.c.bf16 %v472, %v472
    %v479 = vsel %vm314, %v477, 0
    %481 = vmatprep.subr.bf16.mxu0 %v299
    %482 = vmatpush1.bf16.msra.mxu0 %v298
    %483 = vmatprep.subr.bf16.mxu0 %v301
    %484 = vmatpush1.bf16.msra.mxu0 %v300
    %485 = vmatprep.subr.bf16.mxu0 %v303
    %486 = vmatpush1.bf16.msra.mxu0 %v302
    %487 = vmatprep.subr.bf16.mxu0 %v305
    %488 = vmatpush1.bf16.msra.mxu0 %v304
    %489 = vmatprep.subr.bf16.mxu0 0
    %490 = vmatpush1.bf16.msra.mxu0 0
    %491 = vmatprep.subr.bf16.mxu0 0
    %492 = vmatpush1.bf16.msra.mxu0 0
    %493 = vmatprep.subr.bf16.mxu0 0
    %494 = vmatpush1.bf16.msra.mxu0 0
    %495 = vmatprep.subr.bf16.mxu0 0
    %496 = vmatpush1.bf16.msra.mxu0 0
    %497 = vmatprep.subr.bf16.mxu0 0
    %498 = vmatpush1.bf16.msra.mxu0 0
    %499 = vmatprep.subr.bf16.mxu0 0
    %500 = vmatpush1.bf16.msra.mxu0 0
    %501 = vmatprep.subr.bf16.mxu0 0
    %502 = vmatpush1.bf16.msra.mxu0 0
    %503 = vmatprep.subr.bf16.mxu0 0
    %504 = vmatpush1.bf16.msra.mxu0 0
    %505 = vmatprep.subr.bf16.mxu0 0
    %506 = vmatpush1.bf16.msra.mxu0 0
    %507 = vmatprep.subr.bf16.mxu0 0
    %508 = vmatpush1.bf16.msra.mxu0 0
    %509 = vmatprep.subr.bf16.mxu0 0
    %510 = vmatpush1.bf16.msra.mxu0 0
    %511 = vmatprep.subr.bf16.mxu0 0
    %512 = vmatpush1.bf16.msra.mxu0 0
    %513 = vmatprep.mubr.bf16.mxu0 0
    %514 = vmatmul.mubr.bf16.gmra.mrb[0].mxu0 %v479
    %v515 = vpop.f32.mrb[0].mxu0
    %v516 = vadd.f32 0.0, %v515
    %v517 = vpop.f32.mrb[0].mxu0
    %v518 = vadd.f32 0.0, %v517
    %v519 = vpop.f32.mrb[0].mxu0
    %v520 = vpop.f32.mrb[0].mxu0
    %521 = vdwg.mxu0
    %v522 = vadd.f32 %v475, %v516
    %v523 = vadd.f32 %v476, %v518
    %v524 = vxor.u32 %v522, 2147483648
    %v525 = vxor.u32 %v523, 2147483648
    %v526 = vmul.f32 %v524, 1.442695
    %v527 = vpow.pop %v526
    %v528 = vmul.f32 %v525, 1.442695
    %v529 = vpow.pop %v528
    %v530 = vadd.f32 %v527, 1.0
    %v531 = vadd.f32 %v529, 1.0
    %v532 = vrcp.pop %v530
    %v533 = vmul.f32 1.0, %v532
    %v534 = vrcp.pop %v531
    %v535 = vmul.f32 1.0, %v534
    %v536 = vtanh.pop %v523
    %v537 = vmul.f32 %v533, %v466
    %539 = vrot.lane.b32.xlu0 %v536, 64
    %v540 = vpop.permute.xlu0 %539
    %v542 = vmul.f32 %v533, %v540
    %544 = vrot.lane.b32.xlu0 %v542, 64
    %v545 = vpop.permute.xlu0 %544
    %v547 = vadd.f32 %v537, %v545
    %v548 = vtanh.pop %v547
    %550 = vrot.lane.b32.xlu0 %v548, 64
    %v551 = vpop.permute.xlu0 %550
    %v553 = vmul.f32 %v535, %v551
    %554 = vst.msk [vmem:[#allocation2 + $0x10] sm:$0xff] %vm145, %v553
    %555 = vst.msk [vmem:[#allocation2 + $0x28] sm:$0xff] %vm392, %v553
    %v556 = vsel %vm270, %v207, %v213
    %v557 = vsel %vm271, %v209, %v215
    %v558 = vpack.c.bf16 %v553, %v553
    %v560 = vsel %vm314, %v558, 0
    %562 = vmatprep.subr.bf16.mxu0 %v299
    %563 = vmatpush1.bf16.msra.mxu0 %v298
    %564 = vmatprep.subr.bf16.mxu0 %v301
    %565 = vmatpush1.bf16.msra.mxu0 %v300
    %566 = vmatprep.subr.bf16.mxu0 %v303
    %567 = vmatpush1.bf16.msra.mxu0 %v302
    %568 = vmatprep.subr.bf16.mxu0 %v305
    %569 = vmatpush1.bf16.msra.mxu0 %v304
    %570 = vmatprep.subr.bf16.mxu0 0
    %571 = vmatpush1.bf16.msra.mxu0 0
    %572 = vmatprep.subr.bf16.mxu0 0
    %573 = vmatpush1.bf16.msra.mxu0 0
    %574 = vmatprep.subr.bf16.mxu0 0
    %575 = vmatpush1.bf16.msra.mxu0 0
    %576 = vmatprep.subr.bf16.mxu0 0
    %577 = vmatpush1.bf16.msra.mxu0 0
    %578 = vmatprep.subr.bf16.mxu0 0
    %579 = vmatpush1.bf16.msra.mxu0 0
    %580 = vmatprep.subr.bf16.mxu0 0
    %581 = vmatpush1.bf16.msra.mxu0 0
    %582 = vmatprep.subr.bf16.mxu0 0
    %583 = vmatpush1.bf16.msra.mxu0 0
    %584 = vmatprep.subr.bf16.mxu0 0
    %585 = vmatpush1.bf16.msra.mxu0 0
    %586 = vmatprep.subr.bf16.mxu0 0
    %587 = vmatpush1.bf16.msra.mxu0 0
    %588 = vmatprep.subr.bf16.mxu0 0
    %589 = vmatpush1.bf16.msra.mxu0 0
    %590 = vmatprep.subr.bf16.mxu0 0
    %591 = vmatpush1.bf16.msra.mxu0 0
    %592 = vmatprep.subr.bf16.mxu0 0
    %593 = vmatpush1.bf16.msra.mxu0 0
    %594 = vmatprep.mubr.bf16.mxu0 0
    %595 = vmatmul.mubr.bf16.gmra.mrb[0].mxu0 %v560
    %v596 = vpop.f32.mrb[0].mxu0
    %v597 = vadd.f32 0.0, %v596
    %v598 = vpop.f32.mrb[0].mxu0
    %v599 = vadd.f32 0.0, %v598
    %v600 = vpop.f32.mrb[0].mxu0
    %v601 = vpop.f32.mrb[0].mxu0
    %602 = vdwg.mxu0
    %v603 = vadd.f32 %v556, %v597
    %v604 = vadd.f32 %v557, %v599
    %v605 = vxor.u32 %v603, 2147483648
    %v606 = vxor.u32 %v604, 2147483648
    %v607 = vmul.f32 %v605, 1.442695
    %v608 = vpow.pop %v607
    %v609 = vmul.f32 %v606, 1.442695
    %v610 = vpow.pop %v609
    %v611 = vadd.f32 %v608, 1.0
    %v612 = vadd.f32 %v610, 1.0
    %v613 = vrcp.pop %v611
    %v614 = vmul.f32 1.0, %v613
    %v615 = vrcp.pop %v612
    %v616 = vmul.f32 1.0, %v615
    %v617 = vtanh.pop %v604
    %v618 = vmul.f32 %v614, %v547
    %620 = vrot.lane.b32.xlu0 %v617, 64
    %v621 = vpop.permute.xlu0 %620
    %v623 = vmul.f32 %v614, %v621
    %625 = vrot.lane.b32.xlu0 %v623, 64
    %v626 = vpop.permute.xlu0 %625
    %v628 = vadd.f32 %v618, %v626
    %v629 = vtanh.pop %v628
    %631 = vrot.lane.b32.xlu0 %v629, 64
    %v632 = vpop.permute.xlu0 %631
    %v634 = vmul.f32 %v616, %v632
    %635 = vst.msk [vmem:[#allocation2 + $0x18] sm:$0xff] %vm145, %v634
    %636 = vst.msk [vmem:[#allocation2 + $0x20] sm:$0xff] %vm392, %v634
    %v637 = vsel %vm270, %v213, %v207
    %v638 = vsel %vm271, %v215, %v209
    %v639 = vpack.c.bf16 %v634, %v634
    %v641 = vsel %vm314, %v639, 0
    %643 = vmatprep.subr.bf16.mxu0 %v299
    %644 = vmatpush1.bf16.msra.mxu0 %v298
    %645 = vmatprep.subr.bf16.mxu0 %v301
    %646 = vmatpush1.bf16.msra.mxu0 %v300
    %647 = vmatprep.subr.bf16.mxu0 %v303
    %648 = vmatpush1.bf16.msra.mxu0 %v302
    %649 = vmatprep.subr.bf16.mxu0 %v305
    %650 = vmatpush1.bf16.msra.mxu0 %v304
    %651 = vmatprep.subr.bf16.mxu0 0
    %652 = vmatpush1.bf16.msra.mxu0 0
    %653 = vmatprep.subr.bf16.mxu0 0
    %654 = vmatpush1.bf16.msra.mxu0 0
    %655 = vmatprep.subr.bf16.mxu0 0
    %656 = vmatpush1.bf16.msra.mxu0 0
    %657 = vmatprep.subr.bf16.mxu0 0
    %658 = vmatpush1.bf16.msra.mxu0 0
    %659 = vmatprep.subr.bf16.mxu0 0
    %660 = vmatpush1.bf16.msra.mxu0 0
    %661 = vmatprep.subr.bf16.mxu0 0
    %662 = vmatpush1.bf16.msra.mxu0 0
    %663 = vmatprep.subr.bf16.mxu0 0
    %664 = vmatpush1.bf16.msra.mxu0 0
    %665 = vmatprep.subr.bf16.mxu0 0
    %666 = vmatpush1.bf16.msra.mxu0 0
    %667 = vmatprep.subr.bf16.mxu0 0
    %668 = vmatpush1.bf16.msra.mxu0 0
    %669 = vmatprep.subr.bf16.mxu0 0
    %670 = vmatpush1.bf16.msra.mxu0 0
    %671 = vmatprep.subr.bf16.mxu0 0
    %672 = vmatpush1.bf16.msra.mxu0 0
    %673 = vmatprep.subr.bf16.mxu0 0
    %674 = vmatpush1.bf16.msra.mxu0 0
    %675 = vmatprep.mubr.bf16.mxu0 0
    %676 = vmatmul.mubr.bf16.gmra.mrb[0].mxu0 %v641
    %v677 = vpop.f32.mrb[0].mxu0
    %v678 = vadd.f32 0.0, %v677
    %v679 = vpop.f32.mrb[0].mxu0
    %v680 = vadd.f32 0.0, %v679
    %v681 = vpop.f32.mrb[0].mxu0
    %v682 = vpop.f32.mrb[0].mxu0
    %683 = vdwg.mxu0
    %v684 = vadd.f32 %v637, %v678
    %v685 = vadd.f32 %v638, %v680
    %v686 = vxor.u32 %v684, 2147483648
    %v687 = vxor.u32 %v685, 2147483648
    %v688 = vmul.f32 %v686, 1.442695
    %v689 = vpow.pop %v688
    %v690 = vmul.f32 %v687, 1.442695
    %v691 = vpow.pop %v690
    %v692 = vadd.f32 %v689, 1.0
    %v693 = vadd.f32 %v691, 1.0
    %v694 = vrcp.pop %v692
    %v695 = vmul.f32 1.0, %v694
    %v696 = vrcp.pop %v693
    %v697 = vmul.f32 1.0, %v696
    %v698 = vtanh.pop %v685
    %v699 = vmul.f32 %v695, %v628
    %701 = vrot.lane.b32.xlu0 %v698, 64
    %v702 = vpop.permute.xlu0 %701
    %v704 = vmul.f32 %v695, %v702
    %706 = vrot.lane.b32.xlu0 %v704, 64
    %v707 = vpop.permute.xlu0 %706
    %v709 = vadd.f32 %v699, %v707
    %v710 = vtanh.pop %v709
    %712 = vrot.lane.b32.xlu0 %v710, 64
    %v713 = vpop.permute.xlu0 %712
    %v715 = vmul.f32 %v697, %v713
    %716 = vst.msk [vmem:[#allocation2 + $0x20] sm:$0xff] %vm145, %v715
    %717 = vst.msk [vmem:[#allocation2 + $0x18] sm:$0xff] %vm392, %v715
    %v718 = vsel %vm270, %v217, %v203
    %v719 = vsel %vm271, %v219, %v205
    %v720 = vpack.c.bf16 %v715, %v715
    %v722 = vsel %vm314, %v720, 0
    %724 = vmatprep.subr.bf16.mxu0 %v299
    %725 = vmatpush1.bf16.msra.mxu0 %v298
    %726 = vmatprep.subr.bf16.mxu0 %v301
    %727 = vmatpush1.bf16.msra.mxu0 %v300
    %728 = vmatprep.subr.bf16.mxu0 %v303
    %729 = vmatpush1.bf16.msra.mxu0 %v302
    %730 = vmatprep.subr.bf16.mxu0 %v305
    %731 = vmatpush1.bf16.msra.mxu0 %v304
    %732 = vmatprep.subr.bf16.mxu0 0
    %733 = vmatpush1.bf16.msra.mxu0 0
    %734 = vmatprep.subr.bf16.mxu0 0
    %735 = vmatpush1.bf16.msra.mxu0 0
    %736 = vmatprep.subr.bf16.mxu0 0
    %737 = vmatpush1.bf16.msra.mxu0 0
    %738 = vmatprep.subr.bf16.mxu0 0
    %739 = vmatpush1.bf16.msra.mxu0 0
    %740 = vmatprep.subr.bf16.mxu0 0
    %741 = vmatpush1.bf16.msra.mxu0 0
    %742 = vmatprep.subr.bf16.mxu0 0
    %743 = vmatpush1.bf16.msra.mxu0 0
    %744 = vmatprep.subr.bf16.mxu0 0
    %745 = vmatpush1.bf16.msra.mxu0 0
    %746 = vmatprep.subr.bf16.mxu0 0
    %747 = vmatpush1.bf16.msra.mxu0 0
    %748 = vmatprep.subr.bf16.mxu0 0
    %749 = vmatpush1.bf16.msra.mxu0 0
    %750 = vmatprep.subr.bf16.mxu0 0
    %751 = vmatpush1.bf16.msra.mxu0 0
    %752 = vmatprep.subr.bf16.mxu0 0
    %753 = vmatpush1.bf16.msra.mxu0 0
    %754 = vmatprep.subr.bf16.mxu0 0
    %755 = vmatpush1.bf16.msra.mxu0 0
    %756 = vmatprep.mubr.bf16.mxu0 0
    %757 = vmatmul.mubr.bf16.gmra.mrb[0].mxu0 %v722
    %v758 = vpop.f32.mrb[0].mxu0
    %v759 = vadd.f32 0.0, %v758
    %v760 = vpop.f32.mrb[0].mxu0
    %v761 = vadd.f32 0.0, %v760
    %v762 = vpop.f32.mrb[0].mxu0
    %v763 = vpop.f32.mrb[0].mxu0
    %764 = vdwg.mxu0
    %v765 = vadd.f32 %v718, %v759
    %v766 = vadd.f32 %v719, %v761
    %v767 = vxor.u32 %v765, 2147483648
    %v768 = vxor.u32 %v766, 2147483648
    %v769 = vmul.f32 %v767, 1.442695
    %v770 = vpow.pop %v769
    %v771 = vmul.f32 %v768, 1.442695
    %v772 = vpow.pop %v771
    %v773 = vadd.f32 %v770, 1.0
    %v774 = vadd.f32 %v772, 1.0
    %v775 = vrcp.pop %v773
    %v776 = vmul.f32 1.0, %v775
    %v777 = vrcp.pop %v774
    %v778 = vmul.f32 1.0, %v777
    %v779 = vtanh.pop %v766
    %v780 = vmul.f32 %v776, %v709
    %782 = vrot.lane.b32.xlu0 %v779, 64
    %v783 = vpop.permute.xlu0 %782
    %v785 = vmul.f32 %v776, %v783
    %787 = vrot.lane.b32.xlu0 %v785, 64
    %v788 = vpop.permute.xlu0 %787
    %v790 = vadd.f32 %v780, %v788
    %v791 = vtanh.pop %v790
    %793 = vrot.lane.b32.xlu0 %v791, 64
    %v794 = vpop.permute.xlu0 %793
    %v796 = vmul.f32 %v778, %v794
    %797 = vst.msk [vmem:[#allocation2 + $0x28] sm:$0xff] %vm145, %v796
    %798 = vst.msk [vmem:[#allocation2 + $0x10] sm:$0xff] %vm392, %v796
    %v799 = vsel %vm270, %v223, %v197
    %v800 = vsel %vm271, %v225, %v199
    %v801 = vpack.c.bf16 %v796, %v796
    %v803 = vsel %vm314, %v801, 0
    %805 = vmatprep.subr.bf16.mxu0 %v299
    %806 = vmatpush1.bf16.msra.mxu0 %v298
    %807 = vmatprep.subr.bf16.mxu0 %v301
    %808 = vmatpush1.bf16.msra.mxu0 %v300
    %809 = vmatprep.subr.bf16.mxu0 %v303
    %810 = vmatpush1.bf16.msra.mxu0 %v302
    %811 = vmatprep.subr.bf16.mxu0 %v305
    %812 = vmatpush1.bf16.msra.mxu0 %v304
    %813 = vmatprep.subr.bf16.mxu0 0
    %814 = vmatpush1.bf16.msra.mxu0 0
    %815 = vmatprep.subr.bf16.mxu0 0
    %816 = vmatpush1.bf16.msra.mxu0 0
    %817 = vmatprep.subr.bf16.mxu0 0
    %818 = vmatpush1.bf16.msra.mxu0 0
    %819 = vmatprep.subr.bf16.mxu0 0
    %820 = vmatpush1.bf16.msra.mxu0 0
    %821 = vmatprep.subr.bf16.mxu0 0
    %822 = vmatpush1.bf16.msra.mxu0 0
    %823 = vmatprep.subr.bf16.mxu0 0
    %824 = vmatpush1.bf16.msra.mxu0 0
    %825 = vmatprep.subr.bf16.mxu0 0
    %826 = vmatpush1.bf16.msra.mxu0 0
    %827 = vmatprep.subr.bf16.mxu0 0
    %828 = vmatpush1.bf16.msra.mxu0 0
    %829 = vmatprep.subr.bf16.mxu0 0
    %830 = vmatpush1.bf16.msra.mxu0 0
    %831 = vmatprep.subr.bf16.mxu0 0
    %832 = vmatpush1.bf16.msra.mxu0 0
    %833 = vmatprep.subr.bf16.mxu0 0
    %834 = vmatpush1.bf16.msra.mxu0 0
    %835 = vmatprep.subr.bf16.mxu0 0
    %836 = vmatpush1.bf16.msra.mxu0 0
    %837 = vmatprep.mubr.bf16.mxu0 0
    %838 = vmatmul.mubr.bf16.gmra.mrb[0].mxu0 %v803
    %v839 = vpop.f32.mrb[0].mxu0
    %v840 = vadd.f32 0.0, %v839
    %v841 = vpop.f32.mrb[0].mxu0
    %v842 = vadd.f32 0.0, %v841
    %v843 = vpop.f32.mrb[0].mxu0
    %v844 = vpop.f32.mrb[0].mxu0
    %845 = vdwg.mxu0
    %v846 = vadd.f32 %v799, %v840
    %v847 = vadd.f32 %v800, %v842
    %v848 = vxor.u32 %v846, 2147483648
    %v849 = vxor.u32 %v847, 2147483648
    %v850 = vmul.f32 %v848, 1.442695
    %v851 = vpow.pop %v850
    %v852 = vmul.f32 %v849, 1.442695
    %v853 = vpow.pop %v852
    %v854 = vadd.f32 %v851, 1.0
    %v855 = vadd.f32 %v853, 1.0
    %v856 = vrcp.pop %v854
    %v857 = vmul.f32 1.0, %v856
    %v858 = vrcp.pop %v855
    %v859 = vmul.f32 1.0, %v858
    %v860 = vtanh.pop %v847
    %v861 = vmul.f32 %v857, %v790
    %863 = vrot.lane.b32.xlu0 %v860, 64
    %v864 = vpop.permute.xlu0 %863
    %v866 = vmul.f32 %v857, %v864
    %868 = vrot.lane.b32.xlu0 %v866, 64
    %v869 = vpop.permute.xlu0 %868
    %v871 = vadd.f32 %v861, %v869
    %v872 = vtanh.pop %v871
    %874 = vrot.lane.b32.xlu0 %v872, 64
    %v875 = vpop.permute.xlu0 %874
    %v877 = vmul.f32 %v859, %v875
    %878 = vst.msk [vmem:[#allocation2 + $0x30] sm:$0xff] %vm145, %v877
    %879 = vst.msk [vmem:[#allocation2 + $0x8] sm:$0xff] %vm392, %v877
    %v880 = vsel %vm270, %v227, %v193
    %v881 = vsel %vm271, %v229, %v195
    %v882 = vpack.c.bf16 %v877, %v877
    %v884 = vsel %vm314, %v882, 0
    %886 = vmatprep.subr.bf16.mxu0 %v299
    %887 = vmatpush1.bf16.msra.mxu0 %v298
    %888 = vmatprep.subr.bf16.mxu0 %v301
    %889 = vmatpush1.bf16.msra.mxu0 %v300
    %890 = vmatprep.subr.bf16.mxu0 %v303
    %891 = vmatpush1.bf16.msra.mxu0 %v302
    %892 = vmatprep.subr.bf16.mxu0 %v305
    %893 = vmatpush1.bf16.msra.mxu0 %v304
    %894 = vmatprep.subr.bf16.mxu0 0
    %895 = vmatpush1.bf16.msra.mxu0 0
    %896 = vmatprep.subr.bf16.mxu0 0
    %897 = vmatpush1.bf16.msra.mxu0 0
    %898 = vmatprep.subr.bf16.mxu0 0
    %899 = vmatpush1.bf16.msra.mxu0 0
    %900 = vmatprep.subr.bf16.mxu0 0
    %901 = vmatpush1.bf16.msra.mxu0 0
    %902 = vmatprep.subr.bf16.mxu0 0
    %903 = vmatpush1.bf16.msra.mxu0 0
    %904 = vmatprep.subr.bf16.mxu0 0
    %905 = vmatpush1.bf16.msra.mxu0 0
    %906 = vmatprep.subr.bf16.mxu0 0
    %907 = vmatpush1.bf16.msra.mxu0 0
    %908 = vmatprep.subr.bf16.mxu0 0
    %909 = vmatpush1.bf16.msra.mxu0 0
    %910 = vmatprep.subr.bf16.mxu0 0
    %911 = vmatpush1.bf16.msra.mxu0 0
    %912 = vmatprep.subr.bf16.mxu0 0
    %913 = vmatpush1.bf16.msra.mxu0 0
    %914 = vmatprep.subr.bf16.mxu0 0
    %915 = vmatpush1.bf16.msra.mxu0 0
    %916 = vmatprep.subr.bf16.mxu0 0
    %917 = vmatpush1.bf16.msra.mxu0 0
    %918 = vmatprep.mubr.bf16.mxu0 0
    %919 = vmatmul.mubr.bf16.gmra.mrb[0].mxu0 %v884
    %v920 = vpop.f32.mrb[0].mxu0
    %v921 = vadd.f32 0.0, %v920
    %v922 = vpop.f32.mrb[0].mxu0
    %v923 = vadd.f32 0.0, %v922
    %v924 = vpop.f32.mrb[0].mxu0
    %v925 = vpop.f32.mrb[0].mxu0
    %926 = vdwg.mxu0
    %v927 = vadd.f32 %v880, %v921
    %v928 = vadd.f32 %v881, %v923
    %v929 = vxor.u32 %v927, 2147483648
    %v930 = vxor.u32 %v928, 2147483648
    %v931 = vmul.f32 %v929, 1.442695
    %v932 = vpow.pop %v931
    %v933 = vmul.f32 %v930, 1.442695
    %v934 = vpow.pop %v933
    %v935 = vadd.f32 %v932, 1.0
    %v936 = vadd.f32 %v934, 1.0
    %v937 = vrcp.pop %v935
    %v938 = vmul.f32 1.0, %v937
    %v939 = vrcp.pop %v936
    %v940 = vmul.f32 1.0, %v939
    %v941 = vtanh.pop %v928
    %v942 = vmul.f32 %v938, %v871
    %944 = vrot.lane.b32.xlu0 %v941, 64
    %v945 = vpop.permute.xlu0 %944
    %v947 = vmul.f32 %v938, %v945
    %949 = vrot.lane.b32.xlu0 %v947, 64
    %v950 = vpop.permute.xlu0 %949
    %v952 = vadd.f32 %v942, %v950
    %v953 = vtanh.pop %v952
    %955 = vrot.lane.b32.xlu0 %v953, 64
    %v956 = vpop.permute.xlu0 %955
    %v958 = vmul.f32 %v940, %v956
    %959 = vst.msk [vmem:[#allocation2 + $0x38] sm:$0xff] %vm145, %v958
    %960 = vst.msk [vmem:[#allocation2] sm:$0xff] %vm392, %v958
    %v961 = vld [vmem:[#allocation2] sm:$0xff]
    %v962 = vld [vmem:[#allocation2 + $0x8] sm:$0xff]
    %v963 = vld [vmem:[#allocation2 + $0x10] sm:$0xff]
    %v964 = vld [vmem:[#allocation2 + $0x18] sm:$0xff]
    %v965 = vld [vmem:[#allocation2 + $0x20] sm:$0xff]
    %v966 = vld [vmem:[#allocation2 + $0x28] sm:$0xff]
    %v967 = vld [vmem:[#allocation2 + $0x30] sm:$0xff]
    %v968 = vld [vmem:[#allocation2 + $0x38] sm:$0xff]
    %v969 = vpack.c.bf16 %v962, %v961
    %v970 = vpack.c.bf16 %v964, %v963
    %v971 = vpack.c.bf16 %v966, %v965
    %v972 = vpack.c.bf16 %v968, %v967
    %v973 = vld [vmem:[#allocation8] sm:$0xf]
    %v974 = vld [vmem:[#allocation8 + $0x4] sm:$0xf]
    %v975 = vld [vmem:[#allocation8 + $0x8] sm:$0xf]
    %v976 = vld [vmem:[#allocation8 + $0xc] sm:$0xf]
    %v977 = vld [vmem:[#allocation8 + $0x10] sm:$0xf]
    %v978 = vld [vmem:[#allocation8 + $0x14] sm:$0xf]
    %v979 = vld [vmem:[#allocation8 + $0x18] sm:$0xf]
    %v980 = vld [vmem:[#allocation8 + $0x1c] sm:$0xf]
    %v981 = vld [vmem:[%s5] sm:$0x1]
    %v983 = vlaneseq
    %v984 = vshrl.u32 %v983, 7
    %v985 = vsub.s32 0, %v984
    %v986 = vrot.slane %v981, %v985
    %v996 = vunpack.c.l.b16 %v973
    %v997 = vunpack.c.l.b16 %v974
    %v998 = vunpack.c.l.b16 %v975
    %v999 = vunpack.c.l.b16 %v976
    %v1000 = vunpack.c.l.b16 %v977
    %v1001 = vunpack.c.l.b16 %v978
    %v1002 = vunpack.c.l.b16 %v979
    %v1003 = vunpack.c.l.b16 %v980
    %v1004 = vpack.c.b16 %v997, %v996
    %v1005 = vpack.c.b16 %v999, %v998
    %v1006 = vpack.c.b16 %v1001, %v1000
    %v1007 = vpack.c.b16 %v1003, %v1002
    %v1013 = vsel %vm314, %v969, 0
    %v1016 = vsel %vm314, %v970, 0
    %v1019 = vsel %vm314, %v971, 0
    %v1022 = vsel %vm314, %v972, 0
    %1024 = vmatprep.subr.bf16.mxu0 0
    %1025 = vmatpush1.bf16.msra.mxu0 %v1004
    %1026 = vmatprep.subr.bf16.mxu0 0
    %1027 = vmatpush1.bf16.msra.mxu0 %v1005
    %1028 = vmatprep.subr.bf16.mxu0 0
    %1029 = vmatpush1.bf16.msra.mxu0 %v1006
    %1030 = vmatprep.subr.bf16.mxu0 0
    %1031 = vmatpush1.bf16.msra.mxu0 %v1007
    %1032 = vmatprep.subr.bf16.mxu0 0
    %1033 = vmatpush1.bf16.msra.mxu0 0
    %1034 = vmatprep.subr.bf16.mxu0 0
    %1035 = vmatpush1.bf16.msra.mxu0 0
    %1036 = vmatprep.subr.bf16.mxu0 0
    %1037 = vmatpush1.bf16.msra.mxu0 0
    %1038 = vmatprep.subr.bf16.mxu0 0
    %1039 = vmatpush1.bf16.msra.mxu0 0
    %1040 = vmatprep.subr.bf16.mxu0 0
    %1041 = vmatpush1.bf16.msra.mxu0 0
    %1042 = vmatprep.subr.bf16.mxu0 0
    %1043 = vmatpush1.bf16.msra.mxu0 0
    %1044 = vmatprep.subr.bf16.mxu0 0
    %1045 = vmatpush1.bf16.msra.mxu0 0
    %1046 = vmatprep.subr.bf16.mxu0 0
    %1047 = vmatpush1.bf16.msra.mxu0 0
    %1048 = vmatprep.subr.bf16.mxu0 0
    %1049 = vmatpush1.bf16.msra.mxu0 0
    %1050 = vmatprep.subr.bf16.mxu0 0
    %1051 = vmatpush1.bf16.msra.mxu0 0
    %1052 = vmatprep.subr.bf16.mxu0 0
    %1053 = vmatpush1.bf16.msra.mxu0 0
    %1054 = vmatprep.subr.bf16.mxu0 0
    %1055 = vmatpush1.bf16.msra.mxu0 0
    %1056 = vmatprep.mubr.bf16.mxu0 0
    %1057 = vmatmul.mubr.bf16.gmra.mrb[0].mxu0 %v1013
    %v1058 = vpop.f32.mrb[0].mxu0
    %v1059 = vadd.f32 %v986, %v1058
    %v1060 = vpop.f32.mrb[0].mxu0
    %v1061 = vpop.f32.mrb[0].mxu0
    %v1062 = vadd.f32 %v986, %v1061
    %v1063 = vpop.f32.mrb[0].mxu0
    %1064 = vmatprep.mubr.bf16.mxu0 0
    %1065 = vmatmul.mubr.bf16.gmra.mrb[0].mxu0 %v1016
    %v1066 = vpop.f32.mrb[0].mxu0
    %v1067 = vadd.f32 %v986, %v1066
    %v1068 = vpop.f32.mrb[0].mxu0
    %v1069 = vpop.f32.mrb[0].mxu0
    %v1070 = vadd.f32 %v986, %v1069
    %v1071 = vpop.f32.mrb[0].mxu0
    %1072 = vmatprep.mubr.bf16.mxu0 0
    %1073 = vmatmul.mubr.bf16.gmra.mrb[0].mxu0 %v1019
    %v1074 = vpop.f32.mrb[0].mxu0
    %v1075 = vadd.f32 %v986, %v1074
    %v1076 = vpop.f32.mrb[0].mxu0
    %v1077 = vpop.f32.mrb[0].mxu0
    %v1078 = vadd.f32 %v986, %v1077
    %v1079 = vpop.f32.mrb[0].mxu0
    %1080 = vmatprep.mubr.bf16.mxu0 0
    %1081 = vmatmul.mubr.bf16.gmra.mrb[0].mxu0 %v1022
    %v1082 = vpop.f32.mrb[0].mxu0
    %v1083 = vadd.f32 %v986, %v1082
    %v1084 = vpop.f32.mrb[0].mxu0
    %v1085 = vpop.f32.mrb[0].mxu0
    %v1086 = vadd.f32 %v986, %v1085
    %v1087 = vpop.f32.mrb[0].mxu0
    %1088 = vdwg.mxu0
    %1089 = vst [vmem:[#allocation9] sm:$0xff] %v1059
    %1090 = vst [vmem:[#allocation9 + $0x8] sm:$0xff] %v1062
    %1091 = vst [vmem:[#allocation9 + $0x10] sm:$0xff] %v1067
    %1092 = vst [vmem:[#allocation9 + $0x18] sm:$0xff] %v1070
    %1093 = vst [vmem:[#allocation9 + $0x20] sm:$0xff] %v1075
    %1094 = vst [vmem:[#allocation9 + $0x28] sm:$0xff] %v1078
    %1095 = vst [vmem:[#allocation9 + $0x30] sm:$0xff] %v1083
    %1096 = vst [vmem:[#allocation9 + $0x38] sm:$0xff] %v1086
    %v1097 = vld [vmem:[%s6] sm:$0xff]
    %v1098 = vld [vmem:[%s7] sm:$0x1]
    %v1099 = vld [vmem:[#allocation9] sm:$0xff]
    %v1101 = vlaneseq
    %v1102 = vshrl.u32 %v1101, 7
    %v1103 = vsub.s32 0, %v1102
    %v1104 = vrot.slane %v1098, %v1103
    %v1106 = vadd.f32 %v1104, %v1099
    %v1108 = vcombine.high %v1106, %v1106
    %v1110 = vunpack.c.l.s4 1966171168
    %v1111 = vunpack.c.0.s8 %v1110
    %v1112 = vlaneseq
    %v1113 = vshrl.u32 %v1112, 7
    %v1114 = vsub.s32 %v1111, %v1113
    %v1115 = vrot.slane %v1106, %v1114
    %v1117 = vunpack.c.l.s4 1966171168
    %v1118 = vunpack.c.0.s8 %v1117
    %v1119 = vlaneseq
    %v1120 = vshrl.u32 %v1119, 7
    %v1121 = vsub.s32 %v1118, %v1120
    %v1122 = vrot.slane %v1108, %v1121
    %v1123 = vcombine.high %v1115, %v1115
    %v1124 = vcombine.high %v1122, %v1122
    %v1126 = vunpack.c.l.s4 1966171168
    %v1127 = vunpack.c.0.s8 %v1126
    %v1128 = vlaneseq
    %v1129 = vshrl.u32 %v1128, 7
    %v1130 = vsub.s32 %v1127, %v1129
    %v1131 = vrot.slane %v1115, %v1130
    %v1133 = vunpack.c.l.s4 1966171168
    %v1134 = vunpack.c.0.s8 %v1133
    %v1135 = vlaneseq
    %v1136 = vshrl.u32 %v1135, 7
    %v1137 = vsub.s32 %v1134, %v1136
    %v1138 = vrot.slane %v1122, %v1137
    %v1140 = vunpack.c.l.s4 1966171168
    %v1141 = vunpack.c.0.s8 %v1140
    %v1142 = vlaneseq
    %v1143 = vshrl.u32 %v1142, 7
    %v1144 = vsub.s32 %v1141, %v1143
    %v1145 = vrot.slane %v1123, %v1144
    %v1147 = vunpack.c.l.s4 1966171168
    %v1148 = vunpack.c.0.s8 %v1147
    %v1149 = vlaneseq
    %v1150 = vshrl.u32 %v1149, 7
    %v1151 = vsub.s32 %v1148, %v1150
    %v1152 = vrot.slane %v1124, %v1151
    %v1153 = vcombine.high %v1131, %v1131
    %v1154 = vcombine.high %v1138, %v1138
    %v1155 = vcombine.high %v1145, %v1145
    %v1156 = vcombine.high %v1152, %v1152
    %v1157 = vlaneseq
    %v1158 = vshrl.u32 %v1157, 7
    %v1159 = vsub.s32 0, %v1158
    %v1160 = vrot.slane %v1131, %v1159
    %v1161 = vlaneseq
    %v1162 = vshrl.u32 %v1161, 7
    %v1163 = vsub.s32 0, %v1162
    %v1164 = vrot.slane %v1145, %v1163
    %v1165 = vlaneseq
    %v1166 = vshrl.u32 %v1165, 7
    %v1167 = vsub.s32 0, %v1166
    %v1168 = vrot.slane %v1153, %v1167
    %v1169 = vlaneseq
    %v1170 = vshrl.u32 %v1169, 7
    %v1171 = vsub.s32 0, %v1170
    %v1172 = vrot.slane %v1155, %v1171
    %v1173 = vlaneseq
    %v1174 = vshrl.u32 %v1173, 7
    %v1175 = vsub.s32 0, %v1174
    %v1176 = vrot.slane %v1138, %v1175
    %v1177 = vlaneseq
    %v1178 = vshrl.u32 %v1177, 7
    %v1179 = vsub.s32 0, %v1178
    %v1180 = vrot.slane %v1152, %v1179
    %v1181 = vlaneseq
    %v1182 = vshrl.u32 %v1181, 7
    %v1183 = vsub.s32 0, %v1182
    %v1184 = vrot.slane %v1154, %v1183
    %v1185 = vlaneseq
    %v1186 = vshrl.u32 %v1185, 7
    %v1187 = vsub.s32 0, %v1186
    %v1188 = vrot.slane %v1156, %v1187
    %v1197 = vadd.f32 %v1160, %v1097
    %v1198 = vadd.f32 %v1164, %v1097
    %v1199 = vadd.f32 %v1168, %v1097
    %v1200 = vadd.f32 %v1172, %v1097
    %v1201 = vadd.f32 %v1176, %v1097
    %v1202 = vadd.f32 %v1180, %v1097
    %v1203 = vadd.f32 %v1184, %v1097
    %v1204 = vadd.f32 %v1188, %v1097
    %1205 = vmax.xlane.f32.xlu0 %v1197
    %v1206 = vpop.xlane.xlu0 %1205
    %1207 = vmax.xlane.f32.xlu0 %v1198
    %v1208 = vpop.xlane.xlu0 %1207
    %1209 = vmax.xlane.f32.xlu0 %v1199
    %v1210 = vpop.xlane.xlu0 %1209
    %1211 = vmax.xlane.f32.xlu0 %v1200
    %v1212 = vpop.xlane.xlu0 %1211
    %1213 = vmax.xlane.f32.xlu0 %v1201
    %v1214 = vpop.xlane.xlu0 %1213
    %1215 = vmax.xlane.f32.xlu0 %v1202
    %v1216 = vpop.xlane.xlu0 %1215
    %1217 = vmax.xlane.f32.xlu0 %v1203
    %v1218 = vpop.xlane.xlu0 %1217
    %1219 = vmax.xlane.f32.xlu0 %v1204
    %v1220 = vpop.xlane.xlu0 %1219
    %v1221 = vsub.f32 %v1197, %v1206
    %v1222 = vsub.f32 %v1198, %v1208
    %v1223 = vsub.f32 %v1199, %v1210
    %v1224 = vsub.f32 %v1200, %v1212
    %v1225 = vsub.f32 %v1201, %v1214
    %v1226 = vsub.f32 %v1202, %v1216
    %v1227 = vsub.f32 %v1203, %v1218
    %v1228 = vsub.f32 %v1204, %v1220
    %v1229 = vmul.f32 %v1221, 1.442695
    %v1230 = vpow.pop %v1229
    %v1231 = vmul.f32 %v1222, 1.442695
    %v1232 = vpow.pop %v1231
    %v1233 = vmul.f32 %v1223, 1.442695
    %v1234 = vpow.pop %v1233
    %v1235 = vmul.f32 %v1224, 1.442695
    %v1236 = vpow.pop %v1235
    %v1237 = vmul.f32 %v1225, 1.442695
    %v1238 = vpow.pop %v1237
    %v1239 = vmul.f32 %v1226, 1.442695
    %v1240 = vpow.pop %v1239
    %v1241 = vmul.f32 %v1227, 1.442695
    %v1242 = vpow.pop %v1241
    %v1243 = vmul.f32 %v1228, 1.442695
    %v1244 = vpow.pop %v1243
    %1245 = vadd.xlane.f32.xlu0 %v1230
    %v1246 = vpop.xlane.xlu0 %1245
    %1247 = vadd.xlane.f32.xlu0 %v1232
    %v1248 = vpop.xlane.xlu0 %1247
    %1249 = vadd.xlane.f32.xlu0 %v1234
    %v1250 = vpop.xlane.xlu0 %1249
    %1251 = vadd.xlane.f32.xlu0 %v1236
    %v1252 = vpop.xlane.xlu0 %1251
    %1253 = vadd.xlane.f32.xlu0 %v1238
    %v1254 = vpop.xlane.xlu0 %1253
    %1255 = vadd.xlane.f32.xlu0 %v1240
    %v1256 = vpop.xlane.xlu0 %1255
    %1257 = vadd.xlane.f32.xlu0 %v1242
    %v1258 = vpop.xlane.xlu0 %1257
    %1259 = vadd.xlane.f32.xlu0 %v1244
    %v1260 = vpop.xlane.xlu0 %1259
    %v1261 = vlog2.pop %v1246
    %v1262 = vmul.f32 %v1261, 0.6931472
    %v1263 = vlog2.pop %v1248
    %v1264 = vmul.f32 %v1263, 0.6931472
    %v1265 = vlog2.pop %v1250
    %v1266 = vmul.f32 %v1265, 0.6931472
    %v1267 = vlog2.pop %v1252
    %v1268 = vmul.f32 %v1267, 0.6931472
    %v1269 = vlog2.pop %v1254
    %v1270 = vmul.f32 %v1269, 0.6931472
    %v1271 = vlog2.pop %v1256
    %v1272 = vmul.f32 %v1271, 0.6931472
    %v1273 = vlog2.pop %v1258
    %v1274 = vmul.f32 %v1273, 0.6931472
    %v1275 = vlog2.pop %v1260
    %v1276 = vmul.f32 %v1275, 0.6931472
    %v1277 = vadd.f32 %v1206, %v1262
    %v1278 = vadd.f32 %v1208, %v1264
    %v1279 = vadd.f32 %v1210, %v1266
    %v1280 = vadd.f32 %v1212, %v1268
    %v1281 = vadd.f32 %v1214, %v1270
    %v1282 = vadd.f32 %v1216, %v1272
    %v1283 = vadd.f32 %v1218, %v1274
    %v1284 = vadd.f32 %v1220, %v1276
    %v1293 = vlaneseq
    %v1294 = vshrl.u32 %v1293, 7
    %v1295 = vsub.s32 %v240, %v1294
    %v1296 = vrot.slane %v1277, %v1295
    %v1297 = vlaneseq
    %v1298 = vshrl.u32 %v1297, 7
    %v1299 = vsub.s32 %v240, %v1298
    %v1300 = vrot.slane %v1278, %v1299
    %v1301 = vlaneseq
    %v1302 = vshrl.u32 %v1301, 7
    %v1303 = vsub.s32 %v240, %v1302
    %v1304 = vrot.slane %v1279, %v1303
    %v1305 = vlaneseq
    %v1306 = vshrl.u32 %v1305, 7
    %v1307 = vsub.s32 %v240, %v1306
    %v1308 = vrot.slane %v1280, %v1307
    %v1309 = vlaneseq
    %v1310 = vshrl.u32 %v1309, 7
    %v1311 = vsub.s32 %v240, %v1310
    %v1312 = vrot.slane %v1281, %v1311
    %v1313 = vlaneseq
    %v1314 = vshrl.u32 %v1313, 7
    %v1315 = vsub.s32 %v240, %v1314
    %v1316 = vrot.slane %v1282, %v1315
    %v1317 = vlaneseq
    %v1318 = vshrl.u32 %v1317, 7
    %v1319 = vsub.s32 %v240, %v1318
    %v1320 = vrot.slane %v1283, %v1319
    %v1321 = vlaneseq
    %v1322 = vshrl.u32 %v1321, 7
    %v1323 = vsub.s32 %v240, %v1322
    %v1324 = vrot.slane %v1284, %v1323
    %vm1325 = vcmask 1041409
    %v1326 = vsel %vm1325, %v1300, %v1296
    %vm1327 = vcmask 1042434
    %v1328 = vsel %vm1327, %v1304, %v1326
    %vm1329 = vcmask 1043459
    %v1330 = vsel %vm1329, %v1308, %v1328
    %vm1331 = vcmask 1044484
    %v1332 = vsel %vm1331, %v1312, %v1330
    %vm1333 = vcmask 1045509
    %v1334 = vsel %vm1333, %v1316, %v1332
    %vm1335 = vcmask 1046534
    %v1336 = vsel %vm1335, %v1320, %v1334
    %vm1337 = vcmask 1047559
    %v1338 = vsel %vm1337, %v1324, %v1336
    %vm1340 = vcmask 64512
    %v1341 = vsel %vm1340, %v1338, -1e+09
    %v1342 = vld [vmem:[#allocation9 + $0x8] sm:$0xff]
    %v1343 = vadd.f32 %v1341, %v1342
    %v1344 = vld [vmem:[%s9 + $0x8] sm:$0xff]
    %vm1345 = vcmp.gt.f32.partialorder %v1344, 0.0
    %v1346 = vsel %vm1345, %v1343, %v1106
    %v1348 = vcombine.high %v1346, %v1346
    %v1350 = vunpack.c.l.s4 1966171168
    %v1351 = vunpack.c.0.s8 %v1350
    %v1352 = vlaneseq
    %v1353 = vshrl.u32 %v1352, 7
    %v1354 = vsub.s32 %v1351, %v1353
    %v1355 = vrot.slane %v1346, %v1354
    %v1357 = vunpack.c.l.s4 1966171168
    %v1358 = vunpack.c.0.s8 %v1357
    %v1359 = vlaneseq
    %v1360 = vshrl.u32 %v1359, 7
    %v1361 = vsub.s32 %v1358, %v1360
    %v1362 = vrot.slane %v1348, %v1361
    %v1363 = vcombine.high %v1355, %v1355
    %v1364 = vcombine.high %v1362, %v1362
    %v1366 = vunpack.c.l.s4 1966171168
    %v1367 = vunpack.c.0.s8 %v1366
    %v1368 = vlaneseq
    %v1369 = vshrl.u32 %v1368, 7
    %v1370 = vsub.s32 %v1367, %v1369
    %v1371 = vrot.slane %v1355, %v1370
    %v1373 = vunpack.c.l.s4 1966171168
    %v1374 = vunpack.c.0.s8 %v1373
    %v1375 = vlaneseq
    %v1376 = vshrl.u32 %v1375, 7
    %v1377 = vsub.s32 %v1374, %v1376
    %v1378 = vrot.slane %v1362, %v1377
    %v1380 = vunpack.c.l.s4 1966171168
    %v1381 = vunpack.c.0.s8 %v1380
    %v1382 = vlaneseq
    %v1383 = vshrl.u32 %v1382, 7
    %v1384 = vsub.s32 %v1381, %v1383
    %v1385 = vrot.slane %v1363, %v1384
    %v1387 = vunpack.c.l.s4 1966171168
    %v1388 = vunpack.c.0.s8 %v1387
    %v1389 = vlaneseq
    %v1390 = vshrl.u32 %v1389, 7
    %v1391 = vsub.s32 %v1388, %v1390
    %v1392 = vrot.slane %v1364, %v1391
    %v1393 = vcombine.high %v1371, %v1371
    %v1394 = vcombine.high %v1378, %v1378
    %v1395 = vcombine.high %v1385, %v1385
    %v1396 = vcombine.high %v1392, %v1392
    %v1397 = vlaneseq
    %v1398 = vshrl.u32 %v1397, 7
    %v1399 = vsub.s32 0, %v1398
    %v1400 = vrot.slane %v1371, %v1399
    %v1401 = vlaneseq
    %v1402 = vshrl.u32 %v1401, 7
    %v1403 = vsub.s32 0, %v1402
    %v1404 = vrot.slane %v1385, %v1403
    %v1405 = vlaneseq
    %v1406 = vshrl.u32 %v1405, 7
    %v1407 = vsub.s32 0, %v1406
    %v1408 = vrot.slane %v1393, %v1407
    %v1409 = vlaneseq
    %v1410 = vshrl.u32 %v1409, 7
    %v1411 = vsub.s32 0, %v1410
    %v1412 = vrot.slane %v1395, %v1411
    %v1413 = vlaneseq
    %v1414 = vshrl.u32 %v1413, 7
    %v1415 = vsub.s32 0, %v1414
    %v1416 = vrot.slane %v1378, %v1415
    %v1417 = vlaneseq
    %v1418 = vshrl.u32 %v1417, 7
    %v1419 = vsub.s32 0, %v1418
    %v1420 = vrot.slane %v1392, %v1419
    %v1421 = vlaneseq
    %v1422 = vshrl.u32 %v1421, 7
    %v1423 = vsub.s32 0, %v1422
    %v1424 = vrot.slane %v1394, %v1423
    %v1425 = vlaneseq
    %v1426 = vshrl.u32 %v1425, 7
    %v1427 = vsub.s32 0, %v1426
    %v1428 = vrot.slane %v1396, %v1427
    %v1437 = vadd.f32 %v1400, %v1097
    %v1438 = vadd.f32 %v1404, %v1097
    %v1439 = vadd.f32 %v1408, %v1097
    %v1440 = vadd.f32 %v1412, %v1097
    %v1441 = vadd.f32 %v1416, %v1097
    %v1442 = vadd.f32 %v1420, %v1097
    %v1443 = vadd.f32 %v1424, %v1097
    %v1444 = vadd.f32 %v1428, %v1097
    %1445 = vmax.xlane.f32.xlu0 %v1437
    %v1446 = vpop.xlane.xlu0 %1445
    %1447 = vmax.xlane.f32.xlu0 %v1438
    %v1448 = vpop.xlane.xlu0 %1447
    %1449 = vmax.xlane.f32.xlu0 %v1439
    %v1450 = vpop.xlane.xlu0 %1449
    %1451 = vmax.xlane.f32.xlu0 %v1440
    %v1452 = vpop.xlane.xlu0 %1451
    %1453 = vmax.xlane.f32.xlu0 %v1441
    %v1454 = vpop.xlane.xlu0 %1453
    %1455 = vmax.xlane.f32.xlu0 %v1442
    %v1456 = vpop.xlane.xlu0 %1455
    %1457 = vmax.xlane.f32.xlu0 %v1443
    %v1458 = vpop.xlane.xlu0 %1457
    %1459 = vmax.xlane.f32.xlu0 %v1444
    %v1460 = vpop.xlane.xlu0 %1459
    %v1461 = vsub.f32 %v1437, %v1446
    %v1462 = vsub.f32 %v1438, %v1448
    %v1463 = vsub.f32 %v1439, %v1450
    %v1464 = vsub.f32 %v1440, %v1452
    %v1465 = vsub.f32 %v1441, %v1454
    %v1466 = vsub.f32 %v1442, %v1456
    %v1467 = vsub.f32 %v1443, %v1458
    %v1468 = vsub.f32 %v1444, %v1460
    %v1469 = vmul.f32 %v1461, 1.442695
    %v1470 = vpow.pop %v1469
    %v1471 = vmul.f32 %v1462, 1.442695
    %v1472 = vpow.pop %v1471
    %v1473 = vmul.f32 %v1463, 1.442695
    %v1474 = vpow.pop %v1473
    %v1475 = vmul.f32 %v1464, 1.442695
    %v1476 = vpow.pop %v1475
    %v1477 = vmul.f32 %v1465, 1.442695
    %v1478 = vpow.pop %v1477
    %v1479 = vmul.f32 %v1466, 1.442695
    %v1480 = vpow.pop %v1479
    %v1481 = vmul.f32 %v1467, 1.442695
    %v1482 = vpow.pop %v1481
    %v1483 = vmul.f32 %v1468, 1.442695
    %v1484 = vpow.pop %v1483
    %1485 = vadd.xlane.f32.xlu0 %v1470
    %v1486 = vpop.xlane.xlu0 %1485
    %1487 = vadd.xlane.f32.xlu0 %v1472
    %v1488 = vpop.xlane.xlu0 %1487
    %1489 = vadd.xlane.f32.xlu0 %v1474
    %v1490 = vpop.xlane.xlu0 %1489
    %1491 = vadd.xlane.f32.xlu0 %v1476
    %v1492 = vpop.xlane.xlu0 %1491
    %1493 = vadd.xlane.f32.xlu0 %v1478
    %v1494 = vpop.xlane.xlu0 %1493
    %1495 = vadd.xlane.f32.xlu0 %v1480
    %v1496 = vpop.xlane.xlu0 %1495
    %1497 = vadd.xlane.f32.xlu0 %v1482
    %v1498 = vpop.xlane.xlu0 %1497
    %1499 = vadd.xlane.f32.xlu0 %v1484
    %v1500 = vpop.xlane.xlu0 %1499
    %v1501 = vlog2.pop %v1486
    %v1502 = vmul.f32 %v1501, 0.6931472
    %v1503 = vlog2.pop %v1488
    %v1504 = vmul.f32 %v1503, 0.6931472
    %v1505 = vlog2.pop %v1490
    %v1506 = vmul.f32 %v1505, 0.6931472
    %v1507 = vlog2.pop %v1492
    %v1508 = vmul.f32 %v1507, 0.6931472
    %v1509 = vlog2.pop %v1494
    %v1510 = vmul.f32 %v1509, 0.6931472
    %v1511 = vlog2.pop %v1496
    %v1512 = vmul.f32 %v1511, 0.6931472
    %v1513 = vlog2.pop %v1498
    %v1514 = vmul.f32 %v1513, 0.6931472
    %v1515 = vlog2.pop %v1500
    %v1516 = vmul.f32 %v1515, 0.6931472
    %v1517 = vadd.f32 %v1446, %v1502
    %v1518 = vadd.f32 %v1448, %v1504
    %v1519 = vadd.f32 %v1450, %v1506
    %v1520 = vadd.f32 %v1452, %v1508
    %v1521 = vadd.f32 %v1454, %v1510
    %v1522 = vadd.f32 %v1456, %v1512
    %v1523 = vadd.f32 %v1458, %v1514
    %v1524 = vadd.f32 %v1460, %v1516
    %v1533 = vlaneseq
    %v1534 = vshrl.u32 %v1533, 7
    %v1535 = vsub.s32 %v240, %v1534
    %v1536 = vrot.slane %v1517, %v1535
    %v1537 = vlaneseq
    %v1538 = vshrl.u32 %v1537, 7
    %v1539 = vsub.s32 %v240, %v1538
    %v1540 = vrot.slane %v1518, %v1539
    %v1541 = vlaneseq
    %v1542 = vshrl.u32 %v1541, 7
    %v1543 = vsub.s32 %v240, %v1542
    %v1544 = vrot.slane %v1519, %v1543
    %v1545 = vlaneseq
    %v1546 = vshrl.u32 %v1545, 7
    %v1547 = vsub.s32 %v240, %v1546
    %v1548 = vrot.slane %v1520, %v1547
    %v1549 = vlaneseq
    %v1550 = vshrl.u32 %v1549, 7
    %v1551 = vsub.s32 %v240, %v1550
    %v1552 = vrot.slane %v1521, %v1551
    %v1553 = vlaneseq
    %v1554 = vshrl.u32 %v1553, 7
    %v1555 = vsub.s32 %v240, %v1554
    %v1556 = vrot.slane %v1522, %v1555
    %v1557 = vlaneseq
    %v1558 = vshrl.u32 %v1557, 7
    %v1559 = vsub.s32 %v240, %v1558
    %v1560 = vrot.slane %v1523, %v1559
    %v1561 = vlaneseq
    %v1562 = vshrl.u32 %v1561, 7
    %v1563 = vsub.s32 %v240, %v1562
    %v1564 = vrot.slane %v1524, %v1563
    %v1565 = vsel %vm1325, %v1540, %v1536
    %v1566 = vsel %vm1327, %v1544, %v1565
    %v1567 = vsel %vm1329, %v1548, %v1566
    %v1568 = vsel %vm1331, %v1552, %v1567
    %v1569 = vsel %vm1333, %v1556, %v1568
    %v1570 = vsel %vm1335, %v1560, %v1569
    %v1571 = vsel %vm1337, %v1564, %v1570
    %v1573 = vsel %vm1340, %v1571, -1e+09
    %v1574 = vld [vmem:[#allocation9 + $0x10] sm:$0xff]
    %v1575 = vadd.f32 %v1573, %v1574
    %v1576 = vld [vmem:[%s9 + $0x10] sm:$0xff]
    %vm1577 = vcmp.gt.f32.partialorder %v1576, 0.0
    %v1578 = vsel %vm1577, %v1575, %v1346
    %v1580 = vcombine.high %v1578, %v1578
    %v1582 = vunpack.c.l.s4 1966171168
    %v1583 = vunpack.c.0.s8 %v1582
    %v1584 = vlaneseq
    %v1585 = vshrl.u32 %v1584, 7
    %v1586 = vsub.s32 %v1583, %v1585
    %v1587 = vrot.slane %v1578, %v1586
    %v1589 = vunpack.c.l.s4 1966171168
    %v1590 = vunpack.c.0.s8 %v1589
    %v1591 = vlaneseq
    %v1592 = vshrl.u32 %v1591, 7
    %v1593 = vsub.s32 %v1590, %v1592
    %v1594 = vrot.slane %v1580, %v1593
    %v1595 = vcombine.high %v1587, %v1587
    %v1596 = vcombine.high %v1594, %v1594
    %v1598 = vunpack.c.l.s4 1966171168
    %v1599 = vunpack.c.0.s8 %v1598
    %v1600 = vlaneseq
    %v1601 = vshrl.u32 %v1600, 7
    %v1602 = vsub.s32 %v1599, %v1601
    %v1603 = vrot.slane %v1587, %v1602
    %v1605 = vunpack.c.l.s4 1966171168
    %v1606 = vunpack.c.0.s8 %v1605
    %v1607 = vlaneseq
    %v1608 = vshrl.u32 %v1607, 7
    %v1609 = vsub.s32 %v1606, %v1608
    %v1610 = vrot.slane %v1594, %v1609
    %v1612 = vunpack.c.l.s4 1966171168
    %v1613 = vunpack.c.0.s8 %v1612
    %v1614 = vlaneseq
    %v1615 = vshrl.u32 %v1614, 7
    %v1616 = vsub.s32 %v1613, %v1615
    %v1617 = vrot.slane %v1595, %v1616
    %v1619 = vunpack.c.l.s4 1966171168
    %v1620 = vunpack.c.0.s8 %v1619
    %v1621 = vlaneseq
    %v1622 = vshrl.u32 %v1621, 7
    %v1623 = vsub.s32 %v1620, %v1622
    %v1624 = vrot.slane %v1596, %v1623
    %v1625 = vcombine.high %v1603, %v1603
    %v1626 = vcombine.high %v1610, %v1610
    %v1627 = vcombine.high %v1617, %v1617
    %v1628 = vcombine.high %v1624, %v1624
    %v1629 = vlaneseq
    %v1630 = vshrl.u32 %v1629, 7
    %v1631 = vsub.s32 0, %v1630
    %v1632 = vrot.slane %v1603, %v1631
    %v1633 = vlaneseq
    %v1634 = vshrl.u32 %v1633, 7
    %v1635 = vsub.s32 0, %v1634
    %v1636 = vrot.slane %v1617, %v1635
    %v1637 = vlaneseq
    %v1638 = vshrl.u32 %v1637, 7
    %v1639 = vsub.s32 0, %v1638
    %v1640 = vrot.slane %v1625, %v1639
    %v1641 = vlaneseq
    %v1642 = vshrl.u32 %v1641, 7
    %v1643 = vsub.s32 0, %v1642
    %v1644 = vrot.slane %v1627, %v1643
    %v1645 = vlaneseq
    %v1646 = vshrl.u32 %v1645, 7
    %v1647 = vsub.s32 0, %v1646
    %v1648 = vrot.slane %v1610, %v1647
    %v1649 = vlaneseq
    %v1650 = vshrl.u32 %v1649, 7
    %v1651 = vsub.s32 0, %v1650
    %v1652 = vrot.slane %v1624, %v1651
    %v1653 = vlaneseq
    %v1654 = vshrl.u32 %v1653, 7
    %v1655 = vsub.s32 0, %v1654
    %v1656 = vrot.slane %v1626, %v1655
    %v1657 = vlaneseq
    %v1658 = vshrl.u32 %v1657, 7
    %v1659 = vsub.s32 0, %v1658
    %v1660 = vrot.slane %v1628, %v1659
    %v1669 = vadd.f32 %v1632, %v1097
    %v1670 = vadd.f32 %v1636, %v1097
    %v1671 = vadd.f32 %v1640, %v1097
    %v1672 = vadd.f32 %v1644, %v1097
    %v1673 = vadd.f32 %v1648, %v1097
    %v1674 = vadd.f32 %v1652, %v1097
    %v1675 = vadd.f32 %v1656, %v1097
    %v1676 = vadd.f32 %v1660, %v1097
    %1677 = vmax.xlane.f32.xlu0 %v1669
    %v1678 = vpop.xlane.xlu0 %1677
    %1679 = vmax.xlane.f32.xlu0 %v1670
    %v1680 = vpop.xlane.xlu0 %1679
    %1681 = vmax.xlane.f32.xlu0 %v1671
    %v1682 = vpop.xlane.xlu0 %1681
    %1683 = vmax.xlane.f32.xlu0 %v1672
    %v1684 = vpop.xlane.xlu0 %1683
    %1685 = vmax.xlane.f32.xlu0 %v1673
    %v1686 = vpop.xlane.xlu0 %1685
    %1687 = vmax.xlane.f32.xlu0 %v1674
    %v1688 = vpop.xlane.xlu0 %1687
    %1689 = vmax.xlane.f32.xlu0 %v1675
    %v1690 = vpop.xlane.xlu0 %1689
    %1691 = vmax.xlane.f32.xlu0 %v1676
    %v1692 = vpop.xlane.xlu0 %1691
    %v1693 = vsub.f32 %v1669, %v1678
    %v1694 = vsub.f32 %v1670, %v1680
    %v1695 = vsub.f32 %v1671, %v1682
    %v1696 = vsub.f32 %v1672, %v1684
    %v1697 = vsub.f32 %v1673, %v1686
    %v1698 = vsub.f32 %v1674, %v1688
    %v1699 = vsub.f32 %v1675, %v1690
    %v1700 = vsub.f32 %v1676, %v1692
    %v1701 = vmul.f32 %v1693, 1.442695
    %v1702 = vpow.pop %v1701
    %v1703 = vmul.f32 %v1694, 1.442695
    %v1704 = vpow.pop %v1703
    %v1705 = vmul.f32 %v1695, 1.442695
    %v1706 = vpow.pop %v1705
    %v1707 = vmul.f32 %v1696, 1.442695
    %v1708 = vpow.pop %v1707
    %v1709 = vmul.f32 %v1697, 1.442695
    %v1710 = vpow.pop %v1709
    %v1711 = vmul.f32 %v1698, 1.442695
    %v1712 = vpow.pop %v1711
    %v1713 = vmul.f32 %v1699, 1.442695
    %v1714 = vpow.pop %v1713
    %v1715 = vmul.f32 %v1700, 1.442695
    %v1716 = vpow.pop %v1715
    %1717 = vadd.xlane.f32.xlu0 %v1702
    %v1718 = vpop.xlane.xlu0 %1717
    %1719 = vadd.xlane.f32.xlu0 %v1704
    %v1720 = vpop.xlane.xlu0 %1719
    %1721 = vadd.xlane.f32.xlu0 %v1706
    %v1722 = vpop.xlane.xlu0 %1721
    %1723 = vadd.xlane.f32.xlu0 %v1708
    %v1724 = vpop.xlane.xlu0 %1723
    %1725 = vadd.xlane.f32.xlu0 %v1710
    %v1726 = vpop.xlane.xlu0 %1725
    %1727 = vadd.xlane.f32.xlu0 %v1712
    %v1728 = vpop.xlane.xlu0 %1727
    %1729 = vadd.xlane.f32.xlu0 %v1714
    %v1730 = vpop.xlane.xlu0 %1729
    %1731 = vadd.xlane.f32.xlu0 %v1716
    %v1732 = vpop.xlane.xlu0 %1731
    %v1733 = vlog2.pop %v1718
    %v1734 = vmul.f32 %v1733, 0.6931472
    %v1735 = vlog2.pop %v1720
    %v1736 = vmul.f32 %v1735, 0.6931472
    %v1737 = vlog2.pop %v1722
    %v1738 = vmul.f32 %v1737, 0.6931472
    %v1739 = vlog2.pop %v1724
    %v1740 = vmul.f32 %v1739, 0.6931472
    %v1741 = vlog2.pop %v1726
    %v1742 = vmul.f32 %v1741, 0.6931472
    %v1743 = vlog2.pop %v1728
    %v1744 = vmul.f32 %v1743, 0.6931472
    %v1745 = vlog2.pop %v1730
    %v1746 = vmul.f32 %v1745, 0.6931472
    %v1747 = vlog2.pop %v1732
    %v1748 = vmul.f32 %v1747, 0.6931472
    %v1749 = vadd.f32 %v1678, %v1734
    %v1750 = vadd.f32 %v1680, %v1736
    %v1751 = vadd.f32 %v1682, %v1738
    %v1752 = vadd.f32 %v1684, %v1740
    %v1753 = vadd.f32 %v1686, %v1742
    %v1754 = vadd.f32 %v1688, %v1744
    %v1755 = vadd.f32 %v1690, %v1746
    %v1756 = vadd.f32 %v1692, %v1748
    %v1765 = vlaneseq
    %v1766 = vshrl.u32 %v1765, 7
    %v1767 = vsub.s32 %v240, %v1766
    %v1768 = vrot.slane %v1749, %v1767
    %v1769 = vlaneseq
    %v1770 = vshrl.u32 %v1769, 7
    %v1771 = vsub.s32 %v240, %v1770
    %v1772 = vrot.slane %v1750, %v1771
    %v1773 = vlaneseq
    %v1774 = vshrl.u32 %v1773, 7
    %v1775 = vsub.s32 %v240, %v1774
    %v1776 = vrot.slane %v1751, %v1775
    %v1777 = vlaneseq
    %v1778 = vshrl.u32 %v1777, 7
    %v1779 = vsub.s32 %v240, %v1778
    %v1780 = vrot.slane %v1752, %v1779
    %v1781 = vlaneseq
    %v1782 = vshrl.u32 %v1781, 7
    %v1783 = vsub.s32 %v240, %v1782
    %v1784 = vrot.slane %v1753, %v1783
    %v1785 = vlaneseq
    %v1786 = vshrl.u32 %v1785, 7
    %v1787 = vsub.s32 %v240, %v1786
    %v1788 = vrot.slane %v1754, %v1787
    %v1789 = vlaneseq
    %v1790 = vshrl.u32 %v1789, 7
    %v1791 = vsub.s32 %v240, %v1790
    %v1792 = vrot.slane %v1755, %v1791
    %v1793 = vlaneseq
    %v1794 = vshrl.u32 %v1793, 7
    %v1795 = vsub.s32 %v240, %v1794
    %v1796 = vrot.slane %v1756, %v1795
    %v1797 = vsel %vm1325, %v1772, %v1768
    %v1798 = vsel %vm1327, %v1776, %v1797
    %v1799 = vsel %vm1329, %v1780, %v1798
    %v1800 = vsel %vm1331, %v1784, %v1799
    %v1801 = vsel %vm1333, %v1788, %v1800
    %v1802 = vsel %vm1335, %v1792, %v1801
    %v1803 = vsel %vm1337, %v1796, %v1802
    %v1805 = vsel %vm1340, %v1803, -1e+09
    %v1806 = vld [vmem:[#allocation9 + $0x18] sm:$0xff]
    %v1807 = vadd.f32 %v1805, %v1806
    %v1808 = vld [vmem:[%s9 + $0x18] sm:$0xff]
    %vm1809 = vcmp.gt.f32.partialorder %v1808, 0.0
    %v1810 = vsel %vm1809, %v1807, %v1578
    %v1812 = vcombine.high %v1810, %v1810
    %v1814 = vunpack.c.l.s4 1966171168
    %v1815 = vunpack.c.0.s8 %v1814
    %v1816 = vlaneseq
    %v1817 = vshrl.u32 %v1816, 7
    %v1818 = vsub.s32 %v1815, %v1817
    %v1819 = vrot.slane %v1810, %v1818
    %v1821 = vunpack.c.l.s4 1966171168
    %v1822 = vunpack.c.0.s8 %v1821
    %v1823 = vlaneseq
    %v1824 = vshrl.u32 %v1823, 7
    %v1825 = vsub.s32 %v1822, %v1824
    %v1826 = vrot.slane %v1812, %v1825
    %v1827 = vcombine.high %v1819, %v1819
    %v1828 = vcombine.high %v1826, %v1826
    %v1830 = vunpack.c.l.s4 1966171168
    %v1831 = vunpack.c.0.s8 %v1830
    %v1832 = vlaneseq
    %v1833 = vshrl.u32 %v1832, 7
    %v1834 = vsub.s32 %v1831, %v1833
    %v1835 = vrot.slane %v1819, %v1834
    %v1837 = vunpack.c.l.s4 1966171168
    %v1838 = vunpack.c.0.s8 %v1837
    %v1839 = vlaneseq
    %v1840 = vshrl.u32 %v1839, 7
    %v1841 = vsub.s32 %v1838, %v1840
    %v1842 = vrot.slane %v1826, %v1841
    %v1844 = vunpack.c.l.s4 1966171168
    %v1845 = vunpack.c.0.s8 %v1844
    %v1846 = vlaneseq
    %v1847 = vshrl.u32 %v1846, 7
    %v1848 = vsub.s32 %v1845, %v1847
    %v1849 = vrot.slane %v1827, %v1848
    %v1851 = vunpack.c.l.s4 1966171168
    %v1852 = vunpack.c.0.s8 %v1851
    %v1853 = vlaneseq
    %v1854 = vshrl.u32 %v1853, 7
    %v1855 = vsub.s32 %v1852, %v1854
    %v1856 = vrot.slane %v1828, %v1855
    %v1857 = vcombine.high %v1835, %v1835
    %v1858 = vcombine.high %v1842, %v1842
    %v1859 = vcombine.high %v1849, %v1849
    %v1860 = vcombine.high %v1856, %v1856
    %v1861 = vlaneseq
    %v1862 = vshrl.u32 %v1861, 7
    %v1863 = vsub.s32 0, %v1862
    %v1864 = vrot.slane %v1835, %v1863
    %v1865 = vlaneseq
    %v1866 = vshrl.u32 %v1865, 7
    %v1867 = vsub.s32 0, %v1866
    %v1868 = vrot.slane %v1849, %v1867
    %v1869 = vlaneseq
    %v1870 = vshrl.u32 %v1869, 7
    %v1871 = vsub.s32 0, %v1870
    %v1872 = vrot.slane %v1857, %v1871
    %v1873 = vlaneseq
    %v1874 = vshrl.u32 %v1873, 7
    %v1875 = vsub.s32 0, %v1874
    %v1876 = vrot.slane %v1859, %v1875
    %v1877 = vlaneseq
    %v1878 = vshrl.u32 %v1877, 7
    %v1879 = vsub.s32 0, %v1878
    %v1880 = vrot.slane %v1842, %v1879
    %v1881 = vlaneseq
    %v1882 = vshrl.u32 %v1881, 7
    %v1883 = vsub.s32 0, %v1882
    %v1884 = vrot.slane %v1856, %v1883
    %v1885 = vlaneseq
    %v1886 = vshrl.u32 %v1885, 7
    %v1887 = vsub.s32 0, %v1886
    %v1888 = vrot.slane %v1858, %v1887
    %v1889 = vlaneseq
    %v1890 = vshrl.u32 %v1889, 7
    %v1891 = vsub.s32 0, %v1890
    %v1892 = vrot.slane %v1860, %v1891
    %v1901 = vadd.f32 %v1864, %v1097
    %v1902 = vadd.f32 %v1868, %v1097
    %v1903 = vadd.f32 %v1872, %v1097
    %v1904 = vadd.f32 %v1876, %v1097
    %v1905 = vadd.f32 %v1880, %v1097
    %v1906 = vadd.f32 %v1884, %v1097
    %v1907 = vadd.f32 %v1888, %v1097
    %v1908 = vadd.f32 %v1892, %v1097
    %1909 = vmax.xlane.f32.xlu0 %v1901
    %v1910 = vpop.xlane.xlu0 %1909
    %1911 = vmax.xlane.f32.xlu0 %v1902
    %v1912 = vpop.xlane.xlu0 %1911
    %1913 = vmax.xlane.f32.xlu0 %v1903
    %v1914 = vpop.xlane.xlu0 %1913
    %1915 = vmax.xlane.f32.xlu0 %v1904
    %v1916 = vpop.xlane.xlu0 %1915
    %1917 = vmax.xlane.f32.xlu0 %v1905
    %v1918 = vpop.xlane.xlu0 %1917
    %1919 = vmax.xlane.f32.xlu0 %v1906
    %v1920 = vpop.xlane.xlu0 %1919
    %1921 = vmax.xlane.f32.xlu0 %v1907
    %v1922 = vpop.xlane.xlu0 %1921
    %1923 = vmax.xlane.f32.xlu0 %v1908
    %v1924 = vpop.xlane.xlu0 %1923
    %v1925 = vsub.f32 %v1901, %v1910
    %v1926 = vsub.f32 %v1902, %v1912
    %v1927 = vsub.f32 %v1903, %v1914
    %v1928 = vsub.f32 %v1904, %v1916
    %v1929 = vsub.f32 %v1905, %v1918
    %v1930 = vsub.f32 %v1906, %v1920
    %v1931 = vsub.f32 %v1907, %v1922
    %v1932 = vsub.f32 %v1908, %v1924
    %v1933 = vmul.f32 %v1925, 1.442695
    %v1934 = vpow.pop %v1933
    %v1935 = vmul.f32 %v1926, 1.442695
    %v1936 = vpow.pop %v1935
    %v1937 = vmul.f32 %v1927, 1.442695
    %v1938 = vpow.pop %v1937
    %v1939 = vmul.f32 %v1928, 1.442695
    %v1940 = vpow.pop %v1939
    %v1941 = vmul.f32 %v1929, 1.442695
    %v1942 = vpow.pop %v1941
    %v1943 = vmul.f32 %v1930, 1.442695
    %v1944 = vpow.pop %v1943
    %v1945 = vmul.f32 %v1931, 1.442695
    %v1946 = vpow.pop %v1945
    %v1947 = vmul.f32 %v1932, 1.442695
    %v1948 = vpow.pop %v1947
    %1949 = vadd.xlane.f32.xlu0 %v1934
    %v1950 = vpop.xlane.xlu0 %1949
    %1951 = vadd.xlane.f32.xlu0 %v1936
    %v1952 = vpop.xlane.xlu0 %1951
    %1953 = vadd.xlane.f32.xlu0 %v1938
    %v1954 = vpop.xlane.xlu0 %1953
    %1955 = vadd.xlane.f32.xlu0 %v1940
    %v1956 = vpop.xlane.xlu0 %1955
    %1957 = vadd.xlane.f32.xlu0 %v1942
    %v1958 = vpop.xlane.xlu0 %1957
    %1959 = vadd.xlane.f32.xlu0 %v1944
    %v1960 = vpop.xlane.xlu0 %1959
    %1961 = vadd.xlane.f32.xlu0 %v1946
    %v1962 = vpop.xlane.xlu0 %1961
    %1963 = vadd.xlane.f32.xlu0 %v1948
    %v1964 = vpop.xlane.xlu0 %1963
    %v1965 = vlog2.pop %v1950
    %v1966 = vmul.f32 %v1965, 0.6931472
    %v1967 = vlog2.pop %v1952
    %v1968 = vmul.f32 %v1967, 0.6931472
    %v1969 = vlog2.pop %v1954
    %v1970 = vmul.f32 %v1969, 0.6931472
    %v1971 = vlog2.pop %v1956
    %v1972 = vmul.f32 %v1971, 0.6931472
    %v1973 = vlog2.pop %v1958
    %v1974 = vmul.f32 %v1973, 0.6931472
    %v1975 = vlog2.pop %v1960
    %v1976 = vmul.f32 %v1975, 0.6931472
    %v1977 = vlog2.pop %v1962
    %v1978 = vmul.f32 %v1977, 0.6931472
    %v1979 = vlog2.pop %v1964
    %v1980 = vmul.f32 %v1979, 0.6931472
    %v1981 = vadd.f32 %v1910, %v1966
    %v1982 = vadd.f32 %v1912, %v1968
    %v1983 = vadd.f32 %v1914, %v1970
    %v1984 = vadd.f32 %v1916, %v1972
    %v1985 = vadd.f32 %v1918, %v1974
    %v1986 = vadd.f32 %v1920, %v1976
    %v1987 = vadd.f32 %v1922, %v1978
    %v1988 = vadd.f32 %v1924, %v1980
    %v1997 = vlaneseq
    %v1998 = vshrl.u32 %v1997, 7
    %v1999 = vsub.s32 %v240, %v1998
    %v2000 = vrot.slane %v1981, %v1999
    %v2001 = vlaneseq
    %v2002 = vshrl.u32 %v2001, 7
    %v2003 = vsub.s32 %v240, %v2002
    %v2004 = vrot.slane %v1982, %v2003
    %v2005 = vlaneseq
    %v2006 = vshrl.u32 %v2005, 7
    %v2007 = vsub.s32 %v240, %v2006
    %v2008 = vrot.slane %v1983, %v2007
    %v2009 = vlaneseq
    %v2010 = vshrl.u32 %v2009, 7
    %v2011 = vsub.s32 %v240, %v2010
    %v2012 = vrot.slane %v1984, %v2011
    %v2013 = vlaneseq
    %v2014 = vshrl.u32 %v2013, 7
    %v2015 = vsub.s32 %v240, %v2014
    %v2016 = vrot.slane %v1985, %v2015
    %v2017 = vlaneseq
    %v2018 = vshrl.u32 %v2017, 7
    %v2019 = vsub.s32 %v240, %v2018
    %v2020 = vrot.slane %v1986, %v2019
    %v2021 = vlaneseq
    %v2022 = vshrl.u32 %v2021, 7
    %v2023 = vsub.s32 %v240, %v2022
    %v2024 = vrot.slane %v1987, %v2023
    %v2025 = vlaneseq
    %v2026 = vshrl.u32 %v2025, 7
    %v2027 = vsub.s32 %v240, %v2026
    %v2028 = vrot.slane %v1988, %v2027
    %v2029 = vsel %vm1325, %v2004, %v2000
    %v2030 = vsel %vm1327, %v2008, %v2029
    %v2031 = vsel %vm1329, %v2012, %v2030
    %v2032 = vsel %vm1331, %v2016, %v2031
    %v2033 = vsel %vm1333, %v2020, %v2032
    %v2034 = vsel %vm1335, %v2024, %v2033
    %v2035 = vsel %vm1337, %v2028, %v2034
    %v2037 = vsel %vm1340, %v2035, -1e+09
    %v2038 = vld [vmem:[#allocation9 + $0x20] sm:$0xff]
    %v2039 = vadd.f32 %v2037, %v2038
    %v2040 = vld [vmem:[%s9 + $0x20] sm:$0xff]
    %vm2041 = vcmp.gt.f32.partialorder %v2040, 0.0
    %v2042 = vsel %vm2041, %v2039, %v1810
    %v2044 = vcombine.high %v2042, %v2042
    %v2046 = vunpack.c.l.s4 1966171168
    %v2047 = vunpack.c.0.s8 %v2046
    %v2048 = vlaneseq
    %v2049 = vshrl.u32 %v2048, 7
    %v2050 = vsub.s32 %v2047, %v2049
    %v2051 = vrot.slane %v2042, %v2050
    %v2053 = vunpack.c.l.s4 1966171168
    %v2054 = vunpack.c.0.s8 %v2053
    %v2055 = vlaneseq
    %v2056 = vshrl.u32 %v2055, 7
    %v2057 = vsub.s32 %v2054, %v2056
    %v2058 = vrot.slane %v2044, %v2057
    %v2059 = vcombine.high %v2051, %v2051
    %v2060 = vcombine.high %v2058, %v2058
    %v2062 = vunpack.c.l.s4 1966171168
    %v2063 = vunpack.c.0.s8 %v2062
    %v2064 = vlaneseq
    %v2065 = vshrl.u32 %v2064, 7
    %v2066 = vsub.s32 %v2063, %v2065
    %v2067 = vrot.slane %v2051, %v2066
    %v2069 = vunpack.c.l.s4 1966171168
    %v2070 = vunpack.c.0.s8 %v2069
    %v2071 = vlaneseq
    %v2072 = vshrl.u32 %v2071, 7
    %v2073 = vsub.s32 %v2070, %v2072
    %v2074 = vrot.slane %v2058, %v2073
    %v2076 = vunpack.c.l.s4 1966171168
    %v2077 = vunpack.c.0.s8 %v2076
    %v2078 = vlaneseq
    %v2079 = vshrl.u32 %v2078, 7
    %v2080 = vsub.s32 %v2077, %v2079
    %v2081 = vrot.slane %v2059, %v2080
    %v2083 = vunpack.c.l.s4 1966171168
    %v2084 = vunpack.c.0.s8 %v2083
    %v2085 = vlaneseq
    %v2086 = vshrl.u32 %v2085, 7
    %v2087 = vsub.s32 %v2084, %v2086
    %v2088 = vrot.slane %v2060, %v2087
    %v2089 = vcombine.high %v2067, %v2067
    %v2090 = vcombine.high %v2074, %v2074
    %v2091 = vcombine.high %v2081, %v2081
    %v2092 = vcombine.high %v2088, %v2088
    %v2093 = vlaneseq
    %v2094 = vshrl.u32 %v2093, 7
    %v2095 = vsub.s32 0, %v2094
    %v2096 = vrot.slane %v2067, %v2095
    %v2097 = vlaneseq
    %v2098 = vshrl.u32 %v2097, 7
    %v2099 = vsub.s32 0, %v2098
    %v2100 = vrot.slane %v2081, %v2099
    %v2101 = vlaneseq
    %v2102 = vshrl.u32 %v2101, 7
    %v2103 = vsub.s32 0, %v2102
    %v2104 = vrot.slane %v2089, %v2103
    %v2105 = vlaneseq
    %v2106 = vshrl.u32 %v2105, 7
    %v2107 = vsub.s32 0, %v2106
    %v2108 = vrot.slane %v2091, %v2107
    %v2109 = vlaneseq
    %v2110 = vshrl.u32 %v2109, 7
    %v2111 = vsub.s32 0, %v2110
    %v2112 = vrot.slane %v2074, %v2111
    %v2113 = vlaneseq
    %v2114 = vshrl.u32 %v2113, 7
    %v2115 = vsub.s32 0, %v2114
    %v2116 = vrot.slane %v2088, %v2115
    %v2117 = vlaneseq
    %v2118 = vshrl.u32 %v2117, 7
    %v2119 = vsub.s32 0, %v2118
    %v2120 = vrot.slane %v2090, %v2119
    %v2121 = vlaneseq
    %v2122 = vshrl.u32 %v2121, 7
    %v2123 = vsub.s32 0, %v2122
    %v2124 = vrot.slane %v2092, %v2123
    %v2133 = vadd.f32 %v2096, %v1097
    %v2134 = vadd.f32 %v2100, %v1097
    %v2135 = vadd.f32 %v2104, %v1097
    %v2136 = vadd.f32 %v2108, %v1097
    %v2137 = vadd.f32 %v2112, %v1097
    %v2138 = vadd.f32 %v2116, %v1097
    %v2139 = vadd.f32 %v2120, %v1097
    %v2140 = vadd.f32 %v2124, %v1097
    %2141 = vmax.xlane.f32.xlu0 %v2133
    %v2142 = vpop.xlane.xlu0 %2141
    %2143 = vmax.xlane.f32.xlu0 %v2134
    %v2144 = vpop.xlane.xlu0 %2143
    %2145 = vmax.xlane.f32.xlu0 %v2135
    %v2146 = vpop.xlane.xlu0 %2145
    %2147 = vmax.xlane.f32.xlu0 %v2136
    %v2148 = vpop.xlane.xlu0 %2147
    %2149 = vmax.xlane.f32.xlu0 %v2137
    %v2150 = vpop.xlane.xlu0 %2149
    %2151 = vmax.xlane.f32.xlu0 %v2138
    %v2152 = vpop.xlane.xlu0 %2151
    %2153 = vmax.xlane.f32.xlu0 %v2139
    %v2154 = vpop.xlane.xlu0 %2153
    %2155 = vmax.xlane.f32.xlu0 %v2140
    %v2156 = vpop.xlane.xlu0 %2155
    %v2157 = vsub.f32 %v2133, %v2142
    %v2158 = vsub.f32 %v2134, %v2144
    %v2159 = vsub.f32 %v2135, %v2146
    %v2160 = vsub.f32 %v2136, %v2148
    %v2161 = vsub.f32 %v2137, %v2150
    %v2162 = vsub.f32 %v2138, %v2152
    %v2163 = vsub.f32 %v2139, %v2154
    %v2164 = vsub.f32 %v2140, %v2156
    %v2165 = vmul.f32 %v2157, 1.442695
    %v2166 = vpow.pop %v2165
    %v2167 = vmul.f32 %v2158, 1.442695
    %v2168 = vpow.pop %v2167
    %v2169 = vmul.f32 %v2159, 1.442695
    %v2170 = vpow.pop %v2169
    %v2171 = vmul.f32 %v2160, 1.442695
    %v2172 = vpow.pop %v2171
    %v2173 = vmul.f32 %v2161, 1.442695
    %v2174 = vpow.pop %v2173
    %v2175 = vmul.f32 %v2162, 1.442695
    %v2176 = vpow.pop %v2175
    %v2177 = vmul.f32 %v2163, 1.442695
    %v2178 = vpow.pop %v2177
    %v2179 = vmul.f32 %v2164, 1.442695
    %v2180 = vpow.pop %v2179
    %2181 = vadd.xlane.f32.xlu0 %v2166
    %v2182 = vpop.xlane.xlu0 %2181
    %2183 = vadd.xlane.f32.xlu0 %v2168
    %v2184 = vpop.xlane.xlu0 %2183
    %2185 = vadd.xlane.f32.xlu0 %v2170
    %v2186 = vpop.xlane.xlu0 %2185
    %2187 = vadd.xlane.f32.xlu0 %v2172
    %v2188 = vpop.xlane.xlu0 %2187
    %2189 = vadd.xlane.f32.xlu0 %v2174
    %v2190 = vpop.xlane.xlu0 %2189
    %2191 = vadd.xlane.f32.xlu0 %v2176
    %v2192 = vpop.xlane.xlu0 %2191
    %2193 = vadd.xlane.f32.xlu0 %v2178
    %v2194 = vpop.xlane.xlu0 %2193
    %2195 = vadd.xlane.f32.xlu0 %v2180
    %v2196 = vpop.xlane.xlu0 %2195
    %v2197 = vlog2.pop %v2182
    %v2198 = vmul.f32 %v2197, 0.6931472
    %v2199 = vlog2.pop %v2184
    %v2200 = vmul.f32 %v2199, 0.6931472
    %v2201 = vlog2.pop %v2186
    %v2202 = vmul.f32 %v2201, 0.6931472
    %v2203 = vlog2.pop %v2188
    %v2204 = vmul.f32 %v2203, 0.6931472
    %v2205 = vlog2.pop %v2190
    %v2206 = vmul.f32 %v2205, 0.6931472
    %v2207 = vlog2.pop %v2192
    %v2208 = vmul.f32 %v2207, 0.6931472
    %v2209 = vlog2.pop %v2194
    %v2210 = vmul.f32 %v2209, 0.6931472
    %v2211 = vlog2.pop %v2196
    %v2212 = vmul.f32 %v2211, 0.6931472
    %v2213 = vadd.f32 %v2142, %v2198
    %v2214 = vadd.f32 %v2144, %v2200
    %v2215 = vadd.f32 %v2146, %v2202
    %v2216 = vadd.f32 %v2148, %v2204
    %v2217 = vadd.f32 %v2150, %v2206
    %v2218 = vadd.f32 %v2152, %v2208
    %v2219 = vadd.f32 %v2154, %v2210
    %v2220 = vadd.f32 %v2156, %v2212
    %v2229 = vlaneseq
    %v2230 = vshrl.u32 %v2229, 7
    %v2231 = vsub.s32 %v240, %v2230
    %v2232 = vrot.slane %v2213, %v2231
    %v2233 = vlaneseq
    %v2234 = vshrl.u32 %v2233, 7
    %v2235 = vsub.s32 %v240, %v2234
    %v2236 = vrot.slane %v2214, %v2235
    %v2237 = vlaneseq
    %v2238 = vshrl.u32 %v2237, 7
    %v2239 = vsub.s32 %v240, %v2238
    %v2240 = vrot.slane %v2215, %v2239
    %v2241 = vlaneseq
    %v2242 = vshrl.u32 %v2241, 7
    %v2243 = vsub.s32 %v240, %v2242
    %v2244 = vrot.slane %v2216, %v2243
    %v2245 = vlaneseq
    %v2246 = vshrl.u32 %v2245, 7
    %v2247 = vsub.s32 %v240, %v2246
    %v2248 = vrot.slane %v2217, %v2247
    %v2249 = vlaneseq
    %v2250 = vshrl.u32 %v2249, 7
    %v2251 = vsub.s32 %v240, %v2250
    %v2252 = vrot.slane %v2218, %v2251
    %v2253 = vlaneseq
    %v2254 = vshrl.u32 %v2253, 7
    %v2255 = vsub.s32 %v240, %v2254
    %v2256 = vrot.slane %v2219, %v2255
    %v2257 = vlaneseq
    %v2258 = vshrl.u32 %v2257, 7
    %v2259 = vsub.s32 %v240, %v2258
    %v2260 = vrot.slane %v2220, %v2259
    %v2261 = vsel %vm1325, %v2236, %v2232
    %v2262 = vsel %vm1327, %v2240, %v2261
    %v2263 = vsel %vm1329, %v2244, %v2262
    %v2264 = vsel %vm1331, %v2248, %v2263
    %v2265 = vsel %vm1333, %v2252, %v2264
    %v2266 = vsel %vm1335, %v2256, %v2265
    %v2267 = vsel %vm1337, %v2260, %v2266
    %v2269 = vsel %vm1340, %v2267, -1e+09
    %v2270 = vld [vmem:[#allocation9 + $0x28] sm:$0xff]
    %v2271 = vadd.f32 %v2269, %v2270
    %v2272 = vld [vmem:[%s9 + $0x28] sm:$0xff]
    %vm2273 = vcmp.gt.f32.partialorder %v2272, 0.0
    %v2274 = vsel %vm2273, %v2271, %v2042
    %v2276 = vcombine.high %v2274, %v2274
    %v2278 = vunpack.c.l.s4 1966171168
    %v2279 = vunpack.c.0.s8 %v2278
    %v2280 = vlaneseq
    %v2281 = vshrl.u32 %v2280, 7
    %v2282 = vsub.s32 %v2279, %v2281
    %v2283 = vrot.slane %v2274, %v2282
    %v2285 = vunpack.c.l.s4 1966171168
    %v2286 = vunpack.c.0.s8 %v2285
    %v2287 = vlaneseq
    %v2288 = vshrl.u32 %v2287, 7
    %v2289 = vsub.s32 %v2286, %v2288
    %v2290 = vrot.slane %v2276, %v2289
    %v2291 = vcombine.high %v2283, %v2283
    %v2292 = vcombine.high %v2290, %v2290
    %v2294 = vunpack.c.l.s4 1966171168
    %v2295 = vunpack.c.0.s8 %v2294
    %v2296 = vlaneseq
    %v2297 = vshrl.u32 %v2296, 7
    %v2298 = vsub.s32 %v2295, %v2297
    %v2299 = vrot.slane %v2283, %v2298
    %v2301 = vunpack.c.l.s4 1966171168
    %v2302 = vunpack.c.0.s8 %v2301
    %v2303 = vlaneseq
    %v2304 = vshrl.u32 %v2303, 7
    %v2305 = vsub.s32 %v2302, %v2304
    %v2306 = vrot.slane %v2290, %v2305
    %v2308 = vunpack.c.l.s4 1966171168
    %v2309 = vunpack.c.0.s8 %v2308
    %v2310 = vlaneseq
    %v2311 = vshrl.u32 %v2310, 7
    %v2312 = vsub.s32 %v2309, %v2311
    %v2313 = vrot.slane %v2291, %v2312
    %v2315 = vunpack.c.l.s4 1966171168
    %v2316 = vunpack.c.0.s8 %v2315
    %v2317 = vlaneseq
    %v2318 = vshrl.u32 %v2317, 7
    %v2319 = vsub.s32 %v2316, %v2318
    %v2320 = vrot.slane %v2292, %v2319
    %v2321 = vcombine.high %v2299, %v2299
    %v2322 = vcombine.high %v2306, %v2306
    %v2323 = vcombine.high %v2313, %v2313
    %v2324 = vcombine.high %v2320, %v2320
    %v2325 = vlaneseq
    %v2326 = vshrl.u32 %v2325, 7
    %v2327 = vsub.s32 0, %v2326
    %v2328 = vrot.slane %v2299, %v2327
    %v2329 = vlaneseq
    %v2330 = vshrl.u32 %v2329, 7
    %v2331 = vsub.s32 0, %v2330
    %v2332 = vrot.slane %v2313, %v2331
    %v2333 = vlaneseq
    %v2334 = vshrl.u32 %v2333, 7
    %v2335 = vsub.s32 0, %v2334
    %v2336 = vrot.slane %v2321, %v2335
    %v2337 = vlaneseq
    %v2338 = vshrl.u32 %v2337, 7
    %v2339 = vsub.s32 0, %v2338
    %v2340 = vrot.slane %v2323, %v2339
    %v2341 = vlaneseq
    %v2342 = vshrl.u32 %v2341, 7
    %v2343 = vsub.s32 0, %v2342
    %v2344 = vrot.slane %v2306, %v2343
    %v2345 = vlaneseq
    %v2346 = vshrl.u32 %v2345, 7
    %v2347 = vsub.s32 0, %v2346
    %v2348 = vrot.slane %v2320, %v2347
    %v2349 = vlaneseq
    %v2350 = vshrl.u32 %v2349, 7
    %v2351 = vsub.s32 0, %v2350
    %v2352 = vrot.slane %v2322, %v2351
    %v2353 = vlaneseq
    %v2354 = vshrl.u32 %v2353, 7
    %v2355 = vsub.s32 0, %v2354
    %v2356 = vrot.slane %v2324, %v2355
    %v2365 = vadd.f32 %v2328, %v1097
    %v2366 = vadd.f32 %v2332, %v1097
    %v2367 = vadd.f32 %v2336, %v1097
    %v2368 = vadd.f32 %v2340, %v1097
    %v2369 = vadd.f32 %v2344, %v1097
    %v2370 = vadd.f32 %v2348, %v1097
    %v2371 = vadd.f32 %v2352, %v1097
    %v2372 = vadd.f32 %v2356, %v1097
    %2373 = vmax.xlane.f32.xlu0 %v2365
    %v2374 = vpop.xlane.xlu0 %2373
    %2375 = vmax.xlane.f32.xlu0 %v2366
    %v2376 = vpop.xlane.xlu0 %2375
    %2377 = vmax.xlane.f32.xlu0 %v2367
    %v2378 = vpop.xlane.xlu0 %2377
    %2379 = vmax.xlane.f32.xlu0 %v2368
    %v2380 = vpop.xlane.xlu0 %2379
    %2381 = vmax.xlane.f32.xlu0 %v2369
    %v2382 = vpop.xlane.xlu0 %2381
    %2383 = vmax.xlane.f32.xlu0 %v2370
    %v2384 = vpop.xlane.xlu0 %2383
    %2385 = vmax.xlane.f32.xlu0 %v2371
    %v2386 = vpop.xlane.xlu0 %2385
    %2387 = vmax.xlane.f32.xlu0 %v2372
    %v2388 = vpop.xlane.xlu0 %2387
    %v2389 = vsub.f32 %v2365, %v2374
    %v2390 = vsub.f32 %v2366, %v2376
    %v2391 = vsub.f32 %v2367, %v2378
    %v2392 = vsub.f32 %v2368, %v2380
    %v2393 = vsub.f32 %v2369, %v2382
    %v2394 = vsub.f32 %v2370, %v2384
    %v2395 = vsub.f32 %v2371, %v2386
    %v2396 = vsub.f32 %v2372, %v2388
    %v2397 = vmul.f32 %v2389, 1.442695
    %v2398 = vpow.pop %v2397
    %v2399 = vmul.f32 %v2390, 1.442695
    %v2400 = vpow.pop %v2399
    %v2401 = vmul.f32 %v2391, 1.442695
    %v2402 = vpow.pop %v2401
    %v2403 = vmul.f32 %v2392, 1.442695
    %v2404 = vpow.pop %v2403
    %v2405 = vmul.f32 %v2393, 1.442695
    %v2406 = vpow.pop %v2405
    %v2407 = vmul.f32 %v2394, 1.442695
    %v2408 = vpow.pop %v2407
    %v2409 = vmul.f32 %v2395, 1.442695
    %v2410 = vpow.pop %v2409
    %v2411 = vmul.f32 %v2396, 1.442695
    %v2412 = vpow.pop %v2411
    %2413 = vadd.xlane.f32.xlu0 %v2398
    %v2414 = vpop.xlane.xlu0 %2413
    %2415 = vadd.xlane.f32.xlu0 %v2400
    %v2416 = vpop.xlane.xlu0 %2415
    %2417 = vadd.xlane.f32.xlu0 %v2402
    %v2418 = vpop.xlane.xlu0 %2417
    %2419 = vadd.xlane.f32.xlu0 %v2404
    %v2420 = vpop.xlane.xlu0 %2419
    %2421 = vadd.xlane.f32.xlu0 %v2406
    %v2422 = vpop.xlane.xlu0 %2421
    %2423 = vadd.xlane.f32.xlu0 %v2408
    %v2424 = vpop.xlane.xlu0 %2423
    %2425 = vadd.xlane.f32.xlu0 %v2410
    %v2426 = vpop.xlane.xlu0 %2425
    %2427 = vadd.xlane.f32.xlu0 %v2412
    %v2428 = vpop.xlane.xlu0 %2427
    %v2429 = vlog2.pop %v2414
    %v2430 = vmul.f32 %v2429, 0.6931472
    %v2431 = vlog2.pop %v2416
    %v2432 = vmul.f32 %v2431, 0.6931472
    %v2433 = vlog2.pop %v2418
    %v2434 = vmul.f32 %v2433, 0.6931472
    %v2435 = vlog2.pop %v2420
    %v2436 = vmul.f32 %v2435, 0.6931472
    %v2437 = vlog2.pop %v2422
    %v2438 = vmul.f32 %v2437, 0.6931472
    %v2439 = vlog2.pop %v2424
    %v2440 = vmul.f32 %v2439, 0.6931472
    %v2441 = vlog2.pop %v2426
    %v2442 = vmul.f32 %v2441, 0.6931472
    %v2443 = vlog2.pop %v2428
    %v2444 = vmul.f32 %v2443, 0.6931472
    %v2445 = vadd.f32 %v2374, %v2430
    %v2446 = vadd.f32 %v2376, %v2432
    %v2447 = vadd.f32 %v2378, %v2434
    %v2448 = vadd.f32 %v2380, %v2436
    %v2449 = vadd.f32 %v2382, %v2438
    %v2450 = vadd.f32 %v2384, %v2440
    %v2451 = vadd.f32 %v2386, %v2442
    %v2452 = vadd.f32 %v2388, %v2444
    %v2461 = vlaneseq
    %v2462 = vshrl.u32 %v2461, 7
    %v2463 = vsub.s32 %v240, %v2462
    %v2464 = vrot.slane %v2445, %v2463
    %v2465 = vlaneseq
    %v2466 = vshrl.u32 %v2465, 7
    %v2467 = vsub.s32 %v240, %v2466
    %v2468 = vrot.slane %v2446, %v2467
    %v2469 = vlaneseq
    %v2470 = vshrl.u32 %v2469, 7
    %v2471 = vsub.s32 %v240, %v2470
    %v2472 = vrot.slane %v2447, %v2471
    %v2473 = vlaneseq
    %v2474 = vshrl.u32 %v2473, 7
    %v2475 = vsub.s32 %v240, %v2474
    %v2476 = vrot.slane %v2448, %v2475
    %v2477 = vlaneseq
    %v2478 = vshrl.u32 %v2477, 7
    %v2479 = vsub.s32 %v240, %v2478
    %v2480 = vrot.slane %v2449, %v2479
    %v2481 = vlaneseq
    %v2482 = vshrl.u32 %v2481, 7
    %v2483 = vsub.s32 %v240, %v2482
    %v2484 = vrot.slane %v2450, %v2483
    %v2485 = vlaneseq
    %v2486 = vshrl.u32 %v2485, 7
    %v2487 = vsub.s32 %v240, %v2486
    %v2488 = vrot.slane %v2451, %v2487
    %v2489 = vlaneseq
    %v2490 = vshrl.u32 %v2489, 7
    %v2491 = vsub.s32 %v240, %v2490
    %v2492 = vrot.slane %v2452, %v2491
    %v2493 = vsel %vm1325, %v2468, %v2464
    %v2494 = vsel %vm1327, %v2472, %v2493
    %v2495 = vsel %vm1329, %v2476, %v2494
    %v2496 = vsel %vm1331, %v2480, %v2495
    %v2497 = vsel %vm1333, %v2484, %v2496
    %v2498 = vsel %vm1335, %v2488, %v2497
    %v2499 = vsel %vm1337, %v2492, %v2498
    %v2501 = vsel %vm1340, %v2499, -1e+09
    %v2502 = vld [vmem:[#allocation9 + $0x30] sm:$0xff]
    %v2503 = vadd.f32 %v2501, %v2502
    %v2504 = vld [vmem:[%s9 + $0x30] sm:$0xff]
    %vm2505 = vcmp.gt.f32.partialorder %v2504, 0.0
    %v2506 = vsel %vm2505, %v2503, %v2274
    %v2508 = vcombine.high %v2506, %v2506
    %v2510 = vunpack.c.l.s4 1966171168
    %v2511 = vunpack.c.0.s8 %v2510
    %v2512 = vlaneseq
    %v2513 = vshrl.u32 %v2512, 7
    %v2514 = vsub.s32 %v2511, %v2513
    %v2515 = vrot.slane %v2506, %v2514
    %v2517 = vunpack.c.l.s4 1966171168
    %v2518 = vunpack.c.0.s8 %v2517
    %v2519 = vlaneseq
    %v2520 = vshrl.u32 %v2519, 7
    %v2521 = vsub.s32 %v2518, %v2520
    %v2522 = vrot.slane %v2508, %v2521
    %v2523 = vcombine.high %v2515, %v2515
    %v2524 = vcombine.high %v2522, %v2522
    %v2526 = vunpack.c.l.s4 1966171168
    %v2527 = vunpack.c.0.s8 %v2526
    %v2528 = vlaneseq
    %v2529 = vshrl.u32 %v2528, 7
    %v2530 = vsub.s32 %v2527, %v2529
    %v2531 = vrot.slane %v2515, %v2530
    %v2533 = vunpack.c.l.s4 1966171168
    %v2534 = vunpack.c.0.s8 %v2533
    %v2535 = vlaneseq
    %v2536 = vshrl.u32 %v2535, 7
    %v2537 = vsub.s32 %v2534, %v2536
    %v2538 = vrot.slane %v2522, %v2537
    %v2540 = vunpack.c.l.s4 1966171168
    %v2541 = vunpack.c.0.s8 %v2540
    %v2542 = vlaneseq
    %v2543 = vshrl.u32 %v2542, 7
    %v2544 = vsub.s32 %v2541, %v2543
    %v2545 = vrot.slane %v2523, %v2544
    %v2547 = vunpack.c.l.s4 1966171168
    %v2548 = vunpack.c.0.s8 %v2547
    %v2549 = vlaneseq
    %v2550 = vshrl.u32 %v2549, 7
    %v2551 = vsub.s32 %v2548, %v2550
    %v2552 = vrot.slane %v2524, %v2551
    %v2553 = vcombine.high %v2531, %v2531
    %v2554 = vcombine.high %v2538, %v2538
    %v2555 = vcombine.high %v2545, %v2545
    %v2556 = vcombine.high %v2552, %v2552
    %v2557 = vlaneseq
    %v2558 = vshrl.u32 %v2557, 7
    %v2559 = vsub.s32 0, %v2558
    %v2560 = vrot.slane %v2531, %v2559
    %v2561 = vlaneseq
    %v2562 = vshrl.u32 %v2561, 7
    %v2563 = vsub.s32 0, %v2562
    %v2564 = vrot.slane %v2545, %v2563
    %v2565 = vlaneseq
    %v2566 = vshrl.u32 %v2565, 7
    %v2567 = vsub.s32 0, %v2566
    %v2568 = vrot.slane %v2553, %v2567
    %v2569 = vlaneseq
    %v2570 = vshrl.u32 %v2569, 7
    %v2571 = vsub.s32 0, %v2570
    %v2572 = vrot.slane %v2555, %v2571
    %v2573 = vlaneseq
    %v2574 = vshrl.u32 %v2573, 7
    %v2575 = vsub.s32 0, %v2574
    %v2576 = vrot.slane %v2538, %v2575
    %v2577 = vlaneseq
    %v2578 = vshrl.u32 %v2577, 7
    %v2579 = vsub.s32 0, %v2578
    %v2580 = vrot.slane %v2552, %v2579
    %v2581 = vlaneseq
    %v2582 = vshrl.u32 %v2581, 7
    %v2583 = vsub.s32 0, %v2582
    %v2584 = vrot.slane %v2554, %v2583
    %v2585 = vlaneseq
    %v2586 = vshrl.u32 %v2585, 7
    %v2587 = vsub.s32 0, %v2586
    %v2588 = vrot.slane %v2556, %v2587
    %v2597 = vadd.f32 %v2560, %v1097
    %v2598 = vadd.f32 %v2564, %v1097
    %v2599 = vadd.f32 %v2568, %v1097
    %v2600 = vadd.f32 %v2572, %v1097
    %v2601 = vadd.f32 %v2576, %v1097
    %v2602 = vadd.f32 %v2580, %v1097
    %v2603 = vadd.f32 %v2584, %v1097
    %v2604 = vadd.f32 %v2588, %v1097
    %2605 = vmax.xlane.f32.xlu0 %v2597
    %v2606 = vpop.xlane.xlu0 %2605
    %2607 = vmax.xlane.f32.xlu0 %v2598
    %v2608 = vpop.xlane.xlu0 %2607
    %2609 = vmax.xlane.f32.xlu0 %v2599
    %v2610 = vpop.xlane.xlu0 %2609
    %2611 = vmax.xlane.f32.xlu0 %v2600
    %v2612 = vpop.xlane.xlu0 %2611
    %2613 = vmax.xlane.f32.xlu0 %v2601
    %v2614 = vpop.xlane.xlu0 %2613
    %2615 = vmax.xlane.f32.xlu0 %v2602
    %v2616 = vpop.xlane.xlu0 %2615
    %2617 = vmax.xlane.f32.xlu0 %v2603
    %v2618 = vpop.xlane.xlu0 %2617
    %2619 = vmax.xlane.f32.xlu0 %v2604
    %v2620 = vpop.xlane.xlu0 %2619
    %v2621 = vsub.f32 %v2597, %v2606
    %v2622 = vsub.f32 %v2598, %v2608
    %v2623 = vsub.f32 %v2599, %v2610
    %v2624 = vsub.f32 %v2600, %v2612
    %v2625 = vsub.f32 %v2601, %v2614
    %v2626 = vsub.f32 %v2602, %v2616
    %v2627 = vsub.f32 %v2603, %v2618
    %v2628 = vsub.f32 %v2604, %v2620
    %v2629 = vmul.f32 %v2621, 1.442695
    %v2630 = vpow.pop %v2629
    %v2631 = vmul.f32 %v2622, 1.442695
    %v2632 = vpow.pop %v2631
    %v2633 = vmul.f32 %v2623, 1.442695
    %v2634 = vpow.pop %v2633
    %v2635 = vmul.f32 %v2624, 1.442695
    %v2636 = vpow.pop %v2635
    %v2637 = vmul.f32 %v2625, 1.442695
    %v2638 = vpow.pop %v2637
    %v2639 = vmul.f32 %v2626, 1.442695
    %v2640 = vpow.pop %v2639
    %v2641 = vmul.f32 %v2627, 1.442695
    %v2642 = vpow.pop %v2641
    %v2643 = vmul.f32 %v2628, 1.442695
    %v2644 = vpow.pop %v2643
    %2645 = vadd.xlane.f32.xlu0 %v2630
    %v2646 = vpop.xlane.xlu0 %2645
    %2647 = vadd.xlane.f32.xlu0 %v2632
    %v2648 = vpop.xlane.xlu0 %2647
    %2649 = vadd.xlane.f32.xlu0 %v2634
    %v2650 = vpop.xlane.xlu0 %2649
    %2651 = vadd.xlane.f32.xlu0 %v2636
    %v2652 = vpop.xlane.xlu0 %2651
    %2653 = vadd.xlane.f32.xlu0 %v2638
    %v2654 = vpop.xlane.xlu0 %2653
    %2655 = vadd.xlane.f32.xlu0 %v2640
    %v2656 = vpop.xlane.xlu0 %2655
    %2657 = vadd.xlane.f32.xlu0 %v2642
    %v2658 = vpop.xlane.xlu0 %2657
    %2659 = vadd.xlane.f32.xlu0 %v2644
    %v2660 = vpop.xlane.xlu0 %2659
    %v2661 = vlog2.pop %v2646
    %v2662 = vmul.f32 %v2661, 0.6931472
    %v2663 = vlog2.pop %v2648
    %v2664 = vmul.f32 %v2663, 0.6931472
    %v2665 = vlog2.pop %v2650
    %v2666 = vmul.f32 %v2665, 0.6931472
    %v2667 = vlog2.pop %v2652
    %v2668 = vmul.f32 %v2667, 0.6931472
    %v2669 = vlog2.pop %v2654
    %v2670 = vmul.f32 %v2669, 0.6931472
    %v2671 = vlog2.pop %v2656
    %v2672 = vmul.f32 %v2671, 0.6931472
    %v2673 = vlog2.pop %v2658
    %v2674 = vmul.f32 %v2673, 0.6931472
    %v2675 = vlog2.pop %v2660
    %v2676 = vmul.f32 %v2675, 0.6931472
    %v2677 = vadd.f32 %v2606, %v2662
    %v2678 = vadd.f32 %v2608, %v2664
    %v2679 = vadd.f32 %v2610, %v2666
    %v2680 = vadd.f32 %v2612, %v2668
    %v2681 = vadd.f32 %v2614, %v2670
    %v2682 = vadd.f32 %v2616, %v2672
    %v2683 = vadd.f32 %v2618, %v2674
    %v2684 = vadd.f32 %v2620, %v2676
    %v2693 = vlaneseq
    %v2694 = vshrl.u32 %v2693, 7
    %v2695 = vsub.s32 %v240, %v2694
    %v2696 = vrot.slane %v2677, %v2695
    %v2697 = vlaneseq
    %v2698 = vshrl.u32 %v2697, 7
    %v2699 = vsub.s32 %v240, %v2698
    %v2700 = vrot.slane %v2678, %v2699
    %v2701 = vlaneseq
    %v2702 = vshrl.u32 %v2701, 7
    %v2703 = vsub.s32 %v240, %v2702
    %v2704 = vrot.slane %v2679, %v2703
    %v2705 = vlaneseq
    %v2706 = vshrl.u32 %v2705, 7
    %v2707 = vsub.s32 %v240, %v2706
    %v2708 = vrot.slane %v2680, %v2707
    %v2709 = vlaneseq
    %v2710 = vshrl.u32 %v2709, 7
    %v2711 = vsub.s32 %v240, %v2710
    %v2712 = vrot.slane %v2681, %v2711
    %v2713 = vlaneseq
    %v2714 = vshrl.u32 %v2713, 7
    %v2715 = vsub.s32 %v240, %v2714
    %v2716 = vrot.slane %v2682, %v2715
    %v2717 = vlaneseq
    %v2718 = vshrl.u32 %v2717, 7
    %v2719 = vsub.s32 %v240, %v2718
    %v2720 = vrot.slane %v2683, %v2719
    %v2721 = vlaneseq
    %v2722 = vshrl.u32 %v2721, 7
    %v2723 = vsub.s32 %v240, %v2722
    %v2724 = vrot.slane %v2684, %v2723
    %v2725 = vsel %vm1325, %v2700, %v2696
    %v2726 = vsel %vm1327, %v2704, %v2725
    %v2727 = vsel %vm1329, %v2708, %v2726
    %v2728 = vsel %vm1331, %v2712, %v2727
    %v2729 = vsel %vm1333, %v2716, %v2728
    %v2730 = vsel %vm1335, %v2720, %v2729
    %v2731 = vsel %vm1337, %v2724, %v2730
    %v2733 = vsel %vm1340, %v2731, -1e+09
    %v2734 = vld [vmem:[#allocation9 + $0x38] sm:$0xff]
    %v2735 = vadd.f32 %v2733, %v2734
    %v2736 = vld [vmem:[%s9 + $0x38] sm:$0xff]
    %vm2737 = vcmp.gt.f32.partialorder %v2736, 0.0
    %v2738 = vsel %vm2737, %v2735, %v2506
    %v2739 = vld [vmem:[%s8] sm:$0x1]
    %v2741 = vlaneseq
    %v2742 = vshrl.u32 %v2741, 7
    %v2743 = vsub.s32 0, %v2742
    %v2744 = vrot.slane %v2739, %v2743
    %v2746 = vadd.f32 %v2738, %v2744
    %2747 = vmax.xlane.f32.xlu0 %v2746
    %v2748 = vpop.xlane.xlu0 %2747
    %v2749 = vsub.f32 %v2746, %v2748
    %v2750 = vmul.f32 %v2749, 1.442695
    %v2751 = vpow.pop %v2750
    %2752 = vadd.xlane.f32.xlu0 %v2751
    %v2753 = vpop.xlane.xlu0 %2752
    %v2754 = vlog2.pop %v2753
    %v2755 = vmul.f32 %v2754, 0.6931472
    %v2756 = vadd.f32 %v2748, %v2755
    %2757 = vst [vmem:[#allocation10] sm:$0xff] %v2756
    // Predicated region
    $region54: #{tpu_custom_call.1} parent=1 // pred_check
      _
    $region55: #{tpu_custom_call.1} parent=1 // pred_check_branch
      %2759 = sbr.rel (0) target = $region57
    $region56: #{tpu_custom_call.1} parent=1 // pred_region
      %s2761 = ssub.s32 1024, 1024
      %2762 = vsyncadd [#allocation5], %s2761
      %s2763 = sshll.u32 [#allocation9], 4
      %s2764 = int_to_ptr.vmem [resolvable:$true] %s2763
      %2769 = dma.vmem_to_hbm [thread:$0]  %s2764, 1024, %s10, [#allocation5], 128, 128, 8
    $region57: #{tpu_custom_call.1} parent=1 // pred_fallthru
      _
    // Predicated region
    $region58: #{tpu_custom_call.1} parent=1 // pred_check
      _
    $region59: #{tpu_custom_call.1} parent=1 // pred_check_branch
      %2771 = sbr.rel (0) target = $region61
    $region60: #{tpu_custom_call.1} parent=1 // pred_region
      %s2773 = ssub.s32 128, 128
      %2774 = vsyncadd [#allocation11], %s2773
      %s2776 = sshll.u32 [#allocation10], 4
      %s2777 = int_to_ptr.vmem [resolvable:$true] %s2776
      %2779 = dma.vmem_to_hbm [thread:$0]  %s2777, 128, %s11, [#allocation11]
    $region61: #{tpu_custom_call.1} parent=1 // pred_fallthru
      _
    // Predicated region
    $region62: #{tpu_custom_call.1} parent=1 // pred_check
      _
    $region63: #{tpu_custom_call.1} parent=1 // pred_check_branch
      %2781 = sbr.rel (0) target = $region65
    $region64: #{tpu_custom_call.1} parent=1 // pred_region
      %2782 = dma.done [#allocation5], 1024
    $region65: #{tpu_custom_call.1} parent=1 // pred_fallthru
      _
    // Predicated region
    $region66: #{tpu_custom_call.1} parent=1 // pred_check
      _
    $region67: #{tpu_custom_call.1} parent=1 // pred_check_branch
      %2784 = sbr.rel (0) target = $region69
    $region68: #{tpu_custom_call.1} parent=1 // pred_region
      %2785 = dma.done [#allocation11], 128
    $region69: #{tpu_custom_call.1} parent=1 // pred_fallthru
      _
    %2786 = vsyncpa [#allocation4], 1
    %2787 = vsyncpa [#allocation7], 1
    %2788 = vsyncpa [#allocation5], 1
    %2789 = vsyncpa [#allocation11], 1

</llo_original>
